<compile_context>
chip_gen: v7x
topology: tpu7x:2x2x1
jax: 0.10.0
libtpu: 0.0.40
codegen_flags: <defaults>
</compile_context>

<pallas_src>
import functools

import jax
import jax.numpy as jnp
from jax.experimental import pallas as pl
from jax.experimental.pallas import tpu as pltpu


def _round_up(x, m):
    return ((x + m - 1) // m) * m


def _vmem_budget():
    """Returns (vmem_limit_bytes, per-kernel block-byte budget), per-chip."""
    cap = 64 * 1024 * 1024                      # conservative: v7x physical VMEM
    try:
        cap = getattr(pltpu.get_tpu_info(), "vmem_capacity_bytes", cap)
    except Exception:
        pass
    limit = min(cap // 2, 64 * 1024 * 1024)
    return limit, limit // 2


# ----------------------------------------------------------------------------
# Kernel 1: fused conv-stem matmul + bias + ReLU + spatial mean pool
# ----------------------------------------------------------------------------
def _conv_pool_kernel(p_ref, w_ref, b_ref, o_ref, acc_ref,
                      *, hw_real, needs_mask, inv_hw):
    hw_idx = pl.program_id(1)

    @pl.when(hw_idx == 0)
    def _():
        acc_ref[...] = jnp.zeros_like(acc_ref)

    t_t, bsz, hw, k = p_ref.shape
    x = p_ref[...].reshape(t_t * bsz * hw, k)                # bf16 patches
    y = jnp.dot(x, w_ref[...], preferred_element_type=jnp.float32)
    y = jnp.maximum(y + b_ref[...], 0.0)                     # bias + ReLU (f32)
    y = y.reshape(t_t, bsz, hw, y.shape[-1])
    if needs_mask:                                           # static guard
        gidx = (jax.lax.broadcasted_iota(jnp.int32, (1, 1, hw, 1), 2)
                + hw_idx * hw)
        y = jnp.where(gidx < hw_real, y, 0.0)
    # partial spatial sum over this HW chunk (cross-sublane reduce, XLU)
    acc_ref[...] += jnp.sum(y, axis=2)

    @pl.when(hw_idx == pl.num_programs(1) - 1)
    def _():
        # finalize avg pool; emit bf16, time-major -> kernel 2's exact input
        o_ref[...] = (acc_ref[...] * inv_hw).astype(o_ref.dtype)


def _pick_conv_tiles(To, B, HW, K, Cfp, budget_bytes):
    """Pick (t_tile, hw_tile) so kernel-1 working set fits the VMEM budget."""
    def block_bytes(t_tile, hw_tile):
        patch = 2 * t_tile * B * hw_tile * K * 2             # bf16, double-buffered
        wgt = K * Cfp * 2 + Cfp * 4                          # weights + bias
        acc = t_tile * B * Cfp * 4                           # f32 scratch acc
        out = 2 * t_tile * B * Cfp * 2                       # bf16 out, dbuf
        return patch + wgt + acc + out

    t_tile = To
    hw_tile = _round_up(HW, 8)
    while block_bytes(t_tile, hw_tile) > budget_bytes:
        if hw_tile > 8:                                      # shrink reduction axis first
            hw_tile = _round_up(max(8, hw_tile // 2), 8)
        elif t_tile > 1:                                     # then shrink the t tile
            t_tile -= 1
            while To % t_tile:
                t_tile -= 1
        else:
            break
    return t_tile, hw_tile


def conv_pool(patches, w, b, *, hw_real, t_tile, hw_tile, vmem_limit):
    """patches: (To, B, HWp, K) bf16 time-major; w: (K, Cfp) bf16; b: (1, Cfp) f32
    -> (To, B, Cfp) bf16 spatially-averaged stem features."""
    To, B, HWp, K = patches.shape
    Cfp = w.shape[1]
    kernel = functools.partial(
        _conv_pool_kernel, hw_real=hw_real,
        needs_mask=(HWp != hw_real), inv_hw=1.0 / hw_real)
    return pl.pallas_call(
        kernel,
        out_shape=jax.ShapeDtypeStruct((To, B, Cfp), jnp.bfloat16),
        grid=(To // t_tile, HWp // hw_tile),
        in_specs=[
            pl.BlockSpec((t_tile, B, hw_tile, K), lambda t, h: (t, 0, h, 0)),
            pl.BlockSpec((K, Cfp), lambda t, h: (0, 0)),
            pl.BlockSpec((1, Cfp), lambda t, h: (0, 0)),
        ],
        out_specs=pl.BlockSpec((t_tile, B, Cfp), lambda t, h: (t, 0, 0)),
        scratch_shapes=[pltpu.VMEM((t_tile, B, Cfp), jnp.float32)],
        compiler_params=pltpu.CompilerParams(
            dimension_semantics=("parallel", "arbitrary"),
            vmem_limit_bytes=vmem_limit),
    )(patches, w, b)


# ----------------------------------------------------------------------------
# Kernel 2: fused LSTM (input proj + recurrence) + 1x1x1 logits conv
# ----------------------------------------------------------------------------
def _lstm_head_kernel(feats_ref, w_ih_ref, b_g_ref, w_hh_ref, w_log_ref,
                      b_log_ref, out_ref, h_scr, c_scr, xg_scr, hseq_scr,
                      *, t_chunk, B, H, unroll):
    t_blk = pl.program_id(0)

    @pl.when(t_blk == 0)
    def _():
        h_scr[...] = jnp.zeros_like(h_scr)
        c_scr[...] = jnp.zeros_like(c_scr)

    Cfp = feats_ref.shape[-1]
    G = 4 * H

    # Input projection x @ W_ih^T + (b_ih + b_hh) for the whole chunk in one
    # bf16 MXU matmul (f32 accumulation).
    x2d = feats_ref[...].reshape(t_chunk * B, Cfp)            # bf16
    xg = jnp.dot(x2d, w_ih_ref[...], preferred_element_type=jnp.float32)
    xg = xg + b_g_ref[...]                                    # folded biases
    xg_scr[...] = xg.reshape(t_chunk, B, G)

    w_hh = w_hh_ref[...]                                      # bf16 (H, 4H)

    # Sequential recurrence; h/c carried as f32 values (bf16 only at the MXU
    # dot), hidden sequence staged in VMEM scratch.  Gate slices stay on
    # 128-lane boundaries because hidden=128.
    def step(t, carry):
        h, c = carry
        gates = xg_scr[t] + jnp.dot(h.astype(jnp.bfloat16), w_hh,
                                    preferred_element_type=jnp.float32)
        # PyTorch LSTM gate order: i, f, g, o
        i = jax.nn.sigmoid(gates[:, 0 * H:1 * H])
        f = jax.nn.sigmoid(gates[:, 1 * H:2 * H])
        g = jnp.tanh(gates[:, 2 * H:3 * H])
        o = jax.nn.sigmoid(gates[:, 3 * H:4 * H])
        c_new = f * c + i * g
        h_new = o * jnp.tanh(c_new)
        hseq_scr[pl.ds(t, 1)] = h_new.reshape(1, B, H)
        return h_new, c_new

    h_fin, c_fin = jax.lax.fori_loop(0, t_chunk, step,
                                     (h_scr[...], c_scr[...]), unroll=unroll)
    h_scr[...] = h_fin                                        # carry to next chunk
    c_scr[...] = c_fin

    # Dropout is identity at inference; 1x1x1 logits conv == one bf16 matmul
    # over the chunk's hidden sequence (fused epilogue, per chunk).
    h2d = hseq_scr[...].reshape(t_chunk * B, H).astype(jnp.bfloat16)
    logits = jnp.dot(h2d, w_log_ref[...], preferred_element_type=jnp.float32)
    logits = logits + b_log_ref[...]
    out_ref[...] = logits.reshape(t_chunk, B, -1).astype(out_ref.dtype)


def _pick_t_chunk(T, cap=32):
    t = min(T, cap)
    while T % t:
        t -= 1
    return t


def lstm_logits_head(feats_tm, w_ih, b_gates, w_hh, w_log, b_log,
                     *, t_chunk, vmem_limit):
    """feats_tm: (T, B, Cfp) bf16 time-major features.
    Returns (T, B, Ncp) f32 logits (padded classes)."""
    T, B, Cfp = feats_tm.shape
    G = w_ih.shape[1]
    H = G // 4
    Ncp = w_log.shape[1]
    kernel = functools.partial(_lstm_head_kernel, t_chunk=t_chunk, B=B, H=H,
                               unroll=min(t_chunk, 8))
    return pl.pallas_call(
        kernel,
        out_shape=jax.ShapeDtypeStruct((T, B, Ncp), jnp.float32),
        grid=(T // t_chunk,),
        in_specs=[
            pl.BlockSpec((t_chunk, B, Cfp), lambda t: (t, 0, 0)),
            pl.BlockSpec((Cfp, G), lambda t: (0, 0)),
            pl.BlockSpec((1, G), lambda t: (0, 0)),
            pl.BlockSpec((H, G), lambda t: (0, 0)),
            pl.BlockSpec((H, Ncp), lambda t: (0, 0)),
            pl.BlockSpec((1, Ncp), lambda t: (0, 0)),
        ],
        out_specs=pl.BlockSpec((t_chunk, B, Ncp), lambda t: (t, 0, 0)),
        scratch_shapes=[
            pltpu.VMEM((B, H), jnp.float32),               # h carry across chunks
            pltpu.VMEM((B, H), jnp.float32),               # c carry across chunks
            pltpu.VMEM((t_chunk, B, 4 * H), jnp.float32),  # xg (chunk input gates)
            pltpu.VMEM((t_chunk, B, H), jnp.float32),      # h sequence (chunk)
        ],
        compiler_params=pltpu.CompilerParams(
            dimension_semantics=("arbitrary",),
            vmem_limit_bytes=vmem_limit),
    )(feats_tm, w_ih, b_gates, w_hh, w_log, b_log)


# ----------------------------------------------------------------------------
# Glue: SAME-padded 3D im2col (time-major patch extraction for the conv stem)
# ----------------------------------------------------------------------------
def _same_pad(in_size, k, s):
    out = -(-in_size // s)
    total = max((out - 1) * s + k - in_size, 0)
    return (total // 2, total - total // 2), out


def im2col_3d(x, ksize, strides):
    """x: (B, C, T, H, W) -> patches (To, B, Ho*Wo, C*kt*kh*kw) time-major."""
    B, C, T, H, W = x.shape
    kt, kh, kw = ksize
    st, sh, sw = strides
    (pt, To) = _same_pad(T, kt, st)
    (ph, Ho) = _same_pad(H, kh, sh)
    (pw, Wo) = _same_pad(W, kw, sw)
    xp = jnp.pad(x, ((0, 0), (0, 0), pt, ph, pw))
    cols = []
    for dt in range(kt):
        for dh in range(kh):
            for dw in range(kw):
                cols.append(
                    xp[:, :, dt:dt + To * st:st, dh:dh + Ho * sh:sh, dw:dw + Wo * sw:sw]
                )
    cols = jnp.stack(cols, axis=-1)            # (B, C, To, Ho, Wo, kt*kh*kw)
    cols = cols.transpose(2, 0, 3, 4, 1, 5)    # (To, B, Ho, Wo, C, kt*kh*kw)
    return cols.reshape(To, B, Ho * Wo, C * kt * kh * kw), (To, Ho, Wo)


# ----------------------------------------------------------------------------
# Parameters (deterministic synthetic init; shapes follow the module __init__)
# ----------------------------------------------------------------------------
def init_params(key, in_channels=3, stem_channels=32, hidden=128, num_classes=2):
    ks = jax.random.split(key, 8)
    s = 0.05
    feat = stem_channels  # C_feat * 1 * 1 after spatial avg pool -> LSTM input size
    return {
        "stem_w": s * jax.random.normal(ks[0], (stem_channels, in_channels, 3, 3, 3), jnp.float32),
        "stem_b": s * jax.random.normal(ks[1], (stem_channels,), jnp.float32),
        "w_ih": s * jax.random.normal(ks[2], (4 * hidden, feat), jnp.float32),
        "w_hh": s * jax.random.normal(ks[3], (4 * hidden, hidden), jnp.float32),
        "b_ih": s * jax.random.normal(ks[4], (4 * hidden,), jnp.float32),
        "b_hh": s * jax.random.normal(ks[5], (4 * hidden,), jnp.float32),
        "logits_w": s * jax.random.normal(ks[6], (num_classes, hidden, 1, 1, 1), jnp.float32),
        "logits_b": s * jax.random.normal(ks[7], (num_classes,), jnp.float32),
    }


# ----------------------------------------------------------------------------
# Forward pass
# ----------------------------------------------------------------------------
def i3d_lstm_forward(x, p):
    B, Cin, T, H, W = x.shape
    vmem_limit, tile_budget = _vmem_budget()

    # --- 1. i3d features: Unit3D-style conv stem + ReLU + spatial avg pool ---
    # bf16 patches, K left unpadded in HBM (lane pad happens in VMEM layout).
    xb = x.astype(jnp.bfloat16)
    patches, (To, Ho, Wo) = im2col_3d(xb, (3, 3, 3), (1, 2, 2))  # (To,B,HW,K)
    K = patches.shape[-1]
    Cf = p["stem_w"].shape[0]
    HW = Ho * Wo
    Cfp = _round_up(Cf, 128)                                     # lane-dense C_feat

    t_tile, hw_tile = _pick_conv_tiles(To, B, HW, K, Cfp, tile_budget)
    HWp = _round_up(HW, hw_tile)
    if HWp != HW:
        patches = jnp.pad(patches, ((0, 0), (0, 0), (0, HWp - HW), (0, 0)))

    w_stem = p["stem_w"].reshape(Cf, -1).T                       # (K, Cf)
    w_stem = jnp.pad(w_stem, ((0, 0), (0, Cfp - Cf))).astype(jnp.bfloat16)
    b_stem = jnp.pad(p["stem_b"], (0, Cfp - Cf)).reshape(1, Cfp)

    # (To, B, Cfp) bf16 time-major features == the i3d output (B, Cf, T, 1, 1)
    # after transpose(1,2) + batch-preserving Reshape((T, -1)); fed directly
    # to kernel 2 with no XLA glue in between.
    feats_tm = conv_pool(patches, w_stem, b_stem, hw_real=HW,
                         t_tile=t_tile, hw_tile=hw_tile, vmem_limit=vmem_limit)

    # --- 2-5. Fused LSTM + dropout(identity) + 1x1x1 logits conv -------------
    Nc = p["logits_b"].shape[0]
    Ncp = _round_up(Nc, 128)

    w_ih = jnp.pad(p["w_ih"].T, ((0, Cfp - Cf), (0, 0))).astype(jnp.bfloat16)
    b_gates = (p["b_ih"] + p["b_hh"]).reshape(1, -1)             # folded biases, f32
    w_hh = p["w_hh"].T.astype(jnp.bfloat16)                      # (H, 4H)
    w_log = p["logits_w"].reshape(Nc, -1).T                      # (H, Nc)
    w_log = jnp.pad(w_log, ((0, 0), (0, Ncp - Nc))).astype(jnp.bfloat16)
    b_log = jnp.pad(p["logits_b"], (0, Ncp - Nc)).reshape(1, Ncp)

    t_chunk = _pick_t_chunk(To)
    out = lstm_logits_head(feats_tm, w_ih, b_gates, w_hh, w_log, b_log,
                           t_chunk=t_chunk, vmem_limit=vmem_limit)  # (T, B, Ncp)

    # --- 6. squeeze(3).squeeze(3): -> (B, num_classes, T) --------------------
    return out[:, :, :Nc].transpose(1, 2, 0)


# ----------------------------------------------------------------------------
if __name__ == "__main__":
    key = jax.random.PRNGKey(0)
    kx, kp = jax.random.split(key)

    B, Cin, T, H, W = 2, 3, 8, 16, 16
    num_classes = 2

    x = jax.random.normal(kx, (B, Cin, T, H, W), jnp.float32)
    params = init_params(kp, in_channels=Cin, stem_channels=32,
                         hidden=128, num_classes=num_classes)

    fwd = jax.jit(i3d_lstm_forward)
    out = fwd(x, params)
    jax.block_until_ready(out)

    assert out.shape == (B, num_classes, T), out.shape
    assert out.dtype == jnp.float32
    assert bool(jnp.all(jnp.isfinite(out)))
    print("KERNEL_OK")
</pallas_src>

<mosaic_0001>
module attributes {stable_mosaic.version = 11 : i64} {
  func.func @_conv_pool_kernel(%arg0: i32, %arg1: i32, %arg2: memref<8x2x64x81xbf16, #tpu.memory_space<vmem>>, %arg3: memref<81x128xbf16, #tpu.memory_space<vmem>>, %arg4: memref<1x128xf32, #tpu.memory_space<vmem>>, %arg5: memref<8x2x128xbf16, #tpu.memory_space<vmem>>, %arg6: memref<8x2x128xf32, #tpu.memory_space<vmem>>) attributes {dimension_semantics = [#tpu.dimension_semantics<parallel>, #tpu.dimension_semantics<arbitrary>], iteration_bounds = array<i64: 1, 1>, scalar_prefetch = 0 : i64, scratch_operands = 1 : i64, tpu.core_type = #tpu.core_type<tc>, window_params = [{transform_indices = @transform_0, window_bounds = array<i64: 8, 2, 64, 81>}, {pipeline_mode = #tpu.pipeline_mode<synchronous>, transform_indices = @transform_1, window_bounds = array<i64: 81, 128>}, {pipeline_mode = #tpu.pipeline_mode<synchronous>, transform_indices = @transform_2, window_bounds = array<i64: 1, 128>}, {transform_indices = @transform_3, window_bounds = array<i64: 8, 2, 128>}]} {
    %c0_i32 = arith.constant 0 : i32
    %0 = arith.cmpi eq, %arg1, %c0_i32 : i32
    %1 = arith.extui %0 : i1 to i32
    %c0_i32_0 = arith.constant 0 : i32
    %2 = arith.cmpi ne, %1, %c0_i32_0 : i32
    scf.if %2 {
      %cst_18 = arith.constant 0.000000e+00 : f32
      %20 = vector.broadcast %cst_18 : f32 to vector<8x2x128xf32>
      %c0_19 = arith.constant 0 : index
      %c0_20 = arith.constant 0 : index
      %c0_21 = arith.constant 0 : index
      %21 = vector.load %arg6[%c0_19, %c0_20, %c0_21] : memref<8x2x128xf32, #tpu.memory_space<vmem>>, vector<8x2x128xf32>
      tpu.vector_store %arg6[%c0_19, %c0_20, %c0_21], %20 {strides = array<i32>} : memref<8x2x128xf32, #tpu.memory_space<vmem>>, vector<8x2x128xf32>,
    } else {
    }
    %c0 = arith.constant 0 : index
    %c0_1 = arith.constant 0 : index
    %c0_2 = arith.constant 0 : index
    %c0_3 = arith.constant 0 : index
    %3 = vector.load %arg2[%c0, %c0_1, %c0_2, %c0_3] : memref<8x2x64x81xbf16, #tpu.memory_space<vmem>>, vector<8x2x64x81xbf16>
    %4 = vector.shape_cast %3 : vector<8x2x64x81xbf16> to vector<1024x81xbf16>
    %c0_4 = arith.constant 0 : index
    %c0_5 = arith.constant 0 : index
    %5 = vector.load %arg3[%c0_4, %c0_5] : memref<81x128xbf16, #tpu.memory_space<vmem>>, vector<81x128xbf16>
    %cst = arith.constant dense<0.000000e+00> : vector<1024x128xf32>
    %6 = tpu.matmul %4, %5, %cst {dimension_numbers = #tpu.dot_dimension_numbers<[1], [0], [0], [1], [0, 0, 1, 1], [], []>} : vector<1024x81xbf16>, vector<81x128xbf16>, vector<1024x128xf32> -> vector<1024x128xf32>
    %c0_6 = arith.constant 0 : index
    %c0_7 = arith.constant 0 : index
    %7 = vector.load %arg4[%c0_6, %c0_7] : memref<1x128xf32, #tpu.memory_space<vmem>>, vector<1x128xf32>
    %8 = vector.broadcast %7 : vector<1x128xf32> to vector<1024x128xf32>
    %9 = arith.addf %6, %8 : vector<1024x128xf32>
    %cst_8 = arith.constant 0.000000e+00 : f32
    %10 = vector.broadcast %cst_8 : f32 to vector<1024x128xf32>
    %11 = arith.maximumf %9, %10 : vector<1024x128xf32>
    %12 = vector.shape_cast %11 : vector<1024x128xf32> to vector<8x2x64x128xf32>
    %c0_9 = arith.constant 0 : index
    %c0_10 = arith.constant 0 : index
    %c0_11 = arith.constant 0 : index
    %13 = vector.load %arg6[%c0_9, %c0_10, %c0_11] : memref<8x2x128xf32, #tpu.memory_space<vmem>>, vector<8x2x128xf32>
    %cst_12 = arith.constant dense<0.000000e+00> : vector<8x2x128xf32>
    %14 = vector.multi_reduction <add>, %12, %cst_12 [2] : vector<8x2x64x128xf32> to vector<8x2x128xf32>
    %15 = arith.addf %13, %14 : vector<8x2x128xf32>
    %c0_13 = arith.constant 0 : index
    %c0_14 = arith.constant 0 : index
    %c0_15 = arith.constant 0 : index
    %16 = vector.load %arg6[%c0_13, %c0_14, %c0_15] : memref<8x2x128xf32, #tpu.memory_space<vmem>>, vector<8x2x128xf32>
    tpu.vector_store %arg6[%c0_13, %c0_14, %c0_15], %15 {strides = array<i32>} : memref<8x2x128xf32, #tpu.memory_space<vmem>>, vector<8x2x128xf32>,
    %c0_i32_16 = arith.constant 0 : i32
    %17 = arith.cmpi eq, %arg1, %c0_i32_16 : i32
    %18 = arith.extui %17 : i1 to i32
    %c0_i32_17 = arith.constant 0 : i32
    %19 = arith.cmpi ne, %18, %c0_i32_17 : i32
    scf.if %19 {
      %c0_18 = arith.constant 0 : index
      %c0_19 = arith.constant 0 : index
      %c0_20 = arith.constant 0 : index
      %20 = vector.load %arg6[%c0_18, %c0_19, %c0_20] : memref<8x2x128xf32, #tpu.memory_space<vmem>>, vector<8x2x128xf32>
      %cst_21 = arith.constant 1.562500e-02 : f32
      %21 = vector.broadcast %cst_21 : f32 to vector<8x2x128xf32>
      %22 = arith.mulf %20, %21 : vector<8x2x128xf32>
      %23 = arith.truncf %22 : vector<8x2x128xf32> to vector<8x2x128xbf16>
      %c0_22 = arith.constant 0 : index
      %c0_23 = arith.constant 0 : index
      %c0_24 = arith.constant 0 : index
      %24 = vector.load %arg5[%c0_22, %c0_23, %c0_24] : memref<8x2x128xbf16, #tpu.memory_space<vmem>>, vector<8x2x128xbf16>
      tpu.vector_store %arg5[%c0_22, %c0_23, %c0_24], %23 {strides = array<i32>} : memref<8x2x128xbf16, #tpu.memory_space<vmem>>, vector<8x2x128xbf16>,
    } else {
    }
    return
  }
  func.func @transform_0(%arg0: i32, %arg1: i32) -> (i32, i32, i32, i32) {
    %c0_i32 = arith.constant 0 : i32
    %c0_i32_0 = arith.constant 0 : i32
    %c0_i32_1 = arith.constant 0 : i32
    return %arg0, %c0_i32, %arg1, %c0_i32_0 : i32, i32, i32, i32
  }
  func.func @transform_1(%arg0: i32, %arg1: i32) -> (i32, i32) {
    %c0_i32 = arith.constant 0 : i32
    %c0_i32_0 = arith.constant 0 : i32
    %c0_i32_1 = arith.constant 0 : i32
    return %c0_i32, %c0_i32_0 : i32, i32
  }
  func.func @transform_2(%arg0: i32, %arg1: i32) -> (i32, i32) {
    %c0_i32 = arith.constant 0 : i32
    %c0_i32_0 = arith.constant 0 : i32
    %c0_i32_1 = arith.constant 0 : i32
    return %c0_i32, %c0_i32_0 : i32, i32
  }
  func.func @transform_3(%arg0: i32, %arg1: i32) -> (i32, i32, i32) {
    %c0_i32 = arith.constant 0 : i32
    %c0_i32_0 = arith.constant 0 : i32
    %c0_i32_1 = arith.constant 0 : i32
    return %arg0, %c0_i32, %c0_i32_0 : i32, i32, i32
  }
}

module attributes {stable_mosaic.version = 11 : i64} {
  func.func @_lstm_head_kernel(%arg0: i32, %arg1: memref<8x2x128xbf16, #tpu.memory_space<vmem>>, %arg2: memref<128x512xbf16, #tpu.memory_space<vmem>>, %arg3: memref<1x512xf32, #tpu.memory_space<vmem>>, %arg4: memref<128x512xbf16, #tpu.memory_space<vmem>>, %arg5: memref<128x128xbf16, #tpu.memory_space<vmem>>, %arg6: memref<1x128xf32, #tpu.memory_space<vmem>>, %arg7: memref<8x2x128xf32, #tpu.memory_space<vmem>>, %arg8: memref<2x128xf32, #tpu.memory_space<vmem>>, %arg9: memref<2x128xf32, #tpu.memory_space<vmem>>, %arg10: memref<8x2x512xf32, #tpu.memory_space<vmem>>, %arg11: memref<8x2x128xf32, #tpu.memory_space<vmem>>) attributes {dimension_semantics = [#tpu.dimension_semantics<arbitrary>], iteration_bounds = array<i64: 1>, scalar_prefetch = 0 : i64, scratch_operands = 4 : i64, tpu.core_type = #tpu.core_type<tc>, window_params = [{transform_indices = @transform_0, window_bounds = array<i64: 8, 2, 128>}, {pipeline_mode = #tpu.pipeline_mode<synchronous>, transform_indices = @transform_1, window_bounds = array<i64: 128, 512>}, {pipeline_mode = #tpu.pipeline_mode<synchronous>, transform_indices = @transform_2, window_bounds = array<i64: 1, 512>}, {pipeline_mode = #tpu.pipeline_mode<synchronous>, transform_indices = @transform_3, window_bounds = array<i64: 128, 512>}, {pipeline_mode = #tpu.pipeline_mode<synchronous>, transform_indices = @transform_4, window_bounds = array<i64: 128, 128>}, {pipeline_mode = #tpu.pipeline_mode<synchronous>, transform_indices = @transform_5, window_bounds = array<i64: 1, 128>}, {transform_indices = @transform_6, window_bounds = array<i64: 8, 2, 128>}]} {
    %c0_i32 = arith.constant 0 : i32
    %0 = arith.cmpi eq, %arg0, %c0_i32 : i32
    %1 = arith.extui %0 : i1 to i32
    %c0_i32_0 = arith.constant 0 : i32
    %2 = arith.cmpi ne, %1, %c0_i32_0 : i32
    scf.if %2 {
      %cst_96 = arith.constant 0.000000e+00 : f32
      %299 = vector.broadcast %cst_96 : f32 to vector<2x128xf32>
      %c0_97 = arith.constant 0 : index
      %c0_98 = arith.constant 0 : index
      %300 = vector.load %arg8[%c0_97, %c0_98] : memref<2x128xf32, #tpu.memory_space<vmem>>, vector<2x128xf32>
      tpu.vector_store %arg8[%c0_97, %c0_98], %299 {strides = array<i32>} : memref<2x128xf32, #tpu.memory_space<vmem>>, vector<2x128xf32>,
      %cst_99 = arith.constant 0.000000e+00 : f32
      %301 = vector.broadcast %cst_99 : f32 to vector<2x128xf32>
      %c0_100 = arith.constant 0 : index
      %c0_101 = arith.constant 0 : index
      %302 = vector.load %arg9[%c0_100, %c0_101] : memref<2x128xf32, #tpu.memory_space<vmem>>, vector<2x128xf32>
      tpu.vector_store %arg9[%c0_100, %c0_101], %301 {strides = array<i32>} : memref<2x128xf32, #tpu.memory_space<vmem>>, vector<2x128xf32>,
    } else {
    }
    %c0 = arith.constant 0 : index
    %c0_1 = arith.constant 0 : index
    %c0_2 = arith.constant 0 : index
    %3 = vector.load %arg1[%c0, %c0_1, %c0_2] : memref<8x2x128xbf16, #tpu.memory_space<vmem>>, vector<8x2x128xbf16>
    %4 = vector.shape_cast %3 : vector<8x2x128xbf16> to vector<16x128xbf16>
    %c0_3 = arith.constant 0 : index
    %c0_4 = arith.constant 0 : index
    %5 = vector.load %arg2[%c0_3, %c0_4] : memref<128x512xbf16, #tpu.memory_space<vmem>>, vector<128x512xbf16>
    %cst = arith.constant dense<0.000000e+00> : vector<16x512xf32>
    %6 = tpu.matmul %4, %5, %cst {dimension_numbers = #tpu.dot_dimension_numbers<[1], [0], [0], [1], [0, 0, 1, 1], [], []>} : vector<16x128xbf16>, vector<128x512xbf16>, vector<16x512xf32> -> vector<16x512xf32>
    %c0_5 = arith.constant 0 : index
    %c0_6 = arith.constant 0 : index
    %7 = vector.load %arg3[%c0_5, %c0_6] : memref<1x512xf32, #tpu.memory_space<vmem>>, vector<1x512xf32>
    %8 = vector.broadcast %7 : vector<1x512xf32> to vector<16x512xf32>
    %9 = arith.addf %6, %8 : vector<16x512xf32>
    %10 = vector.shape_cast %9 : vector<16x512xf32> to vector<8x2x512xf32>
    %c0_7 = arith.constant 0 : index
    %c0_8 = arith.constant 0 : index
    %c0_9 = arith.constant 0 : index
    %11 = vector.load %arg10[%c0_7, %c0_8, %c0_9] : memref<8x2x512xf32, #tpu.memory_space<vmem>>, vector<8x2x512xf32>
    tpu.vector_store %arg10[%c0_7, %c0_8, %c0_9], %10 {strides = array<i32>} : memref<8x2x512xf32, #tpu.memory_space<vmem>>, vector<8x2x512xf32>,
    %c0_10 = arith.constant 0 : index
    %c0_11 = arith.constant 0 : index
    %12 = vector.load %arg4[%c0_10, %c0_11] : memref<128x512xbf16, #tpu.memory_space<vmem>>, vector<128x512xbf16>
    %c0_12 = arith.constant 0 : index
    %c0_13 = arith.constant 0 : index
    %13 = vector.load %arg8[%c0_12, %c0_13] : memref<2x128xf32, #tpu.memory_space<vmem>>, vector<2x128xf32>
    %c0_14 = arith.constant 0 : index
    %c0_15 = arith.constant 0 : index
    %14 = vector.load %arg9[%c0_14, %c0_15] : memref<2x128xf32, #tpu.memory_space<vmem>>, vector<2x128xf32>
    %c0_i32_16 = arith.constant 0 : i32
    %15 = arith.index_cast %c0_i32_16 : i32 to index
    %c0_17 = arith.constant 0 : index
    %c0_18 = arith.constant 0 : index
    %16 = vector.load %arg10[%15, %c0_17, %c0_18] : memref<8x2x512xf32, #tpu.memory_space<vmem>>, vector<1x2x512xf32>
    %17 = vector.shape_cast %16 : vector<1x2x512xf32> to vector<2x512xf32>
    %18 = arith.truncf %13 : vector<2x128xf32> to vector<2x128xbf16>
    %cst_19 = arith.constant dense<0.000000e+00> : vector<2x512xf32>
    %19 = tpu.matmul %18, %12, %cst_19 {dimension_numbers = #tpu.dot_dimension_numbers<[1], [0], [0], [1], [0, 0, 1, 1], [], []>} : vector<2x128xbf16>, vector<128x512xbf16>, vector<2x512xf32> -> vector<2x512xf32>
    %20 = arith.addf %17, %19 : vector<2x512xf32>
    %21 = vector.extract_strided_slice %20 {offsets = [0, 0], sizes = [2, 128], strides = [1, 1]} : vector<2x512xf32> to vector<2x128xf32>
    %22 = arith.negf %21 : vector<2x128xf32>
    %23 = math.exp %22 : vector<2x128xf32>
    %cst_20 = arith.constant 1.000000e+00 : f32
    %24 = vector.broadcast %cst_20 : f32 to vector<2x128xf32>
    %25 = arith.addf %24, %23 : vector<2x128xf32>
    %26 = arith.divf %24, %25 : vector<2x128xf32>
    %27 = vector.extract_strided_slice %20 {offsets = [0, 128], sizes = [2, 128], strides = [1, 1]} : vector<2x512xf32> to vector<2x128xf32>
    %28 = arith.negf %27 : vector<2x128xf32>
    %29 = math.exp %28 : vector<2x128xf32>
    %cst_21 = arith.constant 1.000000e+00 : f32
    %30 = vector.broadcast %cst_21 : f32 to vector<2x128xf32>
    %31 = arith.addf %30, %29 : vector<2x128xf32>
    %32 = arith.divf %30, %31 : vector<2x128xf32>
    %33 = vector.extract_strided_slice %20 {offsets = [0, 256], sizes = [2, 128], strides = [1, 1]} : vector<2x512xf32> to vector<2x128xf32>
    %34 = math.tanh %33 : vector<2x128xf32>
    %35 = vector.extract_strided_slice %20 {offsets = [0, 384], sizes = [2, 128], strides = [1, 1]} : vector<2x512xf32> to vector<2x128xf32>
    %36 = arith.negf %35 : vector<2x128xf32>
    %37 = math.exp %36 : vector<2x128xf32>
    %cst_22 = arith.constant 1.000000e+00 : f32
    %38 = vector.broadcast %cst_22 : f32 to vector<2x128xf32>
    %39 = arith.addf %38, %37 : vector<2x128xf32>
    %40 = arith.divf %38, %39 : vector<2x128xf32>
    %41 = arith.mulf %32, %14 : vector<2x128xf32>
    %42 = arith.mulf %26, %34 : vector<2x128xf32>
    %43 = arith.addf %41, %42 : vector<2x128xf32>
    %44 = math.tanh %43 : vector<2x128xf32>
    %45 = arith.mulf %40, %44 : vector<2x128xf32>
    %46 = vector.shape_cast %45 : vector<2x128xf32> to vector<1x2x128xf32>
    %47 = arith.index_cast %c0_i32_16 : i32 to index
    %c0_23 = arith.constant 0 : index
    %c0_24 = arith.constant 0 : index
    %48 = vector.load %arg11[%47, %c0_23, %c0_24] : memref<8x2x128xf32, #tpu.memory_space<vmem>>, vector<1x2x128xf32>
    tpu.vector_store %arg11[%47, %c0_23, %c0_24], %46 {strides = array<i32>} : memref<8x2x128xf32, #tpu.memory_space<vmem>>, vector<1x2x128xf32>,
    %c1_i32 = arith.constant 1 : i32
    %49 = arith.index_cast %c1_i32 : i32 to index
    %c0_25 = arith.constant 0 : index
    %c0_26 = arith.constant 0 : index
    %50 = vector.load %arg10[%49, %c0_25, %c0_26] : memref<8x2x512xf32, #tpu.memory_space<vmem>>, vector<1x2x512xf32>
    %51 = vector.shape_cast %50 : vector<1x2x512xf32> to vector<2x512xf32>
    %52 = arith.truncf %45 : vector<2x128xf32> to vector<2x128xbf16>
    %cst_27 = arith.constant dense<0.000000e+00> : vector<2x512xf32>
    %53 = tpu.matmul %52, %12, %cst_27 {dimension_numbers = #tpu.dot_dimension_numbers<[1], [0], [0], [1], [0, 0, 1, 1], [], []>} : vector<2x128xbf16>, vector<128x512xbf16>, vector<2x512xf32> -> vector<2x512xf32>
    %54 = arith.addf %51, %53 : vector<2x512xf32>
    %55 = vector.extract_strided_slice %54 {offsets = [0, 0], sizes = [2, 128], strides = [1, 1]} : vector<2x512xf32> to vector<2x128xf32>
    %56 = arith.negf %55 : vector<2x128xf32>
    %57 = math.exp %56 : vector<2x128xf32>
    %cst_28 = arith.constant 1.000000e+00 : f32
    %58 = vector.broadcast %cst_28 : f32 to vector<2x128xf32>
    %59 = arith.addf %58, %57 : vector<2x128xf32>
    %60 = arith.divf %58, %59 : vector<2x128xf32>
    %61 = vector.extract_strided_slice %54 {offsets = [0, 128], sizes = [2, 128], strides = [1, 1]} : vector<2x512xf32> to vector<2x128xf32>
    %62 = arith.negf %61 : vector<2x128xf32>
    %63 = math.exp %62 : vector<2x128xf32>
    %cst_29 = arith.constant 1.000000e+00 : f32
    %64 = vector.broadcast %cst_29 : f32 to vector<2x128xf32>
    %65 = arith.addf %64, %63 : vector<2x128xf32>
    %66 = arith.divf %64, %65 : vector<2x128xf32>
    %67 = vector.extract_strided_slice %54 {offsets = [0, 256], sizes = [2, 128], strides = [1, 1]} : vector<2x512xf32> to vector<2x128xf32>
    %68 = math.tanh %67 : vector<2x128xf32>
    %69 = vector.extract_strided_slice %54 {offsets = [0, 384], sizes = [2, 128], strides = [1, 1]} : vector<2x512xf32> to vector<2x128xf32>
    %70 = arith.negf %69 : vector<2x128xf32>
    %71 = math.exp %70 : vector<2x128xf32>
    %cst_30 = arith.constant 1.000000e+00 : f32
    %72 = vector.broadcast %cst_30 : f32 to vector<2x128xf32>
    %73 = arith.addf %72, %71 : vector<2x128xf32>
    %74 = arith.divf %72, %73 : vector<2x128xf32>
    %75 = arith.mulf %66, %43 : vector<2x128xf32>
    %76 = arith.mulf %60, %68 : vector<2x128xf32>
    %77 = arith.addf %75, %76 : vector<2x128xf32>
    %78 = math.tanh %77 : vector<2x128xf32>
    %79 = arith.mulf %74, %78 : vector<2x128xf32>
    %80 = vector.shape_cast %79 : vector<2x128xf32> to vector<1x2x128xf32>
    %81 = arith.index_cast %c1_i32 : i32 to index
    %c0_31 = arith.constant 0 : index
    %c0_32 = arith.constant 0 : index
    %82 = vector.load %arg11[%81, %c0_31, %c0_32] : memref<8x2x128xf32, #tpu.memory_space<vmem>>, vector<1x2x128xf32>
    tpu.vector_store %arg11[%81, %c0_31, %c0_32], %80 {strides = array<i32>} : memref<8x2x128xf32, #tpu.memory_space<vmem>>, vector<1x2x128xf32>,
    %c2_i32 = arith.constant 2 : i32
    %83 = arith.index_cast %c2_i32 : i32 to index
    %c0_33 = arith.constant 0 : index
    %c0_34 = arith.constant 0 : index
    %84 = vector.load %arg10[%83, %c0_33, %c0_34] : memref<8x2x512xf32, #tpu.memory_space<vmem>>, vector<1x2x512xf32>
    %85 = vector.shape_cast %84 : vector<1x2x512xf32> to vector<2x512xf32>
    %86 = arith.truncf %79 : vector<2x128xf32> to vector<2x128xbf16>
    %cst_35 = arith.constant dense<0.000000e+00> : vector<2x512xf32>
    %87 = tpu.matmul %86, %12, %cst_35 {dimension_numbers = #tpu.dot_dimension_numbers<[1], [0], [0], [1], [0, 0, 1, 1], [], []>} : vector<2x128xbf16>, vector<128x512xbf16>, vector<2x512xf32> -> vector<2x512xf32>
    %88 = arith.addf %85, %87 : vector<2x512xf32>
    %89 = vector.extract_strided_slice %88 {offsets = [0, 0], sizes = [2, 128], strides = [1, 1]} : vector<2x512xf32> to vector<2x128xf32>
    %90 = arith.negf %89 : vector<2x128xf32>
    %91 = math.exp %90 : vector<2x128xf32>
    %cst_36 = arith.constant 1.000000e+00 : f32
    %92 = vector.broadcast %cst_36 : f32 to vector<2x128xf32>
    %93 = arith.addf %92, %91 : vector<2x128xf32>
    %94 = arith.divf %92, %93 : vector<2x128xf32>
    %95 = vector.extract_strided_slice %88 {offsets = [0, 128], sizes = [2, 128], strides = [1, 1]} : vector<2x512xf32> to vector<2x128xf32>
    %96 = arith.negf %95 : vector<2x128xf32>
    %97 = math.exp %96 : vector<2x128xf32>
    %cst_37 = arith.constant 1.000000e+00 : f32
    %98 = vector.broadcast %cst_37 : f32 to vector<2x128xf32>
    %99 = arith.addf %98, %97 : vector<2x128xf32>
    %100 = arith.divf %98, %99 : vector<2x128xf32>
    %101 = vector.extract_strided_slice %88 {offsets = [0, 256], sizes = [2, 128], strides = [1, 1]} : vector<2x512xf32> to vector<2x128xf32>
    %102 = math.tanh %101 : vector<2x128xf32>
    %103 = vector.extract_strided_slice %88 {offsets = [0, 384], sizes = [2, 128], strides = [1, 1]} : vector<2x512xf32> to vector<2x128xf32>
    %104 = arith.negf %103 : vector<2x128xf32>
    %105 = math.exp %104 : vector<2x128xf32>
    %cst_38 = arith.constant 1.000000e+00 : f32
    %106 = vector.broadcast %cst_38 : f32 to vector<2x128xf32>
    %107 = arith.addf %106, %105 : vector<2x128xf32>
    %108 = arith.divf %106, %107 : vector<2x128xf32>
    %109 = arith.mulf %100, %77 : vector<2x128xf32>
    %110 = arith.mulf %94, %102 : vector<2x128xf32>
    %111 = arith.addf %109, %110 : vector<2x128xf32>
    %112 = math.tanh %111 : vector<2x128xf32>
    %113 = arith.mulf %108, %112 : vector<2x128xf32>
    %114 = vector.shape_cast %113 : vector<2x128xf32> to vector<1x2x128xf32>
    %115 = arith.index_cast %c2_i32 : i32 to index
    %c0_39 = arith.constant 0 : index
    %c0_40 = arith.constant 0 : index
    %116 = vector.load %arg11[%115, %c0_39, %c0_40] : memref<8x2x128xf32, #tpu.memory_space<vmem>>, vector<1x2x128xf32>
    tpu.vector_store %arg11[%115, %c0_39, %c0_40], %114 {strides = array<i32>} : memref<8x2x128xf32, #tpu.memory_space<vmem>>, vector<1x2x128xf32>,
    %c3_i32 = arith.constant 3 : i32
    %117 = arith.index_cast %c3_i32 : i32 to index
    %c0_41 = arith.constant 0 : index
    %c0_42 = arith.constant 0 : index
    %118 = vector.load %arg10[%117, %c0_41, %c0_42] : memref<8x2x512xf32, #tpu.memory_space<vmem>>, vector<1x2x512xf32>
    %119 = vector.shape_cast %118 : vector<1x2x512xf32> to vector<2x512xf32>
    %120 = arith.truncf %113 : vector<2x128xf32> to vector<2x128xbf16>
    %cst_43 = arith.constant dense<0.000000e+00> : vector<2x512xf32>
    %121 = tpu.matmul %120, %12, %cst_43 {dimension_numbers = #tpu.dot_dimension_numbers<[1], [0], [0], [1], [0, 0, 1, 1], [], []>} : vector<2x128xbf16>, vector<128x512xbf16>, vector<2x512xf32> -> vector<2x512xf32>
    %122 = arith.addf %119, %121 : vector<2x512xf32>
    %123 = vector.extract_strided_slice %122 {offsets = [0, 0], sizes = [2, 128], strides = [1, 1]} : vector<2x512xf32> to vector<2x128xf32>
    %124 = arith.negf %123 : vector<2x128xf32>
    %125 = math.exp %124 : vector<2x128xf32>
    %cst_44 = arith.constant 1.000000e+00 : f32
    %126 = vector.broadcast %cst_44 : f32 to vector<2x128xf32>
    %127 = arith.addf %126, %125 : vector<2x128xf32>
    %128 = arith.divf %126, %127 : vector<2x128xf32>
    %129 = vector.extract_strided_slice %122 {offsets = [0, 128], sizes = [2, 128], strides = [1, 1]} : vector<2x512xf32> to vector<2x128xf32>
    %130 = arith.negf %129 : vector<2x128xf32>
    %131 = math.exp %130 : vector<2x128xf32>
    %cst_45 = arith.constant 1.000000e+00 : f32
    %132 = vector.broadcast %cst_45 : f32 to vector<2x128xf32>
    %133 = arith.addf %132, %131 : vector<2x128xf32>
    %134 = arith.divf %132, %133 : vector<2x128xf32>
    %135 = vector.extract_strided_slice %122 {offsets = [0, 256], sizes = [2, 128], strides = [1, 1]} : vector<2x512xf32> to vector<2x128xf32>
    %136 = math.tanh %135 : vector<2x128xf32>
    %137 = vector.extract_strided_slice %122 {offsets = [0, 384], sizes = [2, 128], strides = [1, 1]} : vector<2x512xf32> to vector<2x128xf32>
    %138 = arith.negf %137 : vector<2x128xf32>
    %139 = math.exp %138 : vector<2x128xf32>
    %cst_46 = arith.constant 1.000000e+00 : f32
    %140 = vector.broadcast %cst_46 : f32 to vector<2x128xf32>
    %141 = arith.addf %140, %139 : vector<2x128xf32>
    %142 = arith.divf %140, %141 : vector<2x128xf32>
    %143 = arith.mulf %134, %111 : vector<2x128xf32>
    %144 = arith.mulf %128, %136 : vector<2x128xf32>
    %145 = arith.addf %143, %144 : vector<2x128xf32>
    %146 = math.tanh %145 : vector<2x128xf32>
    %147 = arith.mulf %142, %146 : vector<2x128xf32>
    %148 = vector.shape_cast %147 : vector<2x128xf32> to vector<1x2x128xf32>
    %149 = arith.index_cast %c3_i32 : i32 to index
    %c0_47 = arith.constant 0 : index
    %c0_48 = arith.constant 0 : index
    %150 = vector.load %arg11[%149, %c0_47, %c0_48] : memref<8x2x128xf32, #tpu.memory_space<vmem>>, vector<1x2x128xf32>
    tpu.vector_store %arg11[%149, %c0_47, %c0_48], %148 {strides = array<i32>} : memref<8x2x128xf32, #tpu.memory_space<vmem>>, vector<1x2x128xf32>,
    %c4_i32 = arith.constant 4 : i32
    %151 = arith.index_cast %c4_i32 : i32 to index
    %c0_49 = arith.constant 0 : index
    %c0_50 = arith.constant 0 : index
    %152 = vector.load %arg10[%151, %c0_49, %c0_50] : memref<8x2x512xf32, #tpu.memory_space<vmem>>, vector<1x2x512xf32>
    %153 = vector.shape_cast %152 : vector<1x2x512xf32> to vector<2x512xf32>
    %154 = arith.truncf %147 : vector<2x128xf32> to vector<2x128xbf16>
    %cst_51 = arith.constant dense<0.000000e+00> : vector<2x512xf32>
    %155 = tpu.matmul %154, %12, %cst_51 {dimension_numbers = #tpu.dot_dimension_numbers<[1], [0], [0], [1], [0, 0, 1, 1], [], []>} : vector<2x128xbf16>, vector<128x512xbf16>, vector<2x512xf32> -> vector<2x512xf32>
    %156 = arith.addf %153, %155 : vector<2x512xf32>
    %157 = vector.extract_strided_slice %156 {offsets = [0, 0], sizes = [2, 128], strides = [1, 1]} : vector<2x512xf32> to vector<2x128xf32>
    %158 = arith.negf %157 : vector<2x128xf32>
    %159 = math.exp %158 : vector<2x128xf32>
    %cst_52 = arith.constant 1.000000e+00 : f32
    %160 = vector.broadcast %cst_52 : f32 to vector<2x128xf32>
    %161 = arith.addf %160, %159 : vector<2x128xf32>
    %162 = arith.divf %160, %161 : vector<2x128xf32>
    %163 = vector.extract_strided_slice %156 {offsets = [0, 128], sizes = [2, 128], strides = [1, 1]} : vector<2x512xf32> to vector<2x128xf32>
    %164 = arith.negf %163 : vector<2x128xf32>
    %165 = math.exp %164 : vector<2x128xf32>
    %cst_53 = arith.constant 1.000000e+00 : f32
    %166 = vector.broadcast %cst_53 : f32 to vector<2x128xf32>
    %167 = arith.addf %166, %165 : vector<2x128xf32>
    %168 = arith.divf %166, %167 : vector<2x128xf32>
    %169 = vector.extract_strided_slice %156 {offsets = [0, 256], sizes = [2, 128], strides = [1, 1]} : vector<2x512xf32> to vector<2x128xf32>
    %170 = math.tanh %169 : vector<2x128xf32>
    %171 = vector.extract_strided_slice %156 {offsets = [0, 384], sizes = [2, 128], strides = [1, 1]} : vector<2x512xf32> to vector<2x128xf32>
    %172 = arith.negf %171 : vector<2x128xf32>
    %173 = math.exp %172 : vector<2x128xf32>
    %cst_54 = arith.constant 1.000000e+00 : f32
    %174 = vector.broadcast %cst_54 : f32 to vector<2x128xf32>
    %175 = arith.addf %174, %173 : vector<2x128xf32>
    %176 = arith.divf %174, %175 : vector<2x128xf32>
    %177 = arith.mulf %168, %145 : vector<2x128xf32>
    %178 = arith.mulf %162, %170 : vector<2x128xf32>
    %179 = arith.addf %177, %178 : vector<2x128xf32>
    %180 = math.tanh %179 : vector<2x128xf32>
    %181 = arith.mulf %176, %180 : vector<2x128xf32>
    %182 = vector.shape_cast %181 : vector<2x128xf32> to vector<1x2x128xf32>
    %183 = arith.index_cast %c4_i32 : i32 to index
    %c0_55 = arith.constant 0 : index
    %c0_56 = arith.constant 0 : index
    %184 = vector.load %arg11[%183, %c0_55, %c0_56] : memref<8x2x128xf32, #tpu.memory_space<vmem>>, vector<1x2x128xf32>
    tpu.vector_store %arg11[%183, %c0_55, %c0_56], %182 {strides = array<i32>} : memref<8x2x128xf32, #tpu.memory_space<vmem>>, vector<1x2x128xf32>,
    %c5_i32 = arith.constant 5 : i32
    %185 = arith.index_cast %c5_i32 : i32 to index
    %c0_57 = arith.constant 0 : index
    %c0_58 = arith.constant 0 : index
    %186 = vector.load %arg10[%185, %c0_57, %c0_58] : memref<8x2x512xf32, #tpu.memory_space<vmem>>, vector<1x2x512xf32>
    %187 = vector.shape_cast %186 : vector<1x2x512xf32> to vector<2x512xf32>
    %188 = arith.truncf %181 : vector<2x128xf32> to vector<2x128xbf16>
    %cst_59 = arith.constant dense<0.000000e+00> : vector<2x512xf32>
    %189 = tpu.matmul %188, %12, %cst_59 {dimension_numbers = #tpu.dot_dimension_numbers<[1], [0], [0], [1], [0, 0, 1, 1], [], []>} : vector<2x128xbf16>, vector<128x512xbf16>, vector<2x512xf32> -> vector<2x512xf32>
    %190 = arith.addf %187, %189 : vector<2x512xf32>
    %191 = vector.extract_strided_slice %190 {offsets = [0, 0], sizes = [2, 128], strides = [1, 1]} : vector<2x512xf32> to vector<2x128xf32>
    %192 = arith.negf %191 : vector<2x128xf32>
    %193 = math.exp %192 : vector<2x128xf32>
    %cst_60 = arith.constant 1.000000e+00 : f32
    %194 = vector.broadcast %cst_60 : f32 to vector<2x128xf32>
    %195 = arith.addf %194, %193 : vector<2x128xf32>
    %196 = arith.divf %194, %195 : vector<2x128xf32>
    %197 = vector.extract_strided_slice %190 {offsets = [0, 128], sizes = [2, 128], strides = [1, 1]} : vector<2x512xf32> to vector<2x128xf32>
    %198 = arith.negf %197 : vector<2x128xf32>
    %199 = math.exp %198 : vector<2x128xf32>
    %cst_61 = arith.constant 1.000000e+00 : f32
    %200 = vector.broadcast %cst_61 : f32 to vector<2x128xf32>
    %201 = arith.addf %200, %199 : vector<2x128xf32>
    %202 = arith.divf %200, %201 : vector<2x128xf32>
    %203 = vector.extract_strided_slice %190 {offsets = [0, 256], sizes = [2, 128], strides = [1, 1]} : vector<2x512xf32> to vector<2x128xf32>
    %204 = math.tanh %203 : vector<2x128xf32>
    %205 = vector.extract_strided_slice %190 {offsets = [0, 384], sizes = [2, 128], strides = [1, 1]} : vector<2x512xf32> to vector<2x128xf32>
    %206 = arith.negf %205 : vector<2x128xf32>
    %207 = math.exp %206 : vector<2x128xf32>
    %cst_62 = arith.constant 1.000000e+00 : f32
    %208 = vector.broadcast %cst_62 : f32 to vector<2x128xf32>
    %209 = arith.addf %208, %207 : vector<2x128xf32>
    %210 = arith.divf %208, %209 : vector<2x128xf32>
    %211 = arith.mulf %202, %179 : vector<2x128xf32>
    %212 = arith.mulf %196, %204 : vector<2x128xf32>
    %213 = arith.addf %211, %212 : vector<2x128xf32>
    %214 = math.tanh %213 : vector<2x128xf32>
    %215 = arith.mulf %210, %214 : vector<2x128xf32>
    %216 = vector.shape_cast %215 : vector<2x128xf32> to vector<1x2x128xf32>
    %217 = arith.index_cast %c5_i32 : i32 to index
    %c0_63 = arith.constant 0 : index
    %c0_64 = arith.constant 0 : index
    %218 = vector.load %arg11[%217, %c0_63, %c0_64] : memref<8x2x128xf32, #tpu.memory_space<vmem>>, vector<1x2x128xf32>
    tpu.vector_store %arg11[%217, %c0_63, %c0_64], %216 {strides = array<i32>} : memref<8x2x128xf32, #tpu.memory_space<vmem>>, vector<1x2x128xf32>,
    %c6_i32 = arith.constant 6 : i32
    %219 = arith.index_cast %c6_i32 : i32 to index
    %c0_65 = arith.constant 0 : index
    %c0_66 = arith.constant 0 : index
    %220 = vector.load %arg10[%219, %c0_65, %c0_66] : memref<8x2x512xf32, #tpu.memory_space<vmem>>, vector<1x2x512xf32>
    %221 = vector.shape_cast %220 : vector<1x2x512xf32> to vector<2x512xf32>
    %222 = arith.truncf %215 : vector<2x128xf32> to vector<2x128xbf16>
    %cst_67 = arith.constant dense<0.000000e+00> : vector<2x512xf32>
    %223 = tpu.matmul %222, %12, %cst_67 {dimension_numbers = #tpu.dot_dimension_numbers<[1], [0], [0], [1], [0, 0, 1, 1], [], []>} : vector<2x128xbf16>, vector<128x512xbf16>, vector<2x512xf32> -> vector<2x512xf32>
    %224 = arith.addf %221, %223 : vector<2x512xf32>
    %225 = vector.extract_strided_slice %224 {offsets = [0, 0], sizes = [2, 128], strides = [1, 1]} : vector<2x512xf32> to vector<2x128xf32>
    %226 = arith.negf %225 : vector<2x128xf32>
    %227 = math.exp %226 : vector<2x128xf32>
    %cst_68 = arith.constant 1.000000e+00 : f32
    %228 = vector.broadcast %cst_68 : f32 to vector<2x128xf32>
    %229 = arith.addf %228, %227 : vector<2x128xf32>
    %230 = arith.divf %228, %229 : vector<2x128xf32>
    %231 = vector.extract_strided_slice %224 {offsets = [0, 128], sizes = [2, 128], strides = [1, 1]} : vector<2x512xf32> to vector<2x128xf32>
    %232 = arith.negf %231 : vector<2x128xf32>
    %233 = math.exp %232 : vector<2x128xf32>
    %cst_69 = arith.constant 1.000000e+00 : f32
    %234 = vector.broadcast %cst_69 : f32 to vector<2x128xf32>
    %235 = arith.addf %234, %233 : vector<2x128xf32>
    %236 = arith.divf %234, %235 : vector<2x128xf32>
    %237 = vector.extract_strided_slice %224 {offsets = [0, 256], sizes = [2, 128], strides = [1, 1]} : vector<2x512xf32> to vector<2x128xf32>
    %238 = math.tanh %237 : vector<2x128xf32>
    %239 = vector.extract_strided_slice %224 {offsets = [0, 384], sizes = [2, 128], strides = [1, 1]} : vector<2x512xf32> to vector<2x128xf32>
    %240 = arith.negf %239 : vector<2x128xf32>
    %241 = math.exp %240 : vector<2x128xf32>
    %cst_70 = arith.constant 1.000000e+00 : f32
    %242 = vector.broadcast %cst_70 : f32 to vector<2x128xf32>
    %243 = arith.addf %242, %241 : vector<2x128xf32>
    %244 = arith.divf %242, %243 : vector<2x128xf32>
    %245 = arith.mulf %236, %213 : vector<2x128xf32>
    %246 = arith.mulf %230, %238 : vector<2x128xf32>
    %247 = arith.addf %245, %246 : vector<2x128xf32>
    %248 = math.tanh %247 : vector<2x128xf32>
    %249 = arith.mulf %244, %248 : vector<2x128xf32>
    %250 = vector.shape_cast %249 : vector<2x128xf32> to vector<1x2x128xf32>
    %251 = arith.index_cast %c6_i32 : i32 to index
    %c0_71 = arith.constant 0 : index
    %c0_72 = arith.constant 0 : index
    %252 = vector.load %arg11[%251, %c0_71, %c0_72] : memref<8x2x128xf32, #tpu.memory_space<vmem>>, vector<1x2x128xf32>
    tpu.vector_store %arg11[%251, %c0_71, %c0_72], %250 {strides = array<i32>} : memref<8x2x128xf32, #tpu.memory_space<vmem>>, vector<1x2x128xf32>,
    %c7_i32 = arith.constant 7 : i32
    %253 = arith.index_cast %c7_i32 : i32 to index
    %c0_73 = arith.constant 0 : index
    %c0_74 = arith.constant 0 : index
    %254 = vector.load %arg10[%253, %c0_73, %c0_74] : memref<8x2x512xf32, #tpu.memory_space<vmem>>, vector<1x2x512xf32>
    %255 = vector.shape_cast %254 : vector<1x2x512xf32> to vector<2x512xf32>
    %256 = arith.truncf %249 : vector<2x128xf32> to vector<2x128xbf16>
    %cst_75 = arith.constant dense<0.000000e+00> : vector<2x512xf32>
    %257 = tpu.matmul %256, %12, %cst_75 {dimension_numbers = #tpu.dot_dimension_numbers<[1], [0], [0], [1], [0, 0, 1, 1], [], []>} : vector<2x128xbf16>, vector<128x512xbf16>, vector<2x512xf32> -> vector<2x512xf32>
    %258 = arith.addf %255, %257 : vector<2x512xf32>
    %259 = vector.extract_strided_slice %258 {offsets = [0, 0], sizes = [2, 128], strides = [1, 1]} : vector<2x512xf32> to vector<2x128xf32>
    %260 = arith.negf %259 : vector<2x128xf32>
    %261 = math.exp %260 : vector<2x128xf32>
    %cst_76 = arith.constant 1.000000e+00 : f32
    %262 = vector.broadcast %cst_76 : f32 to vector<2x128xf32>
    %263 = arith.addf %262, %261 : vector<2x128xf32>
    %264 = arith.divf %262, %263 : vector<2x128xf32>
    %265 = vector.extract_strided_slice %258 {offsets = [0, 128], sizes = [2, 128], strides = [1, 1]} : vector<2x512xf32> to vector<2x128xf32>
    %266 = arith.negf %265 : vector<2x128xf32>
    %267 = math.exp %266 : vector<2x128xf32>
    %cst_77 = arith.constant 1.000000e+00 : f32
    %268 = vector.broadcast %cst_77 : f32 to vector<2x128xf32>
    %269 = arith.addf %268, %267 : vector<2x128xf32>
    %270 = arith.divf %268, %269 : vector<2x128xf32>
    %271 = vector.extract_strided_slice %258 {offsets = [0, 256], sizes = [2, 128], strides = [1, 1]} : vector<2x512xf32> to vector<2x128xf32>
    %272 = math.tanh %271 : vector<2x128xf32>
    %273 = vector.extract_strided_slice %258 {offsets = [0, 384], sizes = [2, 128], strides = [1, 1]} : vector<2x512xf32> to vector<2x128xf32>
    %274 = arith.negf %273 : vector<2x128xf32>
    %275 = math.exp %274 : vector<2x128xf32>
    %cst_78 = arith.constant 1.000000e+00 : f32
    %276 = vector.broadcast %cst_78 : f32 to vector<2x128xf32>
    %277 = arith.addf %276, %275 : vector<2x128xf32>
    %278 = arith.divf %276, %277 : vector<2x128xf32>
    %279 = arith.mulf %270, %247 : vector<2x128xf32>
    %280 = arith.mulf %264, %272 : vector<2x128xf32>
    %281 = arith.addf %279, %280 : vector<2x128xf32>
    %282 = math.tanh %281 : vector<2x128xf32>
    %283 = arith.mulf %278, %282 : vector<2x128xf32>
    %284 = vector.shape_cast %283 : vector<2x128xf32> to vector<1x2x128xf32>
    %285 = arith.index_cast %c7_i32 : i32 to index
    %c0_79 = arith.constant 0 : index
    %c0_80 = arith.constant 0 : index
    %286 = vector.load %arg11[%285, %c0_79, %c0_80] : memref<8x2x128xf32, #tpu.memory_space<vmem>>, vector<1x2x128xf32>
    tpu.vector_store %arg11[%285, %c0_79, %c0_80], %284 {strides = array<i32>} : memref<8x2x128xf32, #tpu.memory_space<vmem>>, vector<1x2x128xf32>,
    %c8_i32 = arith.constant 8 : i32
    %c0_81 = arith.constant 0 : index
    %c0_82 = arith.constant 0 : index
    %287 = vector.load %arg8[%c0_81, %c0_82] : memref<2x128xf32, #tpu.memory_space<vmem>>, vector<2x128xf32>
    tpu.vector_store %arg8[%c0_81, %c0_82], %283 {strides = array<i32>} : memref<2x128xf32, #tpu.memory_space<vmem>>, vector<2x128xf32>,
    %c0_83 = arith.constant 0 : index
    %c0_84 = arith.constant 0 : index
    %288 = vector.load %arg9[%c0_83, %c0_84] : memref<2x128xf32, #tpu.memory_space<vmem>>, vector<2x128xf32>
    tpu.vector_store %arg9[%c0_83, %c0_84], %281 {strides = array<i32>} : memref<2x128xf32, #tpu.memory_space<vmem>>, vector<2x128xf32>,
    %c0_85 = arith.constant 0 : index
    %c0_86 = arith.constant 0 : index
    %c0_87 = arith.constant 0 : index
    %289 = vector.load %arg11[%c0_85, %c0_86, %c0_87] : memref<8x2x128xf32, #tpu.memory_space<vmem>>, vector<8x2x128xf32>
    %290 = vector.shape_cast %289 : vector<8x2x128xf32> to vector<16x128xf32>
    %291 = arith.truncf %290 : vector<16x128xf32> to vector<16x128xbf16>
    %c0_88 = arith.constant 0 : index
    %c0_89 = arith.constant 0 : index
    %292 = vector.load %arg5[%c0_88, %c0_89] : memref<128x128xbf16, #tpu.memory_space<vmem>>, vector<128x128xbf16>
    %cst_90 = arith.constant dense<0.000000e+00> : vector<16x128xf32>
    %293 = tpu.matmul %291, %292, %cst_90 {dimension_numbers = #tpu.dot_dimension_numbers<[1], [0], [0], [1], [0, 0, 1, 1], [], []>} : vector<16x128xbf16>, vector<128x128xbf16>, vector<16x128xf32> -> vector<16x128xf32>
    %c0_91 = arith.constant 0 : index
    %c0_92 = arith.constant 0 : index
    %294 = vector.load %arg6[%c0_91, %c0_92] : memref<1x128xf32, #tpu.memory_space<vmem>>, vector<1x128xf32>
    %295 = vector.broadcast %294 : vector<1x128xf32> to vector<16x128xf32>
    %296 = arith.addf %293, %295 : vector<16x128xf32>
    %297 = vector.shape_cast %296 : vector<16x128xf32> to vector<8x2x128xf32>
    %c0_93 = arith.constant 0 : index
    %c0_94 = arith.constant 0 : index
    %c0_95 = arith.constant 0 : index
    %298 = vector.load %arg7[%c0_93, %c0_94, %c0_95] : memref<8x2x128xf32, #tpu.memory_space<vmem>>, vector<8x2x128xf32>
    tpu.vector_store %arg7[%c0_93, %c0_94, %c0_95], %297 {strides = array<i32>} : memref<8x2x128xf32, #tpu.memory_space<vmem>>, vector<8x2x128xf32>,
    return
  }
  func.func @transform_0(%arg0: i32) -> (i32, i32, i32) {
    %c0_i32 = arith.constant 0 : i32
    %c0_i32_0 = arith.constant 0 : i32
    %c0_i32_1 = arith.constant 0 : i32
    return %arg0, %c0_i32, %c0_i32_0 : i32, i32, i32
  }
  func.func @transform_1(%arg0: i32) -> (i32, i32) {
    %c0_i32 = arith.constant 0 : i32
    %c0_i32_0 = arith.constant 0 : i32
    %c0_i32_1 = arith.constant 0 : i32
    return %c0_i32, %c0_i32_0 : i32, i32
  }
  func.func @transform_2(%arg0: i32) -> (i32, i32) {
    %c0_i32 = arith.constant 0 : i32
    %c0_i32_0 = arith.constant 0 : i32
    %c0_i32_1 = arith.constant 0 : i32
    return %c0_i32, %c0_i32_0 : i32, i32
  }
  func.func @transform_3(%arg0: i32) -> (i32, i32) {
    %c0_i32 = arith.constant 0 : i32
    %c0_i32_0 = arith.constant 0 : i32
    %c0_i32_1 = arith.constant 0 : i32
    return %c0_i32, %c0_i32_0 : i32, i32
  }
  func.func @transform_4(%arg0: i32) -> (i32, i32) {
    %c0_i32 = arith.constant 0 : i32
    %c0_i32_0 = arith.constant 0 : i32
    %c0_i32_1 = arith.constant 0 : i32
    return %c0_i32, %c0_i32_0 : i32, i32
  }
  func.func @transform_5(%arg0: i32) -> (i32, i32) {
    %c0_i32 = arith.constant 0 : i32
    %c0_i32_0 = arith.constant 0 : i32
    %c0_i32_1 = arith.constant 0 : i32
    return %c0_i32, %c0_i32_0 : i32, i32
  }
  func.func @transform_6(%arg0: i32) -> (i32, i32, i32) {
    %c0_i32 = arith.constant 0 : i32
    %c0_i32_0 = arith.constant 0 : i32
    %c0_i32_1 = arith.constant 0 : i32
    return %arg0, %c0_i32, %c0_i32_0 : i32, i32, i32
  }
}

</mosaic_0001>

<llo_original>
// kernel: i3d_lstm_forward.2
$region0: #{i3d_lstm_forward.2}
  #allocation0 [shape = 'u32[]', space=smem, size = 0x4, offset = 0x4, fixed_abs, tag = 'smem constant byte address 0x4 - core index']
  #allocation1 [shape = 'u32[144,128]{1,0:T(1,128)}', space=vmem, size = 0x12000, scoped, tag = 'internal scratch']
  #allocation2 [shape = 'f32[8,2,128]{2,1,0:T(2,128)}', space=vmem, size = 0x2000, scoped, tag = 'scratch operand']
  %s0 = inlined_call_operand.vmem [shape: bf16[8,2,64,81], index: 0, kind: input, shape index: {}]
  %s1 = inlined_call_operand.vmem [shape: bf16[81,128], index: 1, kind: input, shape index: {}]
  %s2 = inlined_call_operand.vmem [shape: f32[1,128], index: 2, kind: input, shape index: {}]
  %s3 = inlined_call_operand.vmem [shape: bf16[8,2,128], index: 3, kind: output, shape index: {}]
  %s4 = sld [smem:[#allocation0]]
  $region30: #{i3d_lstm_forward.2} parent=0
    _
  %s6 = ssub.s32 1, %s4
  %s7 = scalar_select 0, %s6, %s4
  // Predicated region
  $region2: #{i3d_lstm_forward.2} parent=0 // pred_check
    _
  $region3: #{i3d_lstm_forward.2} parent=0 // pred_check_branch
    %9 = sbr.rel (0) target = $region5
  $region4: #{i3d_lstm_forward.2} parent=0 // pred_region
    _
  $region5: #{i3d_lstm_forward.2} parent=0 // pred_fallthru
    _
  // Predicated region
  $region6: #{i3d_lstm_forward.2} parent=0 // pred_check
    _
  $region7: #{i3d_lstm_forward.2} parent=0 // pred_check_branch
    %11 = sbr.rel (0) target = $region9
  $region8: #{i3d_lstm_forward.2} parent=0 // pred_region
    _
  $region9: #{i3d_lstm_forward.2} parent=0 // pred_fallthru
    _
  // Predicated region
  $region10: #{i3d_lstm_forward.2} parent=0 // pred_check
    _
  $region11: #{i3d_lstm_forward.2} parent=0 // pred_check_branch
    %13 = sbr.rel (0) target = $region13
  $region12: #{i3d_lstm_forward.2} parent=0 // pred_region
    _
  $region13: #{i3d_lstm_forward.2} parent=0 // pred_fallthru
    _
  %p15 = scmp.eq.s32.totalorder 0, 0
  // Predicated region
  $region14: #{i3d_lstm_forward.2} parent=0 // pred_check
    %p16 = pneg %p15
  $region15: #{i3d_lstm_forward.2} parent=0 // pred_check_branch
    %18 = sbr.rel (%p16) target = $region17
  $region16: #{i3d_lstm_forward.2} parent=0 // pred_region
    %19 = vst [vmem:[#allocation2] sm:$0x3] 0.0
    %20 = vst [vmem:[#allocation2 + $0x2] sm:$0x3] 0.0
    %21 = vst [vmem:[#allocation2 + $0x4] sm:$0x3] 0.0
    %22 = vst [vmem:[#allocation2 + $0x6] sm:$0x3] 0.0
    %23 = vst [vmem:[#allocation2 + $0x8] sm:$0x3] 0.0
    %24 = vst [vmem:[#allocation2 + $0xa] sm:$0x3] 0.0
    %25 = vst [vmem:[#allocation2 + $0xc] sm:$0x3] 0.0
    %26 = vst [vmem:[#allocation2 + $0xe] sm:$0x3] 0.0
  $region17: #{i3d_lstm_forward.2} parent=0 // pred_fallthru
    _
  %v27 = vld [vmem:[%s0] sm:$0xf]
  %v28 = vld [vmem:[%s0 + $0x4] sm:$0xf]
  %v29 = vld [vmem:[%s0 + $0x8] sm:$0xf]
  %v30 = vld [vmem:[%s0 + $0xc] sm:$0xf]
  %v31 = vld [vmem:[%s0 + $0x10] sm:$0xf]
  %v32 = vld [vmem:[%s0 + $0x14] sm:$0xf]
  %v33 = vld [vmem:[%s0 + $0x18] sm:$0xf]
  %v34 = vld [vmem:[%s0 + $0x1c] sm:$0xf]
  %v35 = vld [vmem:[%s0 + $0x20] sm:$0xf]
  %v36 = vld [vmem:[%s0 + $0x24] sm:$0xf]
  %v37 = vld [vmem:[%s0 + $0x28] sm:$0xf]
  %v38 = vld [vmem:[%s0 + $0x2c] sm:$0xf]
  %v39 = vld [vmem:[%s0 + $0x30] sm:$0xf]
  %v40 = vld [vmem:[%s0 + $0x34] sm:$0xf]
  %v41 = vld [vmem:[%s0 + $0x38] sm:$0xf]
  %v42 = vld [vmem:[%s0 + $0x3c] sm:$0xf]
  %v43 = vld [vmem:[%s0 + $0x40] sm:$0xf]
  %v44 = vld [vmem:[%s0 + $0x44] sm:$0xf]
  %v45 = vld [vmem:[%s0 + $0x48] sm:$0xf]
  %v46 = vld [vmem:[%s0 + $0x4c] sm:$0xf]
  %v47 = vld [vmem:[%s0 + $0x50] sm:$0xf]
  %v48 = vld [vmem:[%s0 + $0x54] sm:$0xf]
  %v49 = vld [vmem:[%s0 + $0x58] sm:$0xf]
  %v50 = vld [vmem:[%s0 + $0x5c] sm:$0xf]
  %v51 = vld [vmem:[%s0 + $0x60] sm:$0xf]
  %v52 = vld [vmem:[%s0 + $0x64] sm:$0xf]
  %v53 = vld [vmem:[%s0 + $0x68] sm:$0xf]
  %v54 = vld [vmem:[%s0 + $0x6c] sm:$0xf]
  %v55 = vld [vmem:[%s0 + $0x70] sm:$0xf]
  %v56 = vld [vmem:[%s0 + $0x74] sm:$0xf]
  %v57 = vld [vmem:[%s0 + $0x78] sm:$0xf]
  %v58 = vld [vmem:[%s0 + $0x7c] sm:$0xf]
  %v59 = vld [vmem:[%s0 + $0x80] sm:$0xf]
  %v60 = vld [vmem:[%s0 + $0x84] sm:$0xf]
  %v61 = vld [vmem:[%s0 + $0x88] sm:$0xf]
  %v62 = vld [vmem:[%s0 + $0x8c] sm:$0xf]
  %v63 = vld [vmem:[%s0 + $0x90] sm:$0xf]
  %v64 = vld [vmem:[%s0 + $0x94] sm:$0xf]
  %v65 = vld [vmem:[%s0 + $0x98] sm:$0xf]
  %v66 = vld [vmem:[%s0 + $0x9c] sm:$0xf]
  %v67 = vld [vmem:[%s0 + $0xa0] sm:$0xf]
  %v68 = vld [vmem:[%s0 + $0xa4] sm:$0xf]
  %v69 = vld [vmem:[%s0 + $0xa8] sm:$0xf]
  %v70 = vld [vmem:[%s0 + $0xac] sm:$0xf]
  %v71 = vld [vmem:[%s0 + $0xb0] sm:$0xf]
  %v72 = vld [vmem:[%s0 + $0xb4] sm:$0xf]
  %v73 = vld [vmem:[%s0 + $0xb8] sm:$0xf]
  %v74 = vld [vmem:[%s0 + $0xbc] sm:$0xf]
  %v75 = vld [vmem:[%s0 + $0xc0] sm:$0xf]
  %v76 = vld [vmem:[%s0 + $0xc4] sm:$0xf]
  %v77 = vld [vmem:[%s0 + $0xc8] sm:$0xf]
  %v78 = vld [vmem:[%s0 + $0xcc] sm:$0xf]
  %v79 = vld [vmem:[%s0 + $0xd0] sm:$0xf]
  %v80 = vld [vmem:[%s0 + $0xd4] sm:$0xf]
  %v81 = vld [vmem:[%s0 + $0xd8] sm:$0xf]
  %v82 = vld [vmem:[%s0 + $0xdc] sm:$0xf]
  %v83 = vld [vmem:[%s0 + $0xe0] sm:$0xf]
  %v84 = vld [vmem:[%s0 + $0xe4] sm:$0xf]
  %v85 = vld [vmem:[%s0 + $0xe8] sm:$0xf]
  %v86 = vld [vmem:[%s0 + $0xec] sm:$0xf]
  %v87 = vld [vmem:[%s0 + $0xf0] sm:$0xf]
  %v88 = vld [vmem:[%s0 + $0xf4] sm:$0xf]
  %v89 = vld [vmem:[%s0 + $0xf8] sm:$0xf]
  %v90 = vld [vmem:[%s0 + $0xfc] sm:$0xf]
  %v91 = vld [vmem:[%s0 + $0x100] sm:$0xf]
  %v92 = vld [vmem:[%s0 + $0x104] sm:$0xf]
  %v93 = vld [vmem:[%s0 + $0x108] sm:$0xf]
  %v94 = vld [vmem:[%s0 + $0x10c] sm:$0xf]
  %v95 = vld [vmem:[%s0 + $0x110] sm:$0xf]
  %v96 = vld [vmem:[%s0 + $0x114] sm:$0xf]
  %v97 = vld [vmem:[%s0 + $0x118] sm:$0xf]
  %v98 = vld [vmem:[%s0 + $0x11c] sm:$0xf]
  %v99 = vld [vmem:[%s0 + $0x120] sm:$0xf]
  %v100 = vld [vmem:[%s0 + $0x124] sm:$0xf]
  %v101 = vld [vmem:[%s0 + $0x128] sm:$0xf]
  %v102 = vld [vmem:[%s0 + $0x12c] sm:$0xf]
  %v103 = vld [vmem:[%s0 + $0x130] sm:$0xf]
  %v104 = vld [vmem:[%s0 + $0x134] sm:$0xf]
  %v105 = vld [vmem:[%s0 + $0x138] sm:$0xf]
  %v106 = vld [vmem:[%s0 + $0x13c] sm:$0xf]
  %v107 = vld [vmem:[%s0 + $0x140] sm:$0xf]
  %v108 = vld [vmem:[%s0 + $0x144] sm:$0xf]
  %v109 = vld [vmem:[%s0 + $0x148] sm:$0xf]
  %v110 = vld [vmem:[%s0 + $0x14c] sm:$0xf]
  %v111 = vld [vmem:[%s0 + $0x150] sm:$0xf]
  %v112 = vld [vmem:[%s0 + $0x154] sm:$0xf]
  %v113 = vld [vmem:[%s0 + $0x158] sm:$0xf]
  %v114 = vld [vmem:[%s0 + $0x15c] sm:$0xf]
  %v115 = vld [vmem:[%s0 + $0x160] sm:$0xf]
  %v116 = vld [vmem:[%s0 + $0x164] sm:$0xf]
  %v117 = vld [vmem:[%s0 + $0x168] sm:$0xf]
  %v118 = vld [vmem:[%s0 + $0x16c] sm:$0xf]
  %v119 = vld [vmem:[%s0 + $0x170] sm:$0xf]
  %v120 = vld [vmem:[%s0 + $0x174] sm:$0xf]
  %v121 = vld [vmem:[%s0 + $0x178] sm:$0xf]
  %v122 = vld [vmem:[%s0 + $0x17c] sm:$0xf]
  %v123 = vld [vmem:[%s0 + $0x180] sm:$0xf]
  %v124 = vld [vmem:[%s0 + $0x184] sm:$0xf]
  %v125 = vld [vmem:[%s0 + $0x188] sm:$0xf]
  %v126 = vld [vmem:[%s0 + $0x18c] sm:$0xf]
  %v127 = vld [vmem:[%s0 + $0x190] sm:$0xf]
  %v128 = vld [vmem:[%s0 + $0x194] sm:$0xf]
  %v129 = vld [vmem:[%s0 + $0x198] sm:$0xf]
  %v130 = vld [vmem:[%s0 + $0x19c] sm:$0xf]
  %v131 = vld [vmem:[%s0 + $0x1a0] sm:$0xf]
  %v132 = vld [vmem:[%s0 + $0x1a4] sm:$0xf]
  %v133 = vld [vmem:[%s0 + $0x1a8] sm:$0xf]
  %v134 = vld [vmem:[%s0 + $0x1ac] sm:$0xf]
  %v135 = vld [vmem:[%s0 + $0x1b0] sm:$0xf]
  %v136 = vld [vmem:[%s0 + $0x1b4] sm:$0xf]
  %v137 = vld [vmem:[%s0 + $0x1b8] sm:$0xf]
  %v138 = vld [vmem:[%s0 + $0x1bc] sm:$0xf]
  %v139 = vld [vmem:[%s0 + $0x1c0] sm:$0xf]
  %v140 = vld [vmem:[%s0 + $0x1c4] sm:$0xf]
  %v141 = vld [vmem:[%s0 + $0x1c8] sm:$0xf]
  %v142 = vld [vmem:[%s0 + $0x1cc] sm:$0xf]
  %v143 = vld [vmem:[%s0 + $0x1d0] sm:$0xf]
  %v144 = vld [vmem:[%s0 + $0x1d4] sm:$0xf]
  %v145 = vld [vmem:[%s0 + $0x1d8] sm:$0xf]
  %v146 = vld [vmem:[%s0 + $0x1dc] sm:$0xf]
  %v147 = vld [vmem:[%s0 + $0x1e0] sm:$0xf]
  %v148 = vld [vmem:[%s0 + $0x1e4] sm:$0xf]
  %v149 = vld [vmem:[%s0 + $0x1e8] sm:$0xf]
  %v150 = vld [vmem:[%s0 + $0x1ec] sm:$0xf]
  %v151 = vld [vmem:[%s0 + $0x1f0] sm:$0xf]
  %v152 = vld [vmem:[%s0 + $0x1f4] sm:$0xf]
  %v153 = vld [vmem:[%s0 + $0x1f8] sm:$0xf]
  %v154 = vld [vmem:[%s0 + $0x1fc] sm:$0xf]
  %v155 = vld [vmem:[%s1] sm:$0xf]
  %v156 = vld [vmem:[%s1 + $0x4] sm:$0xf]
  %v157 = vld [vmem:[%s1 + $0x8] sm:$0xf]
  %v158 = vld [vmem:[%s1 + $0xc] sm:$0xf]
  %v159 = vld [vmem:[%s1 + $0x10] sm:$0xf]
  %v160 = vld [vmem:[%s1 + $0x14] sm:$0xf]
  %v161 = vld [vmem:[%s1 + $0x18] sm:$0xf]
  %v162 = vld [vmem:[%s1 + $0x1c] sm:$0xf]
  %v163 = vld [vmem:[%s1 + $0x20] sm:$0xf]
  %v164 = vld [vmem:[%s1 + $0x24] sm:$0xf]
  %v165 = vld [vmem:[%s1 + $0x28] sm:$0x1]
  %v166 = vld [vmem:[%s2] sm:$0x1]
  %v168 = vlaneseq
  %v169 = vshrl.u32 %v168, 7
  %v170 = vsub.s32 0, %v169
  %v171 = vrot.slane %v166, %v170
  %v301 = vunpack.c.l.b16 %v27
  %v302 = vunpack.c.l.b16 %v28
  %v303 = vunpack.c.l.b16 %v29
  %v304 = vunpack.c.l.b16 %v30
  %v305 = vunpack.c.l.b16 %v31
  %v306 = vunpack.c.l.b16 %v32
  %v307 = vunpack.c.l.b16 %v33
  %v308 = vunpack.c.l.b16 %v34
  %v309 = vunpack.c.l.b16 %v35
  %v310 = vunpack.c.l.b16 %v36
  %v311 = vunpack.c.l.b16 %v37
  %v312 = vunpack.c.l.b16 %v38
  %v313 = vunpack.c.l.b16 %v39
  %v314 = vunpack.c.l.b16 %v40
  %v315 = vunpack.c.l.b16 %v41
  %v316 = vunpack.c.l.b16 %v42
  %v317 = vunpack.c.l.b16 %v43
  %v318 = vunpack.c.l.b16 %v44
  %v319 = vunpack.c.l.b16 %v45
  %v320 = vunpack.c.l.b16 %v46
  %v321 = vunpack.c.l.b16 %v47
  %v322 = vunpack.c.l.b16 %v48
  %v323 = vunpack.c.l.b16 %v49
  %v324 = vunpack.c.l.b16 %v50
  %v325 = vunpack.c.l.b16 %v51
  %v326 = vunpack.c.l.b16 %v52
  %v327 = vunpack.c.l.b16 %v53
  %v328 = vunpack.c.l.b16 %v54
  %v329 = vunpack.c.l.b16 %v55
  %v330 = vunpack.c.l.b16 %v56
  %v331 = vunpack.c.l.b16 %v57
  %v332 = vunpack.c.l.b16 %v58
  %v333 = vunpack.c.l.b16 %v59
  %v334 = vunpack.c.l.b16 %v60
  %v335 = vunpack.c.l.b16 %v61
  %v336 = vunpack.c.l.b16 %v62
  %v337 = vunpack.c.l.b16 %v63
  %v338 = vunpack.c.l.b16 %v64
  %v339 = vunpack.c.l.b16 %v65
  %v340 = vunpack.c.l.b16 %v66
  %v341 = vunpack.c.l.b16 %v67
  %v342 = vunpack.c.l.b16 %v68
  %v343 = vunpack.c.l.b16 %v69
  %v344 = vunpack.c.l.b16 %v70
  %v345 = vunpack.c.l.b16 %v71
  %v346 = vunpack.c.l.b16 %v72
  %v347 = vunpack.c.l.b16 %v73
  %v348 = vunpack.c.l.b16 %v74
  %v349 = vunpack.c.l.b16 %v75
  %v350 = vunpack.c.l.b16 %v76
  %v351 = vunpack.c.l.b16 %v77
  %v352 = vunpack.c.l.b16 %v78
  %v353 = vunpack.c.l.b16 %v79
  %v354 = vunpack.c.l.b16 %v80
  %v355 = vunpack.c.l.b16 %v81
  %v356 = vunpack.c.l.b16 %v82
  %v357 = vunpack.c.l.b16 %v83
  %v358 = vunpack.c.l.b16 %v84
  %v359 = vunpack.c.l.b16 %v85
  %v360 = vunpack.c.l.b16 %v86
  %v361 = vunpack.c.l.b16 %v87
  %v362 = vunpack.c.l.b16 %v88
  %v363 = vunpack.c.l.b16 %v89
  %v364 = vunpack.c.l.b16 %v90
  %v365 = vunpack.c.l.b16 %v91
  %v366 = vunpack.c.l.b16 %v92
  %v367 = vunpack.c.l.b16 %v93
  %v368 = vunpack.c.l.b16 %v94
  %v369 = vunpack.c.l.b16 %v95
  %v370 = vunpack.c.l.b16 %v96
  %v371 = vunpack.c.l.b16 %v97
  %v372 = vunpack.c.l.b16 %v98
  %v373 = vunpack.c.l.b16 %v99
  %v374 = vunpack.c.l.b16 %v100
  %v375 = vunpack.c.l.b16 %v101
  %v376 = vunpack.c.l.b16 %v102
  %v377 = vunpack.c.l.b16 %v103
  %v378 = vunpack.c.l.b16 %v104
  %v379 = vunpack.c.l.b16 %v105
  %v380 = vunpack.c.l.b16 %v106
  %v381 = vunpack.c.l.b16 %v107
  %v382 = vunpack.c.l.b16 %v108
  %v383 = vunpack.c.l.b16 %v109
  %v384 = vunpack.c.l.b16 %v110
  %v385 = vunpack.c.l.b16 %v111
  %v386 = vunpack.c.l.b16 %v112
  %v387 = vunpack.c.l.b16 %v113
  %v388 = vunpack.c.l.b16 %v114
  %v389 = vunpack.c.l.b16 %v115
  %v390 = vunpack.c.l.b16 %v116
  %v391 = vunpack.c.l.b16 %v117
  %v392 = vunpack.c.l.b16 %v118
  %v393 = vunpack.c.l.b16 %v119
  %v394 = vunpack.c.l.b16 %v120
  %v395 = vunpack.c.l.b16 %v121
  %v396 = vunpack.c.l.b16 %v122
  %v397 = vunpack.c.l.b16 %v123
  %v398 = vunpack.c.l.b16 %v124
  %v399 = vunpack.c.l.b16 %v125
  %v400 = vunpack.c.l.b16 %v126
  %v401 = vunpack.c.l.b16 %v127
  %v402 = vunpack.c.l.b16 %v128
  %v403 = vunpack.c.l.b16 %v129
  %v404 = vunpack.c.l.b16 %v130
  %v405 = vunpack.c.l.b16 %v131
  %v406 = vunpack.c.l.b16 %v132
  %v407 = vunpack.c.l.b16 %v133
  %v408 = vunpack.c.l.b16 %v134
  %v409 = vunpack.c.l.b16 %v135
  %v410 = vunpack.c.l.b16 %v136
  %v411 = vunpack.c.l.b16 %v137
  %v412 = vunpack.c.l.b16 %v138
  %v413 = vunpack.c.l.b16 %v139
  %v414 = vunpack.c.l.b16 %v140
  %v415 = vunpack.c.l.b16 %v141
  %v416 = vunpack.c.l.b16 %v142
  %v417 = vunpack.c.l.b16 %v143
  %v418 = vunpack.c.l.b16 %v144
  %v419 = vunpack.c.l.b16 %v145
  %v420 = vunpack.c.l.b16 %v146
  %v421 = vunpack.c.l.b16 %v147
  %v422 = vunpack.c.l.b16 %v148
  %v423 = vunpack.c.l.b16 %v149
  %v424 = vunpack.c.l.b16 %v150
  %v425 = vunpack.c.l.b16 %v151
  %v426 = vunpack.c.l.b16 %v152
  %v427 = vunpack.c.l.b16 %v153
  %v428 = vunpack.c.l.b16 %v154
  %v429 = vpack.c.b16 %v302, %v301
  %v430 = vpack.c.b16 %v304, %v303
  %v431 = vpack.c.b16 %v306, %v305
  %v432 = vpack.c.b16 %v308, %v307
  %v433 = vpack.c.b16 %v310, %v309
  %v434 = vpack.c.b16 %v312, %v311
  %v435 = vpack.c.b16 %v314, %v313
  %v436 = vpack.c.b16 %v316, %v315
  %v437 = vpack.c.b16 %v318, %v317
  %v438 = vpack.c.b16 %v320, %v319
  %v439 = vpack.c.b16 %v322, %v321
  %v440 = vpack.c.b16 %v324, %v323
  %v441 = vpack.c.b16 %v326, %v325
  %v442 = vpack.c.b16 %v328, %v327
  %v443 = vpack.c.b16 %v330, %v329
  %v444 = vpack.c.b16 %v332, %v331
  %v445 = vpack.c.b16 %v334, %v333
  %v446 = vpack.c.b16 %v336, %v335
  %v447 = vpack.c.b16 %v338, %v337
  %v448 = vpack.c.b16 %v340, %v339
  %v449 = vpack.c.b16 %v342, %v341
  %v450 = vpack.c.b16 %v344, %v343
  %v451 = vpack.c.b16 %v346, %v345
  %v452 = vpack.c.b16 %v348, %v347
  %v453 = vpack.c.b16 %v350, %v349
  %v454 = vpack.c.b16 %v352, %v351
  %v455 = vpack.c.b16 %v354, %v353
  %v456 = vpack.c.b16 %v356, %v355
  %v457 = vpack.c.b16 %v358, %v357
  %v458 = vpack.c.b16 %v360, %v359
  %v459 = vpack.c.b16 %v362, %v361
  %v460 = vpack.c.b16 %v364, %v363
  %v461 = vpack.c.b16 %v366, %v365
  %v462 = vpack.c.b16 %v368, %v367
  %v463 = vpack.c.b16 %v370, %v369
  %v464 = vpack.c.b16 %v372, %v371
  %v465 = vpack.c.b16 %v374, %v373
  %v466 = vpack.c.b16 %v376, %v375
  %v467 = vpack.c.b16 %v378, %v377
  %v468 = vpack.c.b16 %v380, %v379
  %v469 = vpack.c.b16 %v382, %v381
  %v470 = vpack.c.b16 %v384, %v383
  %v471 = vpack.c.b16 %v386, %v385
  %v472 = vpack.c.b16 %v388, %v387
  %v473 = vpack.c.b16 %v390, %v389
  %v474 = vpack.c.b16 %v392, %v391
  %v475 = vpack.c.b16 %v394, %v393
  %v476 = vpack.c.b16 %v396, %v395
  %v477 = vpack.c.b16 %v398, %v397
  %v478 = vpack.c.b16 %v400, %v399
  %v479 = vpack.c.b16 %v402, %v401
  %v480 = vpack.c.b16 %v404, %v403
  %v481 = vpack.c.b16 %v406, %v405
  %v482 = vpack.c.b16 %v408, %v407
  %v483 = vpack.c.b16 %v410, %v409
  %v484 = vpack.c.b16 %v412, %v411
  %v485 = vpack.c.b16 %v414, %v413
  %v486 = vpack.c.b16 %v416, %v415
  %v487 = vpack.c.b16 %v418, %v417
  %v488 = vpack.c.b16 %v420, %v419
  %v489 = vpack.c.b16 %v422, %v421
  %v490 = vpack.c.b16 %v424, %v423
  %v491 = vpack.c.b16 %v426, %v425
  %v492 = vpack.c.b16 %v428, %v427
  %v504 = vunpack.c.l.b16 %v155
  %v505 = vunpack.c.l.b16 %v156
  %v506 = vunpack.c.l.b16 %v157
  %v507 = vunpack.c.l.b16 %v158
  %v508 = vunpack.c.l.b16 %v159
  %v509 = vunpack.c.l.b16 %v160
  %v510 = vunpack.c.l.b16 %v161
  %v511 = vunpack.c.l.b16 %v162
  %v512 = vunpack.c.l.b16 %v163
  %v513 = vunpack.c.l.b16 %v164
  %v514 = vunpack.c.l.b16 %v165
  %v515 = vpack.c.b16 %v505, %v504
  %v516 = vpack.c.b16 %v507, %v506
  %v517 = vpack.c.b16 %v509, %v508
  %v518 = vpack.c.b16 %v511, %v510
  %v519 = vpack.c.b16 %v513, %v512
  %v520 = vpack.c.b16 %v514, %v514
  %vm526 = vcmask 662528
  %v528 = vsel %vm526, %v429, 0
  %v531 = vsel %vm526, %v430, 0
  %v534 = vsel %vm526, %v431, 0
  %v537 = vsel %vm526, %v432, 0
  %v540 = vsel %vm526, %v433, 0
  %v543 = vsel %vm526, %v434, 0
  %v546 = vsel %vm526, %v435, 0
  %v549 = vsel %vm526, %v436, 0
  %v552 = vsel %vm526, %v437, 0
  %v555 = vsel %vm526, %v438, 0
  %v558 = vsel %vm526, %v439, 0
  %v561 = vsel %vm526, %v440, 0
  %v564 = vsel %vm526, %v441, 0
  %v567 = vsel %vm526, %v442, 0
  %v570 = vsel %vm526, %v443, 0
  %v573 = vsel %vm526, %v444, 0
  %v576 = vsel %vm526, %v445, 0
  %v579 = vsel %vm526, %v446, 0
  %v582 = vsel %vm526, %v447, 0
  %v585 = vsel %vm526, %v448, 0
  %v588 = vsel %vm526, %v449, 0
  %v591 = vsel %vm526, %v450, 0
  %v594 = vsel %vm526, %v451, 0
  %v597 = vsel %vm526, %v452, 0
  %v600 = vsel %vm526, %v453, 0
  %v603 = vsel %vm526, %v454, 0
  %v606 = vsel %vm526, %v455, 0
  %v609 = vsel %vm526, %v456, 0
  %v612 = vsel %vm526, %v457, 0
  %v615 = vsel %vm526, %v458, 0
  %v618 = vsel %vm526, %v459, 0
  %v621 = vsel %vm526, %v460, 0
  %v624 = vsel %vm526, %v461, 0
  %v627 = vsel %vm526, %v462, 0
  %v630 = vsel %vm526, %v463, 0
  %v633 = vsel %vm526, %v464, 0
  %v636 = vsel %vm526, %v465, 0
  %v639 = vsel %vm526, %v466, 0
  %v642 = vsel %vm526, %v467, 0
  %v645 = vsel %vm526, %v468, 0
  %v648 = vsel %vm526, %v469, 0
  %v651 = vsel %vm526, %v470, 0
  %v654 = vsel %vm526, %v471, 0
  %v657 = vsel %vm526, %v472, 0
  %v660 = vsel %vm526, %v473, 0
  %v663 = vsel %vm526, %v474, 0
  %v666 = vsel %vm526, %v475, 0
  %v669 = vsel %vm526, %v476, 0
  %v672 = vsel %vm526, %v477, 0
  %v675 = vsel %vm526, %v478, 0
  %v678 = vsel %vm526, %v479, 0
  %v681 = vsel %vm526, %v480, 0
  %v684 = vsel %vm526, %v481, 0
  %v687 = vsel %vm526, %v482, 0
  %v690 = vsel %vm526, %v483, 0
  %v693 = vsel %vm526, %v484, 0
  %v696 = vsel %vm526, %v485, 0
  %v699 = vsel %vm526, %v486, 0
  %v702 = vsel %vm526, %v487, 0
  %v705 = vsel %vm526, %v488, 0
  %v708 = vsel %vm526, %v489, 0
  %v711 = vsel %vm526, %v490, 0
  %v714 = vsel %vm526, %v491, 0
  %v717 = vsel %vm526, %v492, 0
  %vm719 = vcmask 1040384
  %v720 = vsel 0, 4294967295, 65535
  %v721 = vsel %vm719, %v720, 0
  %v723 = vand.u32 %v520, %v721
  %725 = vmatprep.subr.bf16.mxu0 0
  %726 = vmatpush1.bf16.msra.mxu0 %v515
  %727 = vmatprep.subr.bf16.mxu0 0
  %728 = vmatpush1.bf16.msra.mxu0 %v516
  %729 = vmatprep.subr.bf16.mxu0 0
  %730 = vmatpush1.bf16.msra.mxu0 %v517
  %731 = vmatprep.subr.bf16.mxu0 0
  %732 = vmatpush1.bf16.msra.mxu0 %v518
  %733 = vmatprep.subr.bf16.mxu0 0
  %734 = vmatpush1.bf16.msra.mxu0 %v519
  %735 = vmatprep.subr.bf16.mxu0 0
  %736 = vmatpush1.bf16.msra.mxu0 %v723
  %737 = vmatprep.subr.bf16.mxu0 0
  %738 = vmatpush1.bf16.msra.mxu0 0
  %739 = vmatprep.subr.bf16.mxu0 0
  %740 = vmatpush1.bf16.msra.mxu0 0
  %741 = vmatprep.subr.bf16.mxu0 0
  %742 = vmatpush1.bf16.msra.mxu0 0
  %743 = vmatprep.subr.bf16.mxu0 0
  %744 = vmatpush1.bf16.msra.mxu0 0
  %745 = vmatprep.subr.bf16.mxu0 0
  %746 = vmatpush1.bf16.msra.mxu0 0
  %747 = vmatprep.subr.bf16.mxu0 0
  %748 = vmatpush1.bf16.msra.mxu0 0
  %749 = vmatprep.subr.bf16.mxu0 0
  %750 = vmatpush1.bf16.msra.mxu0 0
  %751 = vmatprep.subr.bf16.mxu0 0
  %752 = vmatpush1.bf16.msra.mxu0 0
  %753 = vmatprep.subr.bf16.mxu0 0
  %754 = vmatpush1.bf16.msra.mxu0 0
  %755 = vmatprep.subr.bf16.mxu0 0
  %756 = vmatpush1.bf16.msra.mxu0 0
  %757 = vmatprep.mubr.bf16.mxu0 0
  %758 = vmatmul.mubr.bf16.gmra.mrb[0].mxu0 %v528
  %v759 = vpop.f32.mrb[0].mxu0
  %v760 = vadd.f32 %v171, %v759
  %v761 = vpop.f32.mrb[0].mxu0
  %v762 = vpop.f32.mrb[0].mxu0
  %v763 = vadd.f32 %v171, %v762
  %v764 = vpop.f32.mrb[0].mxu0
  %765 = vmatprep.mubr.bf16.mxu0 0
  %766 = vmatmul.mubr.bf16.gmra.mrb[0].mxu0 %v531
  %v767 = vpop.f32.mrb[0].mxu0
  %v768 = vadd.f32 %v171, %v767
  %v769 = vpop.f32.mrb[0].mxu0
  %v770 = vpop.f32.mrb[0].mxu0
  %v771 = vadd.f32 %v171, %v770
  %v772 = vpop.f32.mrb[0].mxu0
  %773 = vmatprep.mubr.bf16.mxu0 0
  %774 = vmatmul.mubr.bf16.gmra.mrb[0].mxu0 %v534
  %v775 = vpop.f32.mrb[0].mxu0
  %v776 = vadd.f32 %v171, %v775
  %v777 = vpop.f32.mrb[0].mxu0
  %v778 = vpop.f32.mrb[0].mxu0
  %v779 = vadd.f32 %v171, %v778
  %v780 = vpop.f32.mrb[0].mxu0
  %781 = vmatprep.mubr.bf16.mxu0 0
  %782 = vmatmul.mubr.bf16.gmra.mrb[0].mxu0 %v537
  %v783 = vpop.f32.mrb[0].mxu0
  %v784 = vadd.f32 %v171, %v783
  %v785 = vpop.f32.mrb[0].mxu0
  %v786 = vpop.f32.mrb[0].mxu0
  %v787 = vadd.f32 %v171, %v786
  %v788 = vpop.f32.mrb[0].mxu0
  %789 = vmatprep.mubr.bf16.mxu0 0
  %790 = vmatmul.mubr.bf16.gmra.mrb[0].mxu0 %v540
  %v791 = vpop.f32.mrb[0].mxu0
  %v792 = vadd.f32 %v171, %v791
  %v793 = vpop.f32.mrb[0].mxu0
  %v794 = vpop.f32.mrb[0].mxu0
  %v795 = vadd.f32 %v171, %v794
  %v796 = vpop.f32.mrb[0].mxu0
  %797 = vmatprep.mubr.bf16.mxu0 0
  %798 = vmatmul.mubr.bf16.gmra.mrb[0].mxu0 %v543
  %v799 = vpop.f32.mrb[0].mxu0
  %v800 = vadd.f32 %v171, %v799
  %v801 = vpop.f32.mrb[0].mxu0
  %v802 = vpop.f32.mrb[0].mxu0
  %v803 = vadd.f32 %v171, %v802
  %v804 = vpop.f32.mrb[0].mxu0
  %805 = vmatprep.mubr.bf16.mxu0 0
  %806 = vmatmul.mubr.bf16.gmra.mrb[0].mxu0 %v546
  %v807 = vpop.f32.mrb[0].mxu0
  %v808 = vadd.f32 %v171, %v807
  %v809 = vpop.f32.mrb[0].mxu0
  %v810 = vpop.f32.mrb[0].mxu0
  %v811 = vadd.f32 %v171, %v810
  %v812 = vpop.f32.mrb[0].mxu0
  %813 = vmatprep.mubr.bf16.mxu0 0
  %814 = vmatmul.mubr.bf16.gmra.mrb[0].mxu0 %v549
  %v815 = vpop.f32.mrb[0].mxu0
  %v816 = vadd.f32 %v171, %v815
  %v817 = vpop.f32.mrb[0].mxu0
  %v818 = vpop.f32.mrb[0].mxu0
  %v819 = vadd.f32 %v171, %v818
  %v820 = vpop.f32.mrb[0].mxu0
  %821 = vmatprep.mubr.bf16.mxu0 0
  %822 = vmatmul.mubr.bf16.gmra.mrb[0].mxu0 %v552
  %v823 = vpop.f32.mrb[0].mxu0
  %v824 = vadd.f32 %v171, %v823
  %v825 = vpop.f32.mrb[0].mxu0
  %v826 = vpop.f32.mrb[0].mxu0
  %v827 = vadd.f32 %v171, %v826
  %v828 = vpop.f32.mrb[0].mxu0
  %829 = vmatprep.mubr.bf16.mxu0 0
  %830 = vmatmul.mubr.bf16.gmra.mrb[0].mxu0 %v555
  %v831 = vpop.f32.mrb[0].mxu0
  %v832 = vadd.f32 %v171, %v831
  %v833 = vpop.f32.mrb[0].mxu0
  %v834 = vpop.f32.mrb[0].mxu0
  %v835 = vadd.f32 %v171, %v834
  %v836 = vpop.f32.mrb[0].mxu0
  %837 = vmatprep.mubr.bf16.mxu0 0
  %838 = vmatmul.mubr.bf16.gmra.mrb[0].mxu0 %v558
  %v839 = vpop.f32.mrb[0].mxu0
  %v840 = vadd.f32 %v171, %v839
  %v841 = vpop.f32.mrb[0].mxu0
  %v842 = vpop.f32.mrb[0].mxu0
  %v843 = vadd.f32 %v171, %v842
  %v844 = vpop.f32.mrb[0].mxu0
  %845 = vmatprep.mubr.bf16.mxu0 0
  %846 = vmatmul.mubr.bf16.gmra.mrb[0].mxu0 %v561
  %v847 = vpop.f32.mrb[0].mxu0
  %v848 = vadd.f32 %v171, %v847
  %v849 = vpop.f32.mrb[0].mxu0
  %v850 = vpop.f32.mrb[0].mxu0
  %v851 = vadd.f32 %v171, %v850
  %v852 = vpop.f32.mrb[0].mxu0
  %853 = vmatprep.mubr.bf16.mxu0 0
  %854 = vmatmul.mubr.bf16.gmra.mrb[0].mxu0 %v564
  %v855 = vpop.f32.mrb[0].mxu0
  %v856 = vadd.f32 %v171, %v855
  %v857 = vpop.f32.mrb[0].mxu0
  %v858 = vpop.f32.mrb[0].mxu0
  %v859 = vadd.f32 %v171, %v858
  %v860 = vpop.f32.mrb[0].mxu0
  %861 = vmatprep.mubr.bf16.mxu0 0
  %862 = vmatmul.mubr.bf16.gmra.mrb[0].mxu0 %v567
  %v863 = vpop.f32.mrb[0].mxu0
  %v864 = vadd.f32 %v171, %v863
  %v865 = vpop.f32.mrb[0].mxu0
  %v866 = vpop.f32.mrb[0].mxu0
  %v867 = vadd.f32 %v171, %v866
  %v868 = vpop.f32.mrb[0].mxu0
  %869 = vmatprep.mubr.bf16.mxu0 0
  %870 = vmatmul.mubr.bf16.gmra.mrb[0].mxu0 %v570
  %v871 = vpop.f32.mrb[0].mxu0
  %v872 = vadd.f32 %v171, %v871
  %v873 = vpop.f32.mrb[0].mxu0
  %v874 = vpop.f32.mrb[0].mxu0
  %v875 = vadd.f32 %v171, %v874
  %v876 = vpop.f32.mrb[0].mxu0
  %877 = vmatprep.mubr.bf16.mxu0 0
  %878 = vmatmul.mubr.bf16.gmra.mrb[0].mxu0 %v573
  %v879 = vpop.f32.mrb[0].mxu0
  %v880 = vadd.f32 %v171, %v879
  %v881 = vpop.f32.mrb[0].mxu0
  %v882 = vpop.f32.mrb[0].mxu0
  %v883 = vadd.f32 %v171, %v882
  %v884 = vpop.f32.mrb[0].mxu0
  %885 = vmatprep.mubr.bf16.mxu0 0
  %886 = vmatmul.mubr.bf16.gmra.mrb[0].mxu0 %v576
  %v887 = vpop.f32.mrb[0].mxu0
  %v888 = vadd.f32 %v171, %v887
  %v889 = vpop.f32.mrb[0].mxu0
  %v890 = vpop.f32.mrb[0].mxu0
  %v891 = vadd.f32 %v171, %v890
  %v892 = vpop.f32.mrb[0].mxu0
  %893 = vmatprep.mubr.bf16.mxu0 0
  %894 = vmatmul.mubr.bf16.gmra.mrb[0].mxu0 %v579
  %v895 = vpop.f32.mrb[0].mxu0
  %v896 = vadd.f32 %v171, %v895
  %v897 = vpop.f32.mrb[0].mxu0
  %v898 = vpop.f32.mrb[0].mxu0
  %v899 = vadd.f32 %v171, %v898
  %v900 = vpop.f32.mrb[0].mxu0
  %901 = vmatprep.mubr.bf16.mxu0 0
  %902 = vmatmul.mubr.bf16.gmra.mrb[0].mxu0 %v582
  %v903 = vpop.f32.mrb[0].mxu0
  %v904 = vadd.f32 %v171, %v903
  %v905 = vpop.f32.mrb[0].mxu0
  %v906 = vpop.f32.mrb[0].mxu0
  %v907 = vadd.f32 %v171, %v906
  %v908 = vpop.f32.mrb[0].mxu0
  %909 = vmatprep.mubr.bf16.mxu0 0
  %910 = vmatmul.mubr.bf16.gmra.mrb[0].mxu0 %v585
  %v911 = vpop.f32.mrb[0].mxu0
  %v912 = vadd.f32 %v171, %v911
  %v913 = vpop.f32.mrb[0].mxu0
  %v914 = vpop.f32.mrb[0].mxu0
  %v915 = vadd.f32 %v171, %v914
  %v916 = vpop.f32.mrb[0].mxu0
  %917 = vmatprep.mubr.bf16.mxu0 0
  %918 = vmatmul.mubr.bf16.gmra.mrb[0].mxu0 %v588
  %v919 = vpop.f32.mrb[0].mxu0
  %v920 = vadd.f32 %v171, %v919
  %v921 = vpop.f32.mrb[0].mxu0
  %v922 = vpop.f32.mrb[0].mxu0
  %v923 = vadd.f32 %v171, %v922
  %v924 = vpop.f32.mrb[0].mxu0
  %925 = vmatprep.mubr.bf16.mxu0 0
  %926 = vmatmul.mubr.bf16.gmra.mrb[0].mxu0 %v591
  %v927 = vpop.f32.mrb[0].mxu0
  %v928 = vadd.f32 %v171, %v927
  %v929 = vpop.f32.mrb[0].mxu0
  %v930 = vpop.f32.mrb[0].mxu0
  %v931 = vadd.f32 %v171, %v930
  %v932 = vpop.f32.mrb[0].mxu0
  %933 = vmatprep.mubr.bf16.mxu0 0
  %934 = vmatmul.mubr.bf16.gmra.mrb[0].mxu0 %v594
  %v935 = vpop.f32.mrb[0].mxu0
  %v936 = vadd.f32 %v171, %v935
  %v937 = vpop.f32.mrb[0].mxu0
  %v938 = vpop.f32.mrb[0].mxu0
  %v939 = vadd.f32 %v171, %v938
  %v940 = vpop.f32.mrb[0].mxu0
  %941 = vmatprep.mubr.bf16.mxu0 0
  %942 = vmatmul.mubr.bf16.gmra.mrb[0].mxu0 %v597
  %v943 = vpop.f32.mrb[0].mxu0
  %v944 = vadd.f32 %v171, %v943
  %v945 = vpop.f32.mrb[0].mxu0
  %v946 = vpop.f32.mrb[0].mxu0
  %v947 = vadd.f32 %v171, %v946
  %v948 = vpop.f32.mrb[0].mxu0
  %949 = vmatprep.mubr.bf16.mxu0 0
  %950 = vmatmul.mubr.bf16.gmra.mrb[0].mxu0 %v600
  %v951 = vpop.f32.mrb[0].mxu0
  %v952 = vadd.f32 %v171, %v951
  %v953 = vpop.f32.mrb[0].mxu0
  %v954 = vpop.f32.mrb[0].mxu0
  %v955 = vadd.f32 %v171, %v954
  %v956 = vpop.f32.mrb[0].mxu0
  %957 = vmatprep.mubr.bf16.mxu0 0
  %958 = vmatmul.mubr.bf16.gmra.mrb[0].mxu0 %v603
  %v959 = vpop.f32.mrb[0].mxu0
  %v960 = vadd.f32 %v171, %v959
  %v961 = vpop.f32.mrb[0].mxu0
  %v962 = vpop.f32.mrb[0].mxu0
  %v963 = vadd.f32 %v171, %v962
  %v964 = vpop.f32.mrb[0].mxu0
  %965 = vmatprep.mubr.bf16.mxu0 0
  %966 = vmatmul.mubr.bf16.gmra.mrb[0].mxu0 %v606
  %v967 = vpop.f32.mrb[0].mxu0
  %v968 = vadd.f32 %v171, %v967
  %v969 = vpop.f32.mrb[0].mxu0
  %v970 = vpop.f32.mrb[0].mxu0
  %v971 = vadd.f32 %v171, %v970
  %v972 = vpop.f32.mrb[0].mxu0
  %973 = vmatprep.mubr.bf16.mxu0 0
  %974 = vmatmul.mubr.bf16.gmra.mrb[0].mxu0 %v609
  %v975 = vpop.f32.mrb[0].mxu0
  %v976 = vadd.f32 %v171, %v975
  %v977 = vpop.f32.mrb[0].mxu0
  %v978 = vpop.f32.mrb[0].mxu0
  %v979 = vadd.f32 %v171, %v978
  %v980 = vpop.f32.mrb[0].mxu0
  %981 = vmatprep.mubr.bf16.mxu0 0
  %982 = vmatmul.mubr.bf16.gmra.mrb[0].mxu0 %v612
  %v983 = vpop.f32.mrb[0].mxu0
  %v984 = vadd.f32 %v171, %v983
  %v985 = vpop.f32.mrb[0].mxu0
  %v986 = vpop.f32.mrb[0].mxu0
  %v987 = vadd.f32 %v171, %v986
  %v988 = vpop.f32.mrb[0].mxu0
  %989 = vmatprep.mubr.bf16.mxu0 0
  %990 = vmatmul.mubr.bf16.gmra.mrb[0].mxu0 %v615
  %v991 = vpop.f32.mrb[0].mxu0
  %v992 = vadd.f32 %v171, %v991
  %v993 = vpop.f32.mrb[0].mxu0
  %v994 = vpop.f32.mrb[0].mxu0
  %v995 = vadd.f32 %v171, %v994
  %v996 = vpop.f32.mrb[0].mxu0
  %997 = vmatprep.mubr.bf16.mxu0 0
  %998 = vmatmul.mubr.bf16.gmra.mrb[0].mxu0 %v618
  %v999 = vpop.f32.mrb[0].mxu0
  %v1000 = vadd.f32 %v171, %v999
  %v1001 = vpop.f32.mrb[0].mxu0
  %v1002 = vpop.f32.mrb[0].mxu0
  %v1003 = vadd.f32 %v171, %v1002
  %v1004 = vpop.f32.mrb[0].mxu0
  %1005 = vmatprep.mubr.bf16.mxu0 0
  %1006 = vmatmul.mubr.bf16.gmra.mrb[0].mxu0 %v621
  %v1007 = vpop.f32.mrb[0].mxu0
  %v1008 = vadd.f32 %v171, %v1007
  %v1009 = vpop.f32.mrb[0].mxu0
  %v1010 = vpop.f32.mrb[0].mxu0
  %v1011 = vadd.f32 %v171, %v1010
  %v1012 = vpop.f32.mrb[0].mxu0
  %1013 = vmatprep.mubr.bf16.mxu0 0
  %1014 = vmatmul.mubr.bf16.gmra.mrb[0].mxu0 %v624
  %v1015 = vpop.f32.mrb[0].mxu0
  %v1016 = vadd.f32 %v171, %v1015
  %v1017 = vpop.f32.mrb[0].mxu0
  %v1018 = vpop.f32.mrb[0].mxu0
  %v1019 = vadd.f32 %v171, %v1018
  %v1020 = vpop.f32.mrb[0].mxu0
  %1021 = vmatprep.mubr.bf16.mxu0 0
  %1022 = vmatmul.mubr.bf16.gmra.mrb[0].mxu0 %v627
  %v1023 = vpop.f32.mrb[0].mxu0
  %v1024 = vadd.f32 %v171, %v1023
  %v1025 = vpop.f32.mrb[0].mxu0
  %v1026 = vpop.f32.mrb[0].mxu0
  %v1027 = vadd.f32 %v171, %v1026
  %v1028 = vpop.f32.mrb[0].mxu0
  %1029 = vmatprep.mubr.bf16.mxu0 0
  %1030 = vmatmul.mubr.bf16.gmra.mrb[0].mxu0 %v630
  %v1031 = vpop.f32.mrb[0].mxu0
  %v1032 = vadd.f32 %v171, %v1031
  %v1033 = vpop.f32.mrb[0].mxu0
  %v1034 = vpop.f32.mrb[0].mxu0
  %v1035 = vadd.f32 %v171, %v1034
  %v1036 = vpop.f32.mrb[0].mxu0
  %1037 = vmatprep.mubr.bf16.mxu0 0
  %1038 = vmatmul.mubr.bf16.gmra.mrb[0].mxu0 %v633
  %v1039 = vpop.f32.mrb[0].mxu0
  %v1040 = vadd.f32 %v171, %v1039
  %v1041 = vpop.f32.mrb[0].mxu0
  %v1042 = vpop.f32.mrb[0].mxu0
  %v1043 = vadd.f32 %v171, %v1042
  %v1044 = vpop.f32.mrb[0].mxu0
  %1045 = vmatprep.mubr.bf16.mxu0 0
  %1046 = vmatmul.mubr.bf16.gmra.mrb[0].mxu0 %v636
  %v1047 = vpop.f32.mrb[0].mxu0
  %v1048 = vadd.f32 %v171, %v1047
  %v1049 = vpop.f32.mrb[0].mxu0
  %v1050 = vpop.f32.mrb[0].mxu0
  %v1051 = vadd.f32 %v171, %v1050
  %v1052 = vpop.f32.mrb[0].mxu0
  %1053 = vmatprep.mubr.bf16.mxu0 0
  %1054 = vmatmul.mubr.bf16.gmra.mrb[0].mxu0 %v639
  %v1055 = vpop.f32.mrb[0].mxu0
  %v1056 = vadd.f32 %v171, %v1055
  %v1057 = vpop.f32.mrb[0].mxu0
  %v1058 = vpop.f32.mrb[0].mxu0
  %v1059 = vadd.f32 %v171, %v1058
  %v1060 = vpop.f32.mrb[0].mxu0
  %1061 = vmatprep.mubr.bf16.mxu0 0
  %1062 = vmatmul.mubr.bf16.gmra.mrb[0].mxu0 %v642
  %v1063 = vpop.f32.mrb[0].mxu0
  %v1064 = vadd.f32 %v171, %v1063
  %v1065 = vpop.f32.mrb[0].mxu0
  %v1066 = vpop.f32.mrb[0].mxu0
  %v1067 = vadd.f32 %v171, %v1066
  %v1068 = vpop.f32.mrb[0].mxu0
  %1069 = vmatprep.mubr.bf16.mxu0 0
  %1070 = vmatmul.mubr.bf16.gmra.mrb[0].mxu0 %v645
  %v1071 = vpop.f32.mrb[0].mxu0
  %v1072 = vadd.f32 %v171, %v1071
  %v1073 = vpop.f32.mrb[0].mxu0
  %v1074 = vpop.f32.mrb[0].mxu0
  %v1075 = vadd.f32 %v171, %v1074
  %v1076 = vpop.f32.mrb[0].mxu0
  %1077 = vmatprep.mubr.bf16.mxu0 0
  %1078 = vmatmul.mubr.bf16.gmra.mrb[0].mxu0 %v648
  %v1079 = vpop.f32.mrb[0].mxu0
  %v1080 = vadd.f32 %v171, %v1079
  %v1081 = vpop.f32.mrb[0].mxu0
  %v1082 = vpop.f32.mrb[0].mxu0
  %v1083 = vadd.f32 %v171, %v1082
  %v1084 = vpop.f32.mrb[0].mxu0
  %1085 = vmatprep.mubr.bf16.mxu0 0
  %1086 = vmatmul.mubr.bf16.gmra.mrb[0].mxu0 %v651
  %v1087 = vpop.f32.mrb[0].mxu0
  %v1088 = vadd.f32 %v171, %v1087
  %v1089 = vpop.f32.mrb[0].mxu0
  %v1090 = vpop.f32.mrb[0].mxu0
  %v1091 = vadd.f32 %v171, %v1090
  %v1092 = vpop.f32.mrb[0].mxu0
  %1093 = vmatprep.mubr.bf16.mxu0 0
  %1094 = vmatmul.mubr.bf16.gmra.mrb[0].mxu0 %v654
  %v1095 = vpop.f32.mrb[0].mxu0
  %v1096 = vadd.f32 %v171, %v1095
  %v1097 = vpop.f32.mrb[0].mxu0
  %v1098 = vpop.f32.mrb[0].mxu0
  %v1099 = vadd.f32 %v171, %v1098
  %v1100 = vpop.f32.mrb[0].mxu0
  %1101 = vmatprep.mubr.bf16.mxu0 0
  %1102 = vmatmul.mubr.bf16.gmra.mrb[0].mxu0 %v657
  %v1103 = vpop.f32.mrb[0].mxu0
  %v1104 = vadd.f32 %v171, %v1103
  %v1105 = vpop.f32.mrb[0].mxu0
  %v1106 = vpop.f32.mrb[0].mxu0
  %v1107 = vadd.f32 %v171, %v1106
  %v1108 = vpop.f32.mrb[0].mxu0
  %1109 = vmatprep.mubr.bf16.mxu0 0
  %1110 = vmatmul.mubr.bf16.gmra.mrb[0].mxu0 %v660
  %v1111 = vpop.f32.mrb[0].mxu0
  %v1112 = vadd.f32 %v171, %v1111
  %v1113 = vpop.f32.mrb[0].mxu0
  %v1114 = vpop.f32.mrb[0].mxu0
  %v1115 = vadd.f32 %v171, %v1114
  %v1116 = vpop.f32.mrb[0].mxu0
  %1117 = vmatprep.mubr.bf16.mxu0 0
  %1118 = vmatmul.mubr.bf16.gmra.mrb[0].mxu0 %v663
  %v1119 = vpop.f32.mrb[0].mxu0
  %v1120 = vadd.f32 %v171, %v1119
  %v1121 = vpop.f32.mrb[0].mxu0
  %v1122 = vpop.f32.mrb[0].mxu0
  %v1123 = vadd.f32 %v171, %v1122
  %v1124 = vpop.f32.mrb[0].mxu0
  %1125 = vmatprep.mubr.bf16.mxu0 0
  %1126 = vmatmul.mubr.bf16.gmra.mrb[0].mxu0 %v666
  %v1127 = vpop.f32.mrb[0].mxu0
  %v1128 = vadd.f32 %v171, %v1127
  %v1129 = vpop.f32.mrb[0].mxu0
  %v1130 = vpop.f32.mrb[0].mxu0
  %v1131 = vadd.f32 %v171, %v1130
  %v1132 = vpop.f32.mrb[0].mxu0
  %1133 = vmatprep.mubr.bf16.mxu0 0
  %1134 = vmatmul.mubr.bf16.gmra.mrb[0].mxu0 %v669
  %v1135 = vpop.f32.mrb[0].mxu0
  %v1136 = vadd.f32 %v171, %v1135
  %v1137 = vpop.f32.mrb[0].mxu0
  %v1138 = vpop.f32.mrb[0].mxu0
  %v1139 = vadd.f32 %v171, %v1138
  %v1140 = vpop.f32.mrb[0].mxu0
  %1141 = vmatprep.mubr.bf16.mxu0 0
  %1142 = vmatmul.mubr.bf16.gmra.mrb[0].mxu0 %v672
  %v1143 = vpop.f32.mrb[0].mxu0
  %v1144 = vadd.f32 %v171, %v1143
  %v1145 = vpop.f32.mrb[0].mxu0
  %v1146 = vpop.f32.mrb[0].mxu0
  %v1147 = vadd.f32 %v171, %v1146
  %v1148 = vpop.f32.mrb[0].mxu0
  %1149 = vmatprep.mubr.bf16.mxu0 0
  %1150 = vmatmul.mubr.bf16.gmra.mrb[0].mxu0 %v675
  %v1151 = vpop.f32.mrb[0].mxu0
  %v1152 = vadd.f32 %v171, %v1151
  %v1153 = vpop.f32.mrb[0].mxu0
  %v1154 = vpop.f32.mrb[0].mxu0
  %v1155 = vadd.f32 %v171, %v1154
  %v1156 = vpop.f32.mrb[0].mxu0
  %1157 = vmatprep.mubr.bf16.mxu0 0
  %1158 = vmatmul.mubr.bf16.gmra.mrb[0].mxu0 %v678
  %v1159 = vpop.f32.mrb[0].mxu0
  %v1160 = vadd.f32 %v171, %v1159
  %v1161 = vpop.f32.mrb[0].mxu0
  %v1162 = vpop.f32.mrb[0].mxu0
  %v1163 = vadd.f32 %v171, %v1162
  %v1164 = vpop.f32.mrb[0].mxu0
  %1165 = vmatprep.mubr.bf16.mxu0 0
  %1166 = vmatmul.mubr.bf16.gmra.mrb[0].mxu0 %v681
  %v1167 = vpop.f32.mrb[0].mxu0
  %v1168 = vadd.f32 %v171, %v1167
  %v1169 = vpop.f32.mrb[0].mxu0
  %v1170 = vpop.f32.mrb[0].mxu0
  %v1171 = vadd.f32 %v171, %v1170
  %v1172 = vpop.f32.mrb[0].mxu0
  %1173 = vmatprep.mubr.bf16.mxu0 0
  %1174 = vmatmul.mubr.bf16.gmra.mrb[0].mxu0 %v684
  %v1175 = vpop.f32.mrb[0].mxu0
  %v1176 = vadd.f32 %v171, %v1175
  %v1177 = vpop.f32.mrb[0].mxu0
  %v1178 = vpop.f32.mrb[0].mxu0
  %v1179 = vadd.f32 %v171, %v1178
  %v1180 = vpop.f32.mrb[0].mxu0
  %1181 = vmatprep.mubr.bf16.mxu0 0
  %1182 = vmatmul.mubr.bf16.gmra.mrb[0].mxu0 %v687
  %v1183 = vpop.f32.mrb[0].mxu0
  %v1184 = vadd.f32 %v171, %v1183
  %v1185 = vpop.f32.mrb[0].mxu0
  %v1186 = vpop.f32.mrb[0].mxu0
  %v1187 = vadd.f32 %v171, %v1186
  %v1188 = vpop.f32.mrb[0].mxu0
  %1189 = vmatprep.mubr.bf16.mxu0 0
  %1190 = vmatmul.mubr.bf16.gmra.mrb[0].mxu0 %v690
  %v1191 = vpop.f32.mrb[0].mxu0
  %v1192 = vadd.f32 %v171, %v1191
  %v1193 = vpop.f32.mrb[0].mxu0
  %v1194 = vpop.f32.mrb[0].mxu0
  %v1195 = vadd.f32 %v171, %v1194
  %v1196 = vpop.f32.mrb[0].mxu0
  %1197 = vmatprep.mubr.bf16.mxu0 0
  %1198 = vmatmul.mubr.bf16.gmra.mrb[0].mxu0 %v693
  %v1199 = vpop.f32.mrb[0].mxu0
  %v1200 = vadd.f32 %v171, %v1199
  %v1201 = vpop.f32.mrb[0].mxu0
  %v1202 = vpop.f32.mrb[0].mxu0
  %v1203 = vadd.f32 %v171, %v1202
  %v1204 = vpop.f32.mrb[0].mxu0
  %1205 = vmatprep.mubr.bf16.mxu0 0
  %1206 = vmatmul.mubr.bf16.gmra.mrb[0].mxu0 %v696
  %v1207 = vpop.f32.mrb[0].mxu0
  %v1208 = vadd.f32 %v171, %v1207
  %v1209 = vpop.f32.mrb[0].mxu0
  %v1210 = vpop.f32.mrb[0].mxu0
  %v1211 = vadd.f32 %v171, %v1210
  %v1212 = vpop.f32.mrb[0].mxu0
  %1213 = vmatprep.mubr.bf16.mxu0 0
  %1214 = vmatmul.mubr.bf16.gmra.mrb[0].mxu0 %v699
  %v1215 = vpop.f32.mrb[0].mxu0
  %v1216 = vadd.f32 %v171, %v1215
  %v1217 = vpop.f32.mrb[0].mxu0
  %v1218 = vpop.f32.mrb[0].mxu0
  %v1219 = vadd.f32 %v171, %v1218
  %v1220 = vpop.f32.mrb[0].mxu0
  %1221 = vmatprep.mubr.bf16.mxu0 0
  %1222 = vmatmul.mubr.bf16.gmra.mrb[0].mxu0 %v702
  %v1223 = vpop.f32.mrb[0].mxu0
  %v1224 = vadd.f32 %v171, %v1223
  %v1225 = vpop.f32.mrb[0].mxu0
  %v1226 = vpop.f32.mrb[0].mxu0
  %v1227 = vadd.f32 %v171, %v1226
  %v1228 = vpop.f32.mrb[0].mxu0
  %1229 = vmatprep.mubr.bf16.mxu0 0
  %1230 = vmatmul.mubr.bf16.gmra.mrb[0].mxu0 %v705
  %v1231 = vpop.f32.mrb[0].mxu0
  %v1232 = vadd.f32 %v171, %v1231
  %v1233 = vpop.f32.mrb[0].mxu0
  %v1234 = vpop.f32.mrb[0].mxu0
  %v1235 = vadd.f32 %v171, %v1234
  %v1236 = vpop.f32.mrb[0].mxu0
  %1237 = vmatprep.mubr.bf16.mxu0 0
  %1238 = vmatmul.mubr.bf16.gmra.mrb[0].mxu0 %v708
  %v1239 = vpop.f32.mrb[0].mxu0
  %v1240 = vadd.f32 %v171, %v1239
  %v1241 = vpop.f32.mrb[0].mxu0
  %v1242 = vpop.f32.mrb[0].mxu0
  %v1243 = vadd.f32 %v171, %v1242
  %v1244 = vpop.f32.mrb[0].mxu0
  %1245 = vmatprep.mubr.bf16.mxu0 0
  %1246 = vmatmul.mubr.bf16.gmra.mrb[0].mxu0 %v711
  %v1247 = vpop.f32.mrb[0].mxu0
  %v1248 = vadd.f32 %v171, %v1247
  %v1249 = vpop.f32.mrb[0].mxu0
  %v1250 = vpop.f32.mrb[0].mxu0
  %v1251 = vadd.f32 %v171, %v1250
  %v1252 = vpop.f32.mrb[0].mxu0
  %1253 = vmatprep.mubr.bf16.mxu0 0
  %1254 = vmatmul.mubr.bf16.gmra.mrb[0].mxu0 %v714
  %v1255 = vpop.f32.mrb[0].mxu0
  %v1256 = vadd.f32 %v171, %v1255
  %v1257 = vpop.f32.mrb[0].mxu0
  %v1258 = vpop.f32.mrb[0].mxu0
  %v1259 = vadd.f32 %v171, %v1258
  %v1260 = vpop.f32.mrb[0].mxu0
  %1261 = vmatprep.mubr.bf16.mxu0 0
  %1262 = vmatmul.mubr.bf16.gmra.mrb[0].mxu0 %v717
  %v1263 = vpop.f32.mrb[0].mxu0
  %v1264 = vadd.f32 %v171, %v1263
  %v1265 = vpop.f32.mrb[0].mxu0
  %v1266 = vpop.f32.mrb[0].mxu0
  %v1267 = vadd.f32 %v171, %v1266
  %v1268 = vpop.f32.mrb[0].mxu0
  %1269 = vdwg.mxu0
  %v1270 = vmax.f32 %v760, 0.0
  %v1271 = vmax.f32 %v763, 0.0
  %v1272 = vmax.f32 %v768, 0.0
  %v1273 = vmax.f32 %v771, 0.0
  %v1274 = vmax.f32 %v776, 0.0
  %v1275 = vmax.f32 %v779, 0.0
  %v1276 = vmax.f32 %v784, 0.0
  %v1277 = vmax.f32 %v787, 0.0
  %v1278 = vmax.f32 %v792, 0.0
  %v1279 = vmax.f32 %v795, 0.0
  %v1280 = vmax.f32 %v800, 0.0
  %v1281 = vmax.f32 %v803, 0.0
  %v1282 = vmax.f32 %v808, 0.0
  %v1283 = vmax.f32 %v811, 0.0
  %v1284 = vmax.f32 %v816, 0.0
  %v1285 = vmax.f32 %v819, 0.0
  %v1286 = vmax.f32 %v824, 0.0
  %v1287 = vmax.f32 %v827, 0.0
  %v1288 = vmax.f32 %v832, 0.0
  %v1289 = vmax.f32 %v835, 0.0
  %v1290 = vmax.f32 %v840, 0.0
  %v1291 = vmax.f32 %v843, 0.0
  %v1292 = vmax.f32 %v848, 0.0
  %v1293 = vmax.f32 %v851, 0.0
  %v1294 = vmax.f32 %v856, 0.0
  %v1295 = vmax.f32 %v859, 0.0
  %v1296 = vmax.f32 %v864, 0.0
  %v1297 = vmax.f32 %v867, 0.0
  %v1298 = vmax.f32 %v872, 0.0
  %v1299 = vmax.f32 %v875, 0.0
  %v1300 = vmax.f32 %v880, 0.0
  %v1301 = vmax.f32 %v883, 0.0
  %v1302 = vmax.f32 %v888, 0.0
  %v1303 = vmax.f32 %v891, 0.0
  %v1304 = vmax.f32 %v896, 0.0
  %v1305 = vmax.f32 %v899, 0.0
  %v1306 = vmax.f32 %v904, 0.0
  %v1307 = vmax.f32 %v907, 0.0
  %v1308 = vmax.f32 %v912, 0.0
  %v1309 = vmax.f32 %v915, 0.0
  %v1310 = vmax.f32 %v920, 0.0
  %v1311 = vmax.f32 %v923, 0.0
  %v1312 = vmax.f32 %v928, 0.0
  %v1313 = vmax.f32 %v931, 0.0
  %v1314 = vmax.f32 %v936, 0.0
  %v1315 = vmax.f32 %v939, 0.0
  %v1316 = vmax.f32 %v944, 0.0
  %v1317 = vmax.f32 %v947, 0.0
  %v1318 = vmax.f32 %v952, 0.0
  %v1319 = vmax.f32 %v955, 0.0
  %v1320 = vmax.f32 %v960, 0.0
  %v1321 = vmax.f32 %v963, 0.0
  %v1322 = vmax.f32 %v968, 0.0
  %v1323 = vmax.f32 %v971, 0.0
  %v1324 = vmax.f32 %v976, 0.0
  %v1325 = vmax.f32 %v979, 0.0
  %v1326 = vmax.f32 %v984, 0.0
  %v1327 = vmax.f32 %v987, 0.0
  %v1328 = vmax.f32 %v992, 0.0
  %v1329 = vmax.f32 %v995, 0.0
  %v1330 = vmax.f32 %v1000, 0.0
  %v1331 = vmax.f32 %v1003, 0.0
  %v1332 = vmax.f32 %v1008, 0.0
  %v1333 = vmax.f32 %v1011, 0.0
  %v1334 = vmax.f32 %v1016, 0.0
  %v1335 = vmax.f32 %v1019, 0.0
  %v1336 = vmax.f32 %v1024, 0.0
  %v1337 = vmax.f32 %v1027, 0.0
  %v1338 = vmax.f32 %v1032, 0.0
  %v1339 = vmax.f32 %v1035, 0.0
  %v1340 = vmax.f32 %v1040, 0.0
  %v1341 = vmax.f32 %v1043, 0.0
  %v1342 = vmax.f32 %v1048, 0.0
  %v1343 = vmax.f32 %v1051, 0.0
  %v1344 = vmax.f32 %v1056, 0.0
  %v1345 = vmax.f32 %v1059, 0.0
  %v1346 = vmax.f32 %v1064, 0.0
  %v1347 = vmax.f32 %v1067, 0.0
  %v1348 = vmax.f32 %v1072, 0.0
  %v1349 = vmax.f32 %v1075, 0.0
  %v1350 = vmax.f32 %v1080, 0.0
  %v1351 = vmax.f32 %v1083, 0.0
  %v1352 = vmax.f32 %v1088, 0.0
  %v1353 = vmax.f32 %v1091, 0.0
  %v1354 = vmax.f32 %v1096, 0.0
  %v1355 = vmax.f32 %v1099, 0.0
  %v1356 = vmax.f32 %v1104, 0.0
  %v1357 = vmax.f32 %v1107, 0.0
  %v1358 = vmax.f32 %v1112, 0.0
  %v1359 = vmax.f32 %v1115, 0.0
  %v1360 = vmax.f32 %v1120, 0.0
  %v1361 = vmax.f32 %v1123, 0.0
  %v1362 = vmax.f32 %v1128, 0.0
  %v1363 = vmax.f32 %v1131, 0.0
  %v1364 = vmax.f32 %v1136, 0.0
  %v1365 = vmax.f32 %v1139, 0.0
  %v1366 = vmax.f32 %v1144, 0.0
  %v1367 = vmax.f32 %v1147, 0.0
  %v1368 = vmax.f32 %v1152, 0.0
  %v1369 = vmax.f32 %v1155, 0.0
  %v1370 = vmax.f32 %v1160, 0.0
  %v1371 = vmax.f32 %v1163, 0.0
  %v1372 = vmax.f32 %v1168, 0.0
  %v1373 = vmax.f32 %v1171, 0.0
  %v1374 = vmax.f32 %v1176, 0.0
  %v1375 = vmax.f32 %v1179, 0.0
  %v1376 = vmax.f32 %v1184, 0.0
  %v1377 = vmax.f32 %v1187, 0.0
  %v1378 = vmax.f32 %v1192, 0.0
  %v1379 = vmax.f32 %v1195, 0.0
  %v1380 = vmax.f32 %v1200, 0.0
  %v1381 = vmax.f32 %v1203, 0.0
  %v1382 = vmax.f32 %v1208, 0.0
  %v1383 = vmax.f32 %v1211, 0.0
  %v1384 = vmax.f32 %v1216, 0.0
  %v1385 = vmax.f32 %v1219, 0.0
  %v1386 = vmax.f32 %v1224, 0.0
  %v1387 = vmax.f32 %v1227, 0.0
  %v1388 = vmax.f32 %v1232, 0.0
  %v1389 = vmax.f32 %v1235, 0.0
  %v1390 = vmax.f32 %v1240, 0.0
  %v1391 = vmax.f32 %v1243, 0.0
  %v1392 = vmax.f32 %v1248, 0.0
  %v1393 = vmax.f32 %v1251, 0.0
  %v1394 = vmax.f32 %v1256, 0.0
  %v1395 = vmax.f32 %v1259, 0.0
  %v1396 = vmax.f32 %v1264, 0.0
  %v1397 = vmax.f32 %v1267, 0.0
  %v1398 = vld [vmem:[#allocation2] sm:$0x3]
  %v1399 = vld [vmem:[#allocation2 + $0x2] sm:$0x3]
  %v1400 = vld [vmem:[#allocation2 + $0x4] sm:$0x3]
  %v1401 = vld [vmem:[#allocation2 + $0x6] sm:$0x3]
  %v1402 = vld [vmem:[#allocation2 + $0x8] sm:$0x3]
  %v1403 = vld [vmem:[#allocation2 + $0xa] sm:$0x3]
  %v1404 = vld [vmem:[#allocation2 + $0xc] sm:$0x3]
  %v1405 = vld [vmem:[#allocation2 + $0xe] sm:$0x3]
  %v1406 = vadd.f32 %v1270, %v1271
  %v1407 = vadd.f32 %v1406, %v1272
  %v1408 = vadd.f32 %v1407, %v1273
  %v1409 = vadd.f32 %v1408, %v1274
  %v1410 = vadd.f32 %v1409, %v1275
  %v1411 = vadd.f32 %v1410, %v1276
  %v1412 = vadd.f32 %v1411, %v1277
  %v1413 = vrot.slane %v1412, 4
  %v1414 = vadd.f32 %v1412, %v1413
  %v1415 = vrot.slane %v1414, 2
  %v1416 = vadd.f32 %v1414, %v1415
  %v1417 = vrot.slane %v1416, 1
  %v1418 = vadd.f32 %v1416, %v1417
  %v1419 = vadd.f32 %v1278, %v1279
  %v1420 = vadd.f32 %v1419, %v1280
  %v1421 = vadd.f32 %v1420, %v1281
  %v1422 = vadd.f32 %v1421, %v1282
  %v1423 = vadd.f32 %v1422, %v1283
  %v1424 = vadd.f32 %v1423, %v1284
  %v1425 = vadd.f32 %v1424, %v1285
  %v1426 = vrot.slane %v1425, 4
  %v1427 = vadd.f32 %v1425, %v1426
  %v1428 = vrot.slane %v1427, 2
  %v1429 = vadd.f32 %v1427, %v1428
  %v1430 = vrot.slane %v1429, 1
  %v1431 = vadd.f32 %v1429, %v1430
  %v1432 = vadd.f32 %v1286, %v1287
  %v1433 = vadd.f32 %v1432, %v1288
  %v1434 = vadd.f32 %v1433, %v1289
  %v1435 = vadd.f32 %v1434, %v1290
  %v1436 = vadd.f32 %v1435, %v1291
  %v1437 = vadd.f32 %v1436, %v1292
  %v1438 = vadd.f32 %v1437, %v1293
  %v1439 = vrot.slane %v1438, 4
  %v1440 = vadd.f32 %v1438, %v1439
  %v1441 = vrot.slane %v1440, 2
  %v1442 = vadd.f32 %v1440, %v1441
  %v1443 = vrot.slane %v1442, 1
  %v1444 = vadd.f32 %v1442, %v1443
  %v1445 = vadd.f32 %v1294, %v1295
  %v1446 = vadd.f32 %v1445, %v1296
  %v1447 = vadd.f32 %v1446, %v1297
  %v1448 = vadd.f32 %v1447, %v1298
  %v1449 = vadd.f32 %v1448, %v1299
  %v1450 = vadd.f32 %v1449, %v1300
  %v1451 = vadd.f32 %v1450, %v1301
  %v1452 = vrot.slane %v1451, 4
  %v1453 = vadd.f32 %v1451, %v1452
  %v1454 = vrot.slane %v1453, 2
  %v1455 = vadd.f32 %v1453, %v1454
  %v1456 = vrot.slane %v1455, 1
  %v1457 = vadd.f32 %v1455, %v1456
  %v1458 = vadd.f32 %v1302, %v1303
  %v1459 = vadd.f32 %v1458, %v1304
  %v1460 = vadd.f32 %v1459, %v1305
  %v1461 = vadd.f32 %v1460, %v1306
  %v1462 = vadd.f32 %v1461, %v1307
  %v1463 = vadd.f32 %v1462, %v1308
  %v1464 = vadd.f32 %v1463, %v1309
  %v1465 = vrot.slane %v1464, 4
  %v1466 = vadd.f32 %v1464, %v1465
  %v1467 = vrot.slane %v1466, 2
  %v1468 = vadd.f32 %v1466, %v1467
  %v1469 = vrot.slane %v1468, 1
  %v1470 = vadd.f32 %v1468, %v1469
  %v1471 = vadd.f32 %v1310, %v1311
  %v1472 = vadd.f32 %v1471, %v1312
  %v1473 = vadd.f32 %v1472, %v1313
  %v1474 = vadd.f32 %v1473, %v1314
  %v1475 = vadd.f32 %v1474, %v1315
  %v1476 = vadd.f32 %v1475, %v1316
  %v1477 = vadd.f32 %v1476, %v1317
  %v1478 = vrot.slane %v1477, 4
  %v1479 = vadd.f32 %v1477, %v1478
  %v1480 = vrot.slane %v1479, 2
  %v1481 = vadd.f32 %v1479, %v1480
  %v1482 = vrot.slane %v1481, 1
  %v1483 = vadd.f32 %v1481, %v1482
  %v1484 = vadd.f32 %v1318, %v1319
  %v1485 = vadd.f32 %v1484, %v1320
  %v1486 = vadd.f32 %v1485, %v1321
  %v1487 = vadd.f32 %v1486, %v1322
  %v1488 = vadd.f32 %v1487, %v1323
  %v1489 = vadd.f32 %v1488, %v1324
  %v1490 = vadd.f32 %v1489, %v1325
  %v1491 = vrot.slane %v1490, 4
  %v1492 = vadd.f32 %v1490, %v1491
  %v1493 = vrot.slane %v1492, 2
  %v1494 = vadd.f32 %v1492, %v1493
  %v1495 = vrot.slane %v1494, 1
  %v1496 = vadd.f32 %v1494, %v1495
  %v1497 = vadd.f32 %v1326, %v1327
  %v1498 = vadd.f32 %v1497, %v1328
  %v1499 = vadd.f32 %v1498, %v1329
  %v1500 = vadd.f32 %v1499, %v1330
  %v1501 = vadd.f32 %v1500, %v1331
  %v1502 = vadd.f32 %v1501, %v1332
  %v1503 = vadd.f32 %v1502, %v1333
  %v1504 = vrot.slane %v1503, 4
  %v1505 = vadd.f32 %v1503, %v1504
  %v1506 = vrot.slane %v1505, 2
  %v1507 = vadd.f32 %v1505, %v1506
  %v1508 = vrot.slane %v1507, 1
  %v1509 = vadd.f32 %v1507, %v1508
  %v1510 = vadd.f32 %v1334, %v1335
  %v1511 = vadd.f32 %v1510, %v1336
  %v1512 = vadd.f32 %v1511, %v1337
  %v1513 = vadd.f32 %v1512, %v1338
  %v1514 = vadd.f32 %v1513, %v1339
  %v1515 = vadd.f32 %v1514, %v1340
  %v1516 = vadd.f32 %v1515, %v1341
  %v1517 = vrot.slane %v1516, 4
  %v1518 = vadd.f32 %v1516, %v1517
  %v1519 = vrot.slane %v1518, 2
  %v1520 = vadd.f32 %v1518, %v1519
  %v1521 = vrot.slane %v1520, 1
  %v1522 = vadd.f32 %v1520, %v1521
  %v1523 = vadd.f32 %v1342, %v1343
  %v1524 = vadd.f32 %v1523, %v1344
  %v1525 = vadd.f32 %v1524, %v1345
  %v1526 = vadd.f32 %v1525, %v1346
  %v1527 = vadd.f32 %v1526, %v1347
  %v1528 = vadd.f32 %v1527, %v1348
  %v1529 = vadd.f32 %v1528, %v1349
  %v1530 = vrot.slane %v1529, 4
  %v1531 = vadd.f32 %v1529, %v1530
  %v1532 = vrot.slane %v1531, 2
  %v1533 = vadd.f32 %v1531, %v1532
  %v1534 = vrot.slane %v1533, 1
  %v1535 = vadd.f32 %v1533, %v1534
  %v1536 = vadd.f32 %v1350, %v1351
  %v1537 = vadd.f32 %v1536, %v1352
  %v1538 = vadd.f32 %v1537, %v1353
  %v1539 = vadd.f32 %v1538, %v1354
  %v1540 = vadd.f32 %v1539, %v1355
  %v1541 = vadd.f32 %v1540, %v1356
  %v1542 = vadd.f32 %v1541, %v1357
  %v1543 = vrot.slane %v1542, 4
  %v1544 = vadd.f32 %v1542, %v1543
  %v1545 = vrot.slane %v1544, 2
  %v1546 = vadd.f32 %v1544, %v1545
  %v1547 = vrot.slane %v1546, 1
  %v1548 = vadd.f32 %v1546, %v1547
  %v1549 = vadd.f32 %v1358, %v1359
  %v1550 = vadd.f32 %v1549, %v1360
  %v1551 = vadd.f32 %v1550, %v1361
  %v1552 = vadd.f32 %v1551, %v1362
  %v1553 = vadd.f32 %v1552, %v1363
  %v1554 = vadd.f32 %v1553, %v1364
  %v1555 = vadd.f32 %v1554, %v1365
  %v1556 = vrot.slane %v1555, 4
  %v1557 = vadd.f32 %v1555, %v1556
  %v1558 = vrot.slane %v1557, 2
  %v1559 = vadd.f32 %v1557, %v1558
  %v1560 = vrot.slane %v1559, 1
  %v1561 = vadd.f32 %v1559, %v1560
  %v1562 = vadd.f32 %v1366, %v1367
  %v1563 = vadd.f32 %v1562, %v1368
  %v1564 = vadd.f32 %v1563, %v1369
  %v1565 = vadd.f32 %v1564, %v1370
  %v1566 = vadd.f32 %v1565, %v1371
  %v1567 = vadd.f32 %v1566, %v1372
  %v1568 = vadd.f32 %v1567, %v1373
  %v1569 = vrot.slane %v1568, 4
  %v1570 = vadd.f32 %v1568, %v1569
  %v1571 = vrot.slane %v1570, 2
  %v1572 = vadd.f32 %v1570, %v1571
  %v1573 = vrot.slane %v1572, 1
  %v1574 = vadd.f32 %v1572, %v1573
  %v1575 = vadd.f32 %v1374, %v1375
  %v1576 = vadd.f32 %v1575, %v1376
  %v1577 = vadd.f32 %v1576, %v1377
  %v1578 = vadd.f32 %v1577, %v1378
  %v1579 = vadd.f32 %v1578, %v1379
  %v1580 = vadd.f32 %v1579, %v1380
  %v1581 = vadd.f32 %v1580, %v1381
  %v1582 = vrot.slane %v1581, 4
  %v1583 = vadd.f32 %v1581, %v1582
  %v1584 = vrot.slane %v1583, 2
  %v1585 = vadd.f32 %v1583, %v1584
  %v1586 = vrot.slane %v1585, 1
  %v1587 = vadd.f32 %v1585, %v1586
  %v1588 = vadd.f32 %v1382, %v1383
  %v1589 = vadd.f32 %v1588, %v1384
  %v1590 = vadd.f32 %v1589, %v1385
  %v1591 = vadd.f32 %v1590, %v1386
  %v1592 = vadd.f32 %v1591, %v1387
  %v1593 = vadd.f32 %v1592, %v1388
  %v1594 = vadd.f32 %v1593, %v1389
  %v1595 = vrot.slane %v1594, 4
  %v1596 = vadd.f32 %v1594, %v1595
  %v1597 = vrot.slane %v1596, 2
  %v1598 = vadd.f32 %v1596, %v1597
  %v1599 = vrot.slane %v1598, 1
  %v1600 = vadd.f32 %v1598, %v1599
  %v1601 = vadd.f32 %v1390, %v1391
  %v1602 = vadd.f32 %v1601, %v1392
  %v1603 = vadd.f32 %v1602, %v1393
  %v1604 = vadd.f32 %v1603, %v1394
  %v1605 = vadd.f32 %v1604, %v1395
  %v1606 = vadd.f32 %v1605, %v1396
  %v1607 = vadd.f32 %v1606, %v1397
  %v1608 = vrot.slane %v1607, 4
  %v1609 = vadd.f32 %v1607, %v1608
  %v1610 = vrot.slane %v1609, 2
  %v1611 = vadd.f32 %v1609, %v1610
  %v1612 = vrot.slane %v1611, 1
  %v1613 = vadd.f32 %v1611, %v1612
  %vm1630 = vcmask 1041409
  %v1631 = vsel %vm1630, %v1431, %v1418
  %v1632 = vsel %vm1630, %v1457, %v1444
  %v1633 = vsel %vm1630, %v1483, %v1470
  %v1634 = vsel %vm1630, %v1509, %v1496
  %v1635 = vsel %vm1630, %v1535, %v1522
  %v1636 = vsel %vm1630, %v1561, %v1548
  %v1637 = vsel %vm1630, %v1587, %v1574
  %v1638 = vsel %vm1630, %v1613, %v1600
  %v1647 = vadd.f32 %v1398, %v1631
  %v1648 = vadd.f32 %v1399, %v1632
  %v1649 = vadd.f32 %v1400, %v1633
  %v1650 = vadd.f32 %v1401, %v1634
  %v1651 = vadd.f32 %v1402, %v1635
  %v1652 = vadd.f32 %v1403, %v1636
  %v1653 = vadd.f32 %v1404, %v1637
  %v1654 = vadd.f32 %v1405, %v1638
  %1655 = vst [vmem:[#allocation2] sm:$0x3] %v1647
  %1656 = vst [vmem:[#allocation2 + $0x2] sm:$0x3] %v1648
  %1657 = vst [vmem:[#allocation2 + $0x4] sm:$0x3] %v1649
  %1658 = vst [vmem:[#allocation2 + $0x6] sm:$0x3] %v1650
  %1659 = vst [vmem:[#allocation2 + $0x8] sm:$0x3] %v1651
  %1660 = vst [vmem:[#allocation2 + $0xa] sm:$0x3] %v1652
  %1661 = vst [vmem:[#allocation2 + $0xc] sm:$0x3] %v1653
  %1662 = vst [vmem:[#allocation2 + $0xe] sm:$0x3] %v1654
  // Predicated region
  $region18: #{i3d_lstm_forward.2} parent=0 // pred_check
    %p1663 = pneg %p15
  $region19: #{i3d_lstm_forward.2} parent=0 // pred_check_branch
    %1665 = sbr.rel (%p1663) target = $region21
  $region20: #{i3d_lstm_forward.2} parent=0 // pred_region
    %v1666 = vld [vmem:[#allocation2] sm:$0x3]
    %v1667 = vld [vmem:[#allocation2 + $0x2] sm:$0x3]
    %v1668 = vld [vmem:[#allocation2 + $0x4] sm:$0x3]
    %v1669 = vld [vmem:[#allocation2 + $0x6] sm:$0x3]
    %v1670 = vld [vmem:[#allocation2 + $0x8] sm:$0x3]
    %v1671 = vld [vmem:[#allocation2 + $0xa] sm:$0x3]
    %v1672 = vld [vmem:[#allocation2 + $0xc] sm:$0x3]
    %v1673 = vld [vmem:[#allocation2 + $0xe] sm:$0x3]
    %v1674 = vmul.f32 %v1666, 0.015625
    %v1675 = vmul.f32 %v1667, 0.015625
    %v1676 = vmul.f32 %v1668, 0.015625
    %v1677 = vmul.f32 %v1669, 0.015625
    %v1678 = vmul.f32 %v1670, 0.015625
    %v1679 = vmul.f32 %v1671, 0.015625
    %v1680 = vmul.f32 %v1672, 0.015625
    %v1681 = vmul.f32 %v1673, 0.015625
    %v1682 = vpack.c.bf16 %v1674, %v1674
    %v1683 = vpack.c.bf16 %v1675, %v1675
    %v1684 = vpack.c.bf16 %v1676, %v1676
    %v1685 = vpack.c.bf16 %v1677, %v1677
    %v1686 = vpack.c.bf16 %v1678, %v1678
    %v1687 = vpack.c.bf16 %v1679, %v1679
    %v1688 = vpack.c.bf16 %v1680, %v1680
    %v1689 = vpack.c.bf16 %v1681, %v1681
    %1690 = vst [vmem:[%s3] sm:$0x1] %v1682
    %1691 = vst [vmem:[%s3 + $0x1] sm:$0x1] %v1683
    %1692 = vst [vmem:[%s3 + $0x2] sm:$0x1] %v1684
    %1693 = vst [vmem:[%s3 + $0x3] sm:$0x1] %v1685
    %1694 = vst [vmem:[%s3 + $0x4] sm:$0x1] %v1686
    %1695 = vst [vmem:[%s3 + $0x5] sm:$0x1] %v1687
    %1696 = vst [vmem:[%s3 + $0x6] sm:$0x1] %v1688
    %1697 = vst [vmem:[%s3 + $0x7] sm:$0x1] %v1689
  $region21: #{i3d_lstm_forward.2} parent=0 // pred_fallthru
    _
  // Predicated region
  $region22: #{i3d_lstm_forward.2} parent=0 // pred_check
    _
  $region23: #{i3d_lstm_forward.2} parent=0 // pred_check_branch
    %1699 = sbr.rel (0) target = $region25
  $region24: #{i3d_lstm_forward.2} parent=0 // pred_region
    _
  $region25: #{i3d_lstm_forward.2} parent=0 // pred_fallthru
    _
  // Predicated region
  $region26: #{i3d_lstm_forward.2} parent=0 // pred_check
    _
  $region27: #{i3d_lstm_forward.2} parent=0 // pred_check_branch
    %1701 = sbr.rel (0) target = $region29
  $region28: #{i3d_lstm_forward.2} parent=0 // pred_region
    _
  $region29: #{i3d_lstm_forward.2} parent=0 // pred_fallthru
    _

// kernel: i3d_lstm_forward.3
$region0: #{i3d_lstm_forward.3}
  #allocation0 [shape = 'u32[]', space=smem, size = 0x4, offset = 0x4, fixed_abs, tag = 'smem constant byte address 0x4 - core index']
  #allocation1 [shape = 'u32[144,128]{1,0:T(1,128)}', space=vmem, size = 0x12000, scoped, tag = 'internal scratch']
  #allocation2 [shape = 'f32[2,128]{1,0:T(2,128)}', space=vmem, size = 0x400, scoped, tag = 'scratch operand']
  #allocation3 [shape = 'f32[2,128]{1,0:T(2,128)}', space=vmem, size = 0x400, scoped, tag = 'scratch operand']
  #allocation4 [shape = 'f32[8,2,512]{2,1,0:T(2,128)}', space=vmem, size = 0x8000, scoped, tag = 'scratch operand']
  #allocation5 [shape = 'f32[8,2,128]{2,1,0:T(2,128)}', space=vmem, size = 0x2000, scoped, tag = 'scratch operand']
  %s0 = inlined_call_operand.vmem [shape: bf16[8,2,128], index: 0, kind: input, shape index: {}]
  %s1 = inlined_call_operand.vmem [shape: bf16[128,512], index: 1, kind: input, shape index: {}]
  %s2 = inlined_call_operand.vmem [shape: f32[1,512], index: 2, kind: input, shape index: {}]
  %s3 = inlined_call_operand.vmem [shape: bf16[128,512], index: 3, kind: input, shape index: {}]
  %s4 = inlined_call_operand.vmem [shape: bf16[128,128], index: 4, kind: input, shape index: {}]
  %s5 = inlined_call_operand.vmem [shape: f32[1,128], index: 5, kind: input, shape index: {}]
  %s6 = inlined_call_operand.vmem [shape: f32[8,2,128], index: 6, kind: output, shape index: {}]
  %s7 = sld [smem:[#allocation0]]
  $region38: #{i3d_lstm_forward.3} parent=0
    _
  %s9 = ssub.s32 1, %s7
  %s10 = scalar_select 0, %s9, %s7
  // Predicated region
  $region2: #{i3d_lstm_forward.3} parent=0 // pred_check
    _
  $region3: #{i3d_lstm_forward.3} parent=0 // pred_check_branch
    %12 = sbr.rel (0) target = $region5
  $region4: #{i3d_lstm_forward.3} parent=0 // pred_region
    _
  $region5: #{i3d_lstm_forward.3} parent=0 // pred_fallthru
    _
  // Predicated region
  $region6: #{i3d_lstm_forward.3} parent=0 // pred_check
    _
  $region7: #{i3d_lstm_forward.3} parent=0 // pred_check_branch
    %14 = sbr.rel (0) target = $region9
  $region8: #{i3d_lstm_forward.3} parent=0 // pred_region
    _
  $region9: #{i3d_lstm_forward.3} parent=0 // pred_fallthru
    _
  // Predicated region
  $region10: #{i3d_lstm_forward.3} parent=0 // pred_check
    _
  $region11: #{i3d_lstm_forward.3} parent=0 // pred_check_branch
    %16 = sbr.rel (0) target = $region13
  $region12: #{i3d_lstm_forward.3} parent=0 // pred_region
    _
  $region13: #{i3d_lstm_forward.3} parent=0 // pred_fallthru
    _
  // Predicated region
  $region14: #{i3d_lstm_forward.3} parent=0 // pred_check
    _
  $region15: #{i3d_lstm_forward.3} parent=0 // pred_check_branch
    %18 = sbr.rel (0) target = $region17
  $region16: #{i3d_lstm_forward.3} parent=0 // pred_region
    _
  $region17: #{i3d_lstm_forward.3} parent=0 // pred_fallthru
    _
  // Predicated region
  $region18: #{i3d_lstm_forward.3} parent=0 // pred_check
    _
  $region19: #{i3d_lstm_forward.3} parent=0 // pred_check_branch
    %20 = sbr.rel (0) target = $region21
  $region20: #{i3d_lstm_forward.3} parent=0 // pred_region
    _
  $region21: #{i3d_lstm_forward.3} parent=0 // pred_fallthru
    _
  // Predicated region
  $region22: #{i3d_lstm_forward.3} parent=0 // pred_check
    _
  $region23: #{i3d_lstm_forward.3} parent=0 // pred_check_branch
    %22 = sbr.rel (0) target = $region25
  $region24: #{i3d_lstm_forward.3} parent=0 // pred_region
    _
  $region25: #{i3d_lstm_forward.3} parent=0 // pred_fallthru
    _
  %p24 = scmp.eq.s32.totalorder 0, 0
  // Predicated region
  $region26: #{i3d_lstm_forward.3} parent=0 // pred_check
    %p25 = pneg %p24
  $region27: #{i3d_lstm_forward.3} parent=0 // pred_check_branch
    %27 = sbr.rel (%p25) target = $region29
  $region28: #{i3d_lstm_forward.3} parent=0 // pred_region
    %28 = vst [vmem:[#allocation2] sm:$0x3] 0.0
    %29 = vst [vmem:[#allocation3] sm:$0x3] 0.0
  $region29: #{i3d_lstm_forward.3} parent=0 // pred_fallthru
    _
  %v30 = vld [vmem:[%s0] sm:$0x1]
  %v31 = vld [vmem:[%s0 + $0x1] sm:$0x1]
  %v32 = vld [vmem:[%s0 + $0x2] sm:$0x1]
  %v33 = vld [vmem:[%s0 + $0x3] sm:$0x1]
  %v34 = vld [vmem:[%s0 + $0x4] sm:$0x1]
  %v35 = vld [vmem:[%s0 + $0x5] sm:$0x1]
  %v36 = vld [vmem:[%s0 + $0x6] sm:$0x1]
  %v37 = vld [vmem:[%s0 + $0x7] sm:$0x1]
  %v38 = vld [vmem:[%s1] sm:$0xff]
  %v39 = vld [vmem:[%s1 + $0x8] sm:$0xff]
  %v40 = vld [vmem:[%s1 + $0x10] sm:$0xff]
  %v41 = vld [vmem:[%s1 + $0x18] sm:$0xff]
  %v42 = vld [vmem:[%s1 + $0x20] sm:$0xff]
  %v43 = vld [vmem:[%s1 + $0x28] sm:$0xff]
  %v44 = vld [vmem:[%s1 + $0x30] sm:$0xff]
  %v45 = vld [vmem:[%s1 + $0x38] sm:$0xff]
  %v46 = vld [vmem:[%s1 + $0x40] sm:$0xff]
  %v47 = vld [vmem:[%s1 + $0x48] sm:$0xff]
  %v48 = vld [vmem:[%s1 + $0x50] sm:$0xff]
  %v49 = vld [vmem:[%s1 + $0x58] sm:$0xff]
  %v50 = vld [vmem:[%s1 + $0x60] sm:$0xff]
  %v51 = vld [vmem:[%s1 + $0x68] sm:$0xff]
  %v52 = vld [vmem:[%s1 + $0x70] sm:$0xff]
  %v53 = vld [vmem:[%s1 + $0x78] sm:$0xff]
  %v54 = vld [vmem:[%s1 + $0x80] sm:$0xff]
  %v55 = vld [vmem:[%s1 + $0x88] sm:$0xff]
  %v56 = vld [vmem:[%s1 + $0x90] sm:$0xff]
  %v57 = vld [vmem:[%s1 + $0x98] sm:$0xff]
  %v58 = vld [vmem:[%s1 + $0xa0] sm:$0xff]
  %v59 = vld [vmem:[%s1 + $0xa8] sm:$0xff]
  %v60 = vld [vmem:[%s1 + $0xb0] sm:$0xff]
  %v61 = vld [vmem:[%s1 + $0xb8] sm:$0xff]
  %v62 = vld [vmem:[%s1 + $0xc0] sm:$0xff]
  %v63 = vld [vmem:[%s1 + $0xc8] sm:$0xff]
  %v64 = vld [vmem:[%s1 + $0xd0] sm:$0xff]
  %v65 = vld [vmem:[%s1 + $0xd8] sm:$0xff]
  %v66 = vld [vmem:[%s1 + $0xe0] sm:$0xff]
  %v67 = vld [vmem:[%s1 + $0xe8] sm:$0xff]
  %v68 = vld [vmem:[%s1 + $0xf0] sm:$0xff]
  %v69 = vld [vmem:[%s1 + $0xf8] sm:$0xff]
  %v70 = vld [vmem:[%s2] sm:$0xf]
  %v72 = vlaneseq
  %v73 = vshrl.u32 %v72, 7
  %v74 = vsub.s32 0, %v73
  %v75 = vrot.slane %v70, %v74
  %v76 = vlaneseq
  %v77 = vshrl.u32 %v76, 7
  %v78 = vsub.s32 1, %v77
  %v79 = vrot.slane %v70, %v78
  %v80 = vlaneseq
  %v81 = vshrl.u32 %v80, 7
  %v82 = vsub.s32 2, %v81
  %v83 = vrot.slane %v70, %v82
  %v84 = vlaneseq
  %v85 = vshrl.u32 %v84, 7
  %v86 = vsub.s32 3, %v85
  %v87 = vrot.slane %v70, %v86
  %v100 = vcombine.low %v30, %v31
  %v101 = vcombine.low %v32, %v33
  %v102 = vcombine.low %v34, %v35
  %v103 = vcombine.low %v36, %v37
  %v105 = vunpack.c.l.s4 1966171168
  %v106 = vunpack.c.0.s8 %v105
  %v107 = vlaneseq
  %v108 = vshrl.u32 %v107, 7
  %v109 = vsub.s32 %v106, %v108
  %v110 = vrot.slane %v100, %v109
  %v112 = vunpack.c.l.s4 1966171168
  %v113 = vunpack.c.0.s8 %v112
  %v114 = vlaneseq
  %v115 = vshrl.u32 %v114, 7
  %v116 = vsub.s32 %v113, %v115
  %v117 = vrot.slane %v101, %v116
  %v119 = vunpack.c.l.s4 1966171168
  %v120 = vunpack.c.0.s8 %v119
  %v121 = vlaneseq
  %v122 = vshrl.u32 %v121, 7
  %v123 = vsub.s32 %v120, %v122
  %v124 = vrot.slane %v102, %v123
  %v126 = vunpack.c.l.s4 1966171168
  %v127 = vunpack.c.0.s8 %v126
  %v128 = vlaneseq
  %v129 = vshrl.u32 %v128, 7
  %v130 = vsub.s32 %v127, %v129
  %v131 = vrot.slane %v103, %v130
  %v132 = vcombine.low %v110, %v117
  %v133 = vcombine.low %v124, %v131
  %v135 = vunpack.c.l.s4 1966171168
  %v136 = vunpack.c.0.s8 %v135
  %v137 = vlaneseq
  %v138 = vshrl.u32 %v137, 7
  %v139 = vsub.s32 %v136, %v138
  %v140 = vrot.slane %v132, %v139
  %v142 = vunpack.c.l.s4 1966171168
  %v143 = vunpack.c.0.s8 %v142
  %v144 = vlaneseq
  %v145 = vshrl.u32 %v144, 7
  %v146 = vsub.s32 %v143, %v145
  %v147 = vrot.slane %v133, %v146
  %v148 = vcombine.low %v140, %v147
  %v182 = vunpack.c.l.b16 %v38
  %v183 = vunpack.c.h.b16 %v38
  %v184 = vunpack.c.l.b16 %v39
  %v185 = vunpack.c.h.b16 %v39
  %v186 = vunpack.c.l.b16 %v40
  %v187 = vunpack.c.h.b16 %v40
  %v188 = vunpack.c.l.b16 %v41
  %v189 = vunpack.c.h.b16 %v41
  %v190 = vunpack.c.l.b16 %v42
  %v191 = vunpack.c.h.b16 %v42
  %v192 = vunpack.c.l.b16 %v43
  %v193 = vunpack.c.h.b16 %v43
  %v194 = vunpack.c.l.b16 %v44
  %v195 = vunpack.c.h.b16 %v44
  %v196 = vunpack.c.l.b16 %v45
  %v197 = vunpack.c.h.b16 %v45
  %v198 = vunpack.c.l.b16 %v46
  %v199 = vunpack.c.h.b16 %v46
  %v200 = vunpack.c.l.b16 %v47
  %v201 = vunpack.c.h.b16 %v47
  %v202 = vunpack.c.l.b16 %v48
  %v203 = vunpack.c.h.b16 %v48
  %v204 = vunpack.c.l.b16 %v49
  %v205 = vunpack.c.h.b16 %v49
  %v206 = vunpack.c.l.b16 %v50
  %v207 = vunpack.c.h.b16 %v50
  %v208 = vunpack.c.l.b16 %v51
  %v209 = vunpack.c.h.b16 %v51
  %v210 = vunpack.c.l.b16 %v52
  %v211 = vunpack.c.h.b16 %v52
  %v212 = vunpack.c.l.b16 %v53
  %v213 = vunpack.c.h.b16 %v53
  %v214 = vunpack.c.l.b16 %v54
  %v215 = vunpack.c.h.b16 %v54
  %v216 = vunpack.c.l.b16 %v55
  %v217 = vunpack.c.h.b16 %v55
  %v218 = vunpack.c.l.b16 %v56
  %v219 = vunpack.c.h.b16 %v56
  %v220 = vunpack.c.l.b16 %v57
  %v221 = vunpack.c.h.b16 %v57
  %v222 = vunpack.c.l.b16 %v58
  %v223 = vunpack.c.h.b16 %v58
  %v224 = vunpack.c.l.b16 %v59
  %v225 = vunpack.c.h.b16 %v59
  %v226 = vunpack.c.l.b16 %v60
  %v227 = vunpack.c.h.b16 %v60
  %v228 = vunpack.c.l.b16 %v61
  %v229 = vunpack.c.h.b16 %v61
  %v230 = vunpack.c.l.b16 %v62
  %v231 = vunpack.c.h.b16 %v62
  %v232 = vunpack.c.l.b16 %v63
  %v233 = vunpack.c.h.b16 %v63
  %v234 = vunpack.c.l.b16 %v64
  %v235 = vunpack.c.h.b16 %v64
  %v236 = vunpack.c.l.b16 %v65
  %v237 = vunpack.c.h.b16 %v65
  %v238 = vunpack.c.l.b16 %v66
  %v239 = vunpack.c.h.b16 %v66
  %v240 = vunpack.c.l.b16 %v67
  %v241 = vunpack.c.h.b16 %v67
  %v242 = vunpack.c.l.b16 %v68
  %v243 = vunpack.c.h.b16 %v68
  %v244 = vunpack.c.l.b16 %v69
  %v245 = vunpack.c.h.b16 %v69
  %v246 = vpack.c.b16 %v186, %v182
  %v247 = vpack.c.b16 %v187, %v183
  %v248 = vpack.c.b16 %v188, %v184
  %v249 = vpack.c.b16 %v189, %v185
  %v250 = vpack.c.b16 %v194, %v190
  %v251 = vpack.c.b16 %v195, %v191
  %v252 = vpack.c.b16 %v196, %v192
  %v253 = vpack.c.b16 %v197, %v193
  %v254 = vpack.c.b16 %v202, %v198
  %v255 = vpack.c.b16 %v203, %v199
  %v256 = vpack.c.b16 %v204, %v200
  %v257 = vpack.c.b16 %v205, %v201
  %v258 = vpack.c.b16 %v210, %v206
  %v259 = vpack.c.b16 %v211, %v207
  %v260 = vpack.c.b16 %v212, %v208
  %v261 = vpack.c.b16 %v213, %v209
  %v262 = vpack.c.b16 %v218, %v214
  %v263 = vpack.c.b16 %v219, %v215
  %v264 = vpack.c.b16 %v220, %v216
  %v265 = vpack.c.b16 %v221, %v217
  %v266 = vpack.c.b16 %v226, %v222
  %v267 = vpack.c.b16 %v227, %v223
  %v268 = vpack.c.b16 %v228, %v224
  %v269 = vpack.c.b16 %v229, %v225
  %v270 = vpack.c.b16 %v234, %v230
  %v271 = vpack.c.b16 %v235, %v231
  %v272 = vpack.c.b16 %v236, %v232
  %v273 = vpack.c.b16 %v237, %v233
  %v274 = vpack.c.b16 %v242, %v238
  %v275 = vpack.c.b16 %v243, %v239
  %v276 = vpack.c.b16 %v244, %v240
  %v277 = vpack.c.b16 %v245, %v241
  %310 = vmatprep.subr.bf16.mxu0 %v247
  %311 = vmatpush1.bf16.msra.mxu0 %v246
  %312 = vmatprep.subr.bf16.mxu0 %v251
  %313 = vmatpush1.bf16.msra.mxu0 %v250
  %314 = vmatprep.subr.bf16.mxu0 %v255
  %315 = vmatpush1.bf16.msra.mxu0 %v254
  %316 = vmatprep.subr.bf16.mxu0 %v259
  %317 = vmatpush1.bf16.msra.mxu0 %v258
  %318 = vmatprep.subr.bf16.mxu0 %v263
  %319 = vmatpush1.bf16.msra.mxu0 %v262
  %320 = vmatprep.subr.bf16.mxu0 %v267
  %321 = vmatpush1.bf16.msra.mxu0 %v266
  %322 = vmatprep.subr.bf16.mxu0 %v271
  %323 = vmatpush1.bf16.msra.mxu0 %v270
  %324 = vmatprep.subr.bf16.mxu0 %v275
  %325 = vmatpush1.bf16.msra.mxu0 %v274
  %326 = vmatprep.subr.bf16.mxu0 0
  %327 = vmatpush1.bf16.msra.mxu0 0
  %328 = vmatprep.subr.bf16.mxu0 0
  %329 = vmatpush1.bf16.msra.mxu0 0
  %330 = vmatprep.subr.bf16.mxu0 0
  %331 = vmatpush1.bf16.msra.mxu0 0
  %332 = vmatprep.subr.bf16.mxu0 0
  %333 = vmatpush1.bf16.msra.mxu0 0
  %334 = vmatprep.subr.bf16.mxu0 0
  %335 = vmatpush1.bf16.msra.mxu0 0
  %336 = vmatprep.subr.bf16.mxu0 0
  %337 = vmatpush1.bf16.msra.mxu0 0
  %338 = vmatprep.subr.bf16.mxu0 0
  %339 = vmatpush1.bf16.msra.mxu0 0
  %340 = vmatprep.subr.bf16.mxu0 0
  %341 = vmatpush1.bf16.msra.mxu0 0
  %342 = vmatprep.mubr.bf16.mxu0 0
  %343 = vmatmul.mubr.bf16.gmra.mrb[0].mxu0 %v148
  %v344 = vpop.f32.mrb[0].mxu0
  %v345 = vadd.f32 %v75, %v344
  %v346 = vpop.f32.mrb[0].mxu0
  %v347 = vadd.f32 %v79, %v346
  %v348 = vpop.f32.mrb[0].mxu0
  %v349 = vadd.f32 %v75, %v348
  %v350 = vpop.f32.mrb[0].mxu0
  %v351 = vadd.f32 %v79, %v350
  %352 = vdwg.mxu0
  %353 = vmatprep.subr.bf16.mxu0 %v249
  %354 = vmatpush1.bf16.msra.mxu0 %v248
  %355 = vmatprep.subr.bf16.mxu0 %v253
  %356 = vmatpush1.bf16.msra.mxu0 %v252
  %357 = vmatprep.subr.bf16.mxu0 %v257
  %358 = vmatpush1.bf16.msra.mxu0 %v256
  %359 = vmatprep.subr.bf16.mxu0 %v261
  %360 = vmatpush1.bf16.msra.mxu0 %v260
  %361 = vmatprep.subr.bf16.mxu0 %v265
  %362 = vmatpush1.bf16.msra.mxu0 %v264
  %363 = vmatprep.subr.bf16.mxu0 %v269
  %364 = vmatpush1.bf16.msra.mxu0 %v268
  %365 = vmatprep.subr.bf16.mxu0 %v273
  %366 = vmatpush1.bf16.msra.mxu0 %v272
  %367 = vmatprep.subr.bf16.mxu0 %v277
  %368 = vmatpush1.bf16.msra.mxu0 %v276
  %369 = vmatprep.subr.bf16.mxu0 0
  %370 = vmatpush1.bf16.msra.mxu0 0
  %371 = vmatprep.subr.bf16.mxu0 0
  %372 = vmatpush1.bf16.msra.mxu0 0
  %373 = vmatprep.subr.bf16.mxu0 0
  %374 = vmatpush1.bf16.msra.mxu0 0
  %375 = vmatprep.subr.bf16.mxu0 0
  %376 = vmatpush1.bf16.msra.mxu0 0
  %377 = vmatprep.subr.bf16.mxu0 0
  %378 = vmatpush1.bf16.msra.mxu0 0
  %379 = vmatprep.subr.bf16.mxu0 0
  %380 = vmatpush1.bf16.msra.mxu0 0
  %381 = vmatprep.subr.bf16.mxu0 0
  %382 = vmatpush1.bf16.msra.mxu0 0
  %383 = vmatprep.subr.bf16.mxu0 0
  %384 = vmatpush1.bf16.msra.mxu0 0
  %385 = vmatprep.mubr.bf16.mxu0 0
  %386 = vmatmul.mubr.bf16.gmra.mrb[0].mxu0 %v148
  %v387 = vpop.f32.mrb[0].mxu0
  %v388 = vadd.f32 %v83, %v387
  %v389 = vpop.f32.mrb[0].mxu0
  %v390 = vadd.f32 %v87, %v389
  %v391 = vpop.f32.mrb[0].mxu0
  %v392 = vadd.f32 %v83, %v391
  %v393 = vpop.f32.mrb[0].mxu0
  %v394 = vadd.f32 %v87, %v393
  %395 = vdwg.mxu0
  %v404 = vcombine.low %v345, %v347
  %v405 = vcombine.high %v345, %v347
  %v406 = vcombine.low %v388, %v390
  %v407 = vcombine.high %v388, %v390
  %v409 = vunpack.c.l.s4 1983009808
  %v410 = vunpack.c.0.s8 %v409
  %v411 = vlaneseq
  %v412 = vshrl.u32 %v411, 7
  %v413 = vsub.s32 %v410, %v412
  %v414 = vrot.slane %v404, %v413
  %v416 = vunpack.c.l.s4 1983009808
  %v417 = vunpack.c.0.s8 %v416
  %v418 = vlaneseq
  %v419 = vshrl.u32 %v418, 7
  %v420 = vsub.s32 %v417, %v419
  %v421 = vrot.slane %v405, %v420
  %v423 = vunpack.c.l.s4 1983009808
  %v424 = vunpack.c.0.s8 %v423
  %v425 = vlaneseq
  %v426 = vshrl.u32 %v425, 7
  %v427 = vsub.s32 %v424, %v426
  %v428 = vrot.slane %v406, %v427
  %v430 = vunpack.c.l.s4 1983009808
  %v431 = vunpack.c.0.s8 %v430
  %v432 = vlaneseq
  %v433 = vshrl.u32 %v432, 7
  %v434 = vsub.s32 %v431, %v433
  %v435 = vrot.slane %v407, %v434
  %v436 = vcombine.low %v414, %v428
  %v437 = vcombine.high %v414, %v428
  %v438 = vcombine.low %v421, %v435
  %v439 = vcombine.high %v421, %v435
  %v440 = vcombine.low %v349, %v351
  %v441 = vcombine.high %v349, %v351
  %v442 = vcombine.low %v392, %v394
  %v443 = vcombine.high %v392, %v394
  %v445 = vunpack.c.l.s4 1983009808
  %v446 = vunpack.c.0.s8 %v445
  %v447 = vlaneseq
  %v448 = vshrl.u32 %v447, 7
  %v449 = vsub.s32 %v446, %v448
  %v450 = vrot.slane %v440, %v449
  %v452 = vunpack.c.l.s4 1983009808
  %v453 = vunpack.c.0.s8 %v452
  %v454 = vlaneseq
  %v455 = vshrl.u32 %v454, 7
  %v456 = vsub.s32 %v453, %v455
  %v457 = vrot.slane %v441, %v456
  %v459 = vunpack.c.l.s4 1983009808
  %v460 = vunpack.c.0.s8 %v459
  %v461 = vlaneseq
  %v462 = vshrl.u32 %v461, 7
  %v463 = vsub.s32 %v460, %v462
  %v464 = vrot.slane %v442, %v463
  %v466 = vunpack.c.l.s4 1983009808
  %v467 = vunpack.c.0.s8 %v466
  %v468 = vlaneseq
  %v469 = vshrl.u32 %v468, 7
  %v470 = vsub.s32 %v467, %v469
  %v471 = vrot.slane %v443, %v470
  %v472 = vcombine.low %v450, %v464
  %v473 = vcombine.high %v450, %v464
  %v474 = vcombine.low %v457, %v471
  %v475 = vcombine.high %v457, %v471
  %484 = vst [vmem:[#allocation4] sm:$0xff] %v436
  %485 = vst [vmem:[#allocation4 + $0x8] sm:$0xff] %v437
  %486 = vst [vmem:[#allocation4 + $0x10] sm:$0xff] %v438
  %487 = vst [vmem:[#allocation4 + $0x18] sm:$0xff] %v439
  %488 = vst [vmem:[#allocation4 + $0x20] sm:$0xff] %v472
  %489 = vst [vmem:[#allocation4 + $0x28] sm:$0xff] %v473
  %490 = vst [vmem:[#allocation4 + $0x30] sm:$0xff] %v474
  %491 = vst [vmem:[#allocation4 + $0x38] sm:$0xff] %v475
  %v492 = vld [vmem:[%s3] sm:$0xff]
  %v493 = vld [vmem:[%s3 + $0x8] sm:$0xff]
  %v494 = vld [vmem:[%s3 + $0x10] sm:$0xff]
  %v495 = vld [vmem:[%s3 + $0x18] sm:$0xff]
  %v496 = vld [vmem:[%s3 + $0x20] sm:$0xff]
  %v497 = vld [vmem:[%s3 + $0x28] sm:$0xff]
  %v498 = vld [vmem:[%s3 + $0x30] sm:$0xff]
  %v499 = vld [vmem:[%s3 + $0x38] sm:$0xff]
  %v500 = vld [vmem:[%s3 + $0x40] sm:$0xff]
  %v501 = vld [vmem:[%s3 + $0x48] sm:$0xff]
  %v502 = vld [vmem:[%s3 + $0x50] sm:$0xff]
  %v503 = vld [vmem:[%s3 + $0x58] sm:$0xff]
  %v504 = vld [vmem:[%s3 + $0x60] sm:$0xff]
  %v505 = vld [vmem:[%s3 + $0x68] sm:$0xff]
  %v506 = vld [vmem:[%s3 + $0x70] sm:$0xff]
  %v507 = vld [vmem:[%s3 + $0x78] sm:$0xff]
  %v508 = vld [vmem:[%s3 + $0x80] sm:$0xff]
  %v509 = vld [vmem:[%s3 + $0x88] sm:$0xff]
  %v510 = vld [vmem:[%s3 + $0x90] sm:$0xff]
  %v511 = vld [vmem:[%s3 + $0x98] sm:$0xff]
  %v512 = vld [vmem:[%s3 + $0xa0] sm:$0xff]
  %v513 = vld [vmem:[%s3 + $0xa8] sm:$0xff]
  %v514 = vld [vmem:[%s3 + $0xb0] sm:$0xff]
  %v515 = vld [vmem:[%s3 + $0xb8] sm:$0xff]
  %v516 = vld [vmem:[%s3 + $0xc0] sm:$0xff]
  %v517 = vld [vmem:[%s3 + $0xc8] sm:$0xff]
  %v518 = vld [vmem:[%s3 + $0xd0] sm:$0xff]
  %v519 = vld [vmem:[%s3 + $0xd8] sm:$0xff]
  %v520 = vld [vmem:[%s3 + $0xe0] sm:$0xff]
  %v521 = vld [vmem:[%s3 + $0xe8] sm:$0xff]
  %v522 = vld [vmem:[%s3 + $0xf0] sm:$0xff]
  %v523 = vld [vmem:[%s3 + $0xf8] sm:$0xff]
  %v524 = vld [vmem:[#allocation2] sm:$0x3]
  %v525 = vld [vmem:[#allocation3] sm:$0x3]
  %v526 = vld [vmem:[#allocation4] sm:$0xff]
  %v527 = vpack.c.bf16 %v524, %v524
  %v560 = vunpack.c.l.b16 %v492
  %v561 = vunpack.c.h.b16 %v492
  %v562 = vunpack.c.l.b16 %v493
  %v563 = vunpack.c.h.b16 %v493
  %v564 = vunpack.c.l.b16 %v494
  %v565 = vunpack.c.h.b16 %v494
  %v566 = vunpack.c.l.b16 %v495
  %v567 = vunpack.c.h.b16 %v495
  %v568 = vunpack.c.l.b16 %v496
  %v569 = vunpack.c.h.b16 %v496
  %v570 = vunpack.c.l.b16 %v497
  %v571 = vunpack.c.h.b16 %v497
  %v572 = vunpack.c.l.b16 %v498
  %v573 = vunpack.c.h.b16 %v498
  %v574 = vunpack.c.l.b16 %v499
  %v575 = vunpack.c.h.b16 %v499
  %v576 = vunpack.c.l.b16 %v500
  %v577 = vunpack.c.h.b16 %v500
  %v578 = vunpack.c.l.b16 %v501
  %v579 = vunpack.c.h.b16 %v501
  %v580 = vunpack.c.l.b16 %v502
  %v581 = vunpack.c.h.b16 %v502
  %v582 = vunpack.c.l.b16 %v503
  %v583 = vunpack.c.h.b16 %v503
  %v584 = vunpack.c.l.b16 %v504
  %v585 = vunpack.c.h.b16 %v504
  %v586 = vunpack.c.l.b16 %v505
  %v587 = vunpack.c.h.b16 %v505
  %v588 = vunpack.c.l.b16 %v506
  %v589 = vunpack.c.h.b16 %v506
  %v590 = vunpack.c.l.b16 %v507
  %v591 = vunpack.c.h.b16 %v507
  %v592 = vunpack.c.l.b16 %v508
  %v593 = vunpack.c.h.b16 %v508
  %v594 = vunpack.c.l.b16 %v509
  %v595 = vunpack.c.h.b16 %v509
  %v596 = vunpack.c.l.b16 %v510
  %v597 = vunpack.c.h.b16 %v510
  %v598 = vunpack.c.l.b16 %v511
  %v599 = vunpack.c.h.b16 %v511
  %v600 = vunpack.c.l.b16 %v512
  %v601 = vunpack.c.h.b16 %v512
  %v602 = vunpack.c.l.b16 %v513
  %v603 = vunpack.c.h.b16 %v513
  %v604 = vunpack.c.l.b16 %v514
  %v605 = vunpack.c.h.b16 %v514
  %v606 = vunpack.c.l.b16 %v515
  %v607 = vunpack.c.h.b16 %v515
  %v608 = vunpack.c.l.b16 %v516
  %v609 = vunpack.c.h.b16 %v516
  %v610 = vunpack.c.l.b16 %v517
  %v611 = vunpack.c.h.b16 %v517
  %v612 = vunpack.c.l.b16 %v518
  %v613 = vunpack.c.h.b16 %v518
  %v614 = vunpack.c.l.b16 %v519
  %v615 = vunpack.c.h.b16 %v519
  %v616 = vunpack.c.l.b16 %v520
  %v617 = vunpack.c.h.b16 %v520
  %v618 = vunpack.c.l.b16 %v521
  %v619 = vunpack.c.h.b16 %v521
  %v620 = vunpack.c.l.b16 %v522
  %v621 = vunpack.c.h.b16 %v522
  %v622 = vunpack.c.l.b16 %v523
  %v623 = vunpack.c.h.b16 %v523
  %v624 = vpack.c.b16 %v564, %v560
  %v625 = vpack.c.b16 %v565, %v561
  %v626 = vpack.c.b16 %v566, %v562
  %v627 = vpack.c.b16 %v567, %v563
  %v628 = vpack.c.b16 %v572, %v568
  %v629 = vpack.c.b16 %v573, %v569
  %v630 = vpack.c.b16 %v574, %v570
  %v631 = vpack.c.b16 %v575, %v571
  %v632 = vpack.c.b16 %v580, %v576
  %v633 = vpack.c.b16 %v581, %v577
  %v634 = vpack.c.b16 %v582, %v578
  %v635 = vpack.c.b16 %v583, %v579
  %v636 = vpack.c.b16 %v588, %v584
  %v637 = vpack.c.b16 %v589, %v585
  %v638 = vpack.c.b16 %v590, %v586
  %v639 = vpack.c.b16 %v591, %v587
  %v640 = vpack.c.b16 %v596, %v592
  %v641 = vpack.c.b16 %v597, %v593
  %v642 = vpack.c.b16 %v598, %v594
  %v643 = vpack.c.b16 %v599, %v595
  %v644 = vpack.c.b16 %v604, %v600
  %v645 = vpack.c.b16 %v605, %v601
  %v646 = vpack.c.b16 %v606, %v602
  %v647 = vpack.c.b16 %v607, %v603
  %v648 = vpack.c.b16 %v612, %v608
  %v649 = vpack.c.b16 %v613, %v609
  %v650 = vpack.c.b16 %v614, %v610
  %v651 = vpack.c.b16 %v615, %v611
  %v652 = vpack.c.b16 %v620, %v616
  %v653 = vpack.c.b16 %v621, %v617
  %v654 = vpack.c.b16 %v622, %v618
  %v655 = vpack.c.b16 %v623, %v619
  %688 = vmatprep.subr.bf16.mxu0 %v625
  %689 = vmatpush1.bf16.msra.mxu0 %v624
  %690 = vmatprep.subr.bf16.mxu0 %v629
  %691 = vmatpush1.bf16.msra.mxu0 %v628
  %692 = vmatprep.subr.bf16.mxu0 %v633
  %693 = vmatpush1.bf16.msra.mxu0 %v632
  %694 = vmatprep.subr.bf16.mxu0 %v637
  %695 = vmatpush1.bf16.msra.mxu0 %v636
  %696 = vmatprep.subr.bf16.mxu0 %v641
  %697 = vmatpush1.bf16.msra.mxu0 %v640
  %698 = vmatprep.subr.bf16.mxu0 %v645
  %699 = vmatpush1.bf16.msra.mxu0 %v644
  %700 = vmatprep.subr.bf16.mxu0 %v649
  %701 = vmatpush1.bf16.msra.mxu0 %v648
  %702 = vmatprep.subr.bf16.mxu0 %v653
  %703 = vmatpush1.bf16.msra.mxu0 %v652
  %704 = vmatprep.subr.bf16.mxu0 0
  %705 = vmatpush1.bf16.msra.mxu0 0
  %706 = vmatprep.subr.bf16.mxu0 0
  %707 = vmatpush1.bf16.msra.mxu0 0
  %708 = vmatprep.subr.bf16.mxu0 0
  %709 = vmatpush1.bf16.msra.mxu0 0
  %710 = vmatprep.subr.bf16.mxu0 0
  %711 = vmatpush1.bf16.msra.mxu0 0
  %712 = vmatprep.subr.bf16.mxu0 0
  %713 = vmatpush1.bf16.msra.mxu0 0
  %714 = vmatprep.subr.bf16.mxu0 0
  %715 = vmatpush1.bf16.msra.mxu0 0
  %716 = vmatprep.subr.bf16.mxu0 0
  %717 = vmatpush1.bf16.msra.mxu0 0
  %718 = vmatprep.subr.bf16.mxu0 0
  %719 = vmatpush1.bf16.msra.mxu0 0
  %720 = vmatprep.mubr.bf16.mxu0 0
  %721 = vmatmul.mubr.bf16.gmra.mrb[0].mxu0 %v527
  %v722 = vpop.f32.mrb[0].mxu0
  %v723 = vadd.f32 0.0, %v722
  %v724 = vpop.f32.mrb[0].mxu0
  %v725 = vadd.f32 0.0, %v724
  %v726 = vpop.f32.mrb[0].mxu0
  %v727 = vpop.f32.mrb[0].mxu0
  %728 = vdwg.mxu0
  %729 = vmatprep.subr.bf16.mxu0 %v627
  %730 = vmatpush1.bf16.msra.mxu0 %v626
  %731 = vmatprep.subr.bf16.mxu0 %v631
  %732 = vmatpush1.bf16.msra.mxu0 %v630
  %733 = vmatprep.subr.bf16.mxu0 %v635
  %734 = vmatpush1.bf16.msra.mxu0 %v634
  %735 = vmatprep.subr.bf16.mxu0 %v639
  %736 = vmatpush1.bf16.msra.mxu0 %v638
  %737 = vmatprep.subr.bf16.mxu0 %v643
  %738 = vmatpush1.bf16.msra.mxu0 %v642
  %739 = vmatprep.subr.bf16.mxu0 %v647
  %740 = vmatpush1.bf16.msra.mxu0 %v646
  %741 = vmatprep.subr.bf16.mxu0 %v651
  %742 = vmatpush1.bf16.msra.mxu0 %v650
  %743 = vmatprep.subr.bf16.mxu0 %v655
  %744 = vmatpush1.bf16.msra.mxu0 %v654
  %745 = vmatprep.subr.bf16.mxu0 0
  %746 = vmatpush1.bf16.msra.mxu0 0
  %747 = vmatprep.subr.bf16.mxu0 0
  %748 = vmatpush1.bf16.msra.mxu0 0
  %749 = vmatprep.subr.bf16.mxu0 0
  %750 = vmatpush1.bf16.msra.mxu0 0
  %751 = vmatprep.subr.bf16.mxu0 0
  %752 = vmatpush1.bf16.msra.mxu0 0
  %753 = vmatprep.subr.bf16.mxu0 0
  %754 = vmatpush1.bf16.msra.mxu0 0
  %755 = vmatprep.subr.bf16.mxu0 0
  %756 = vmatpush1.bf16.msra.mxu0 0
  %757 = vmatprep.subr.bf16.mxu0 0
  %758 = vmatpush1.bf16.msra.mxu0 0
  %759 = vmatprep.subr.bf16.mxu0 0
  %760 = vmatpush1.bf16.msra.mxu0 0
  %761 = vmatprep.mubr.bf16.mxu0 0
  %762 = vmatmul.mubr.bf16.gmra.mrb[0].mxu0 %v527
  %v763 = vpop.f32.mrb[0].mxu0
  %v764 = vadd.f32 0.0, %v763
  %v765 = vpop.f32.mrb[0].mxu0
  %v766 = vadd.f32 0.0, %v765
  %v767 = vpop.f32.mrb[0].mxu0
  %v768 = vpop.f32.mrb[0].mxu0
  %769 = vdwg.mxu0
  %v774 = vcombine.low %v723, %v725
  %v775 = vcombine.low %v764, %v766
  %v777 = vunpack.c.l.s4 1983009808
  %v778 = vunpack.c.0.s8 %v777
  %v779 = vlaneseq
  %v780 = vshrl.u32 %v779, 7
  %v781 = vsub.s32 %v778, %v780
  %v782 = vrot.slane %v774, %v781
  %v784 = vunpack.c.l.s4 1983009808
  %v785 = vunpack.c.0.s8 %v784
  %v786 = vlaneseq
  %v787 = vshrl.u32 %v786, 7
  %v788 = vsub.s32 %v785, %v787
  %v789 = vrot.slane %v775, %v788
  %v790 = vcombine.low %v782, %v789
  %v792 = vadd.f32 %v526, %v790
  %v793 = vxor.u32 %v792, 2147483648
  %v794 = vmul.f32 %v793, 1.442695
  %v795 = vpow.pop %v794
  %v796 = vadd.f32 %v795, 1.0
  %v797 = vrcp.pop %v796
  %v798 = vmul.f32 1.0, %v797
  %v800 = vrot.slane %v792, 2
  %v802 = vxor.u32 %v800, 2147483648
  %v803 = vmul.f32 %v802, 1.442695
  %v804 = vpow.pop %v803
  %v805 = vadd.f32 %v804, 1.0
  %v806 = vrcp.pop %v805
  %v807 = vmul.f32 1.0, %v806
  %v808 = vrot.slane %v792, 4
  %v810 = vtanh.pop %v808
  %v811 = vrot.slane %v792, 6
  %v813 = vxor.u32 %v811, 2147483648
  %v814 = vmul.f32 %v813, 1.442695
  %v815 = vpow.pop %v814
  %v816 = vadd.f32 %v815, 1.0
  %v817 = vrcp.pop %v816
  %v818 = vmul.f32 1.0, %v817
  %v819 = vmul.f32 %v807, %v525
  %v820 = vmul.f32 %v798, %v810
  %v821 = vadd.f32 %v819, %v820
  %v822 = vtanh.pop %v821
  %v823 = vmul.f32 %v818, %v822
  %824 = vst [vmem:[#allocation5] sm:$0x3] %v823
  %s825 = scalar_lea.vmem [#allocation4], 8
  %v826 = vld [vmem:[%s825] sm:$0xff]
  %v827 = vpack.c.bf16 %v823, %v823
  %828 = vmatprep.subr.bf16.mxu0 %v625
  %829 = vmatpush1.bf16.msra.mxu0 %v624
  %830 = vmatprep.subr.bf16.mxu0 %v629
  %831 = vmatpush1.bf16.msra.mxu0 %v628
  %832 = vmatprep.subr.bf16.mxu0 %v633
  %833 = vmatpush1.bf16.msra.mxu0 %v632
  %834 = vmatprep.subr.bf16.mxu0 %v637
  %835 = vmatpush1.bf16.msra.mxu0 %v636
  %836 = vmatprep.subr.bf16.mxu0 %v641
  %837 = vmatpush1.bf16.msra.mxu0 %v640
  %838 = vmatprep.subr.bf16.mxu0 %v645
  %839 = vmatpush1.bf16.msra.mxu0 %v644
  %840 = vmatprep.subr.bf16.mxu0 %v649
  %841 = vmatpush1.bf16.msra.mxu0 %v648
  %842 = vmatprep.subr.bf16.mxu0 %v653
  %843 = vmatpush1.bf16.msra.mxu0 %v652
  %844 = vmatprep.subr.bf16.mxu0 0
  %845 = vmatpush1.bf16.msra.mxu0 0
  %846 = vmatprep.subr.bf16.mxu0 0
  %847 = vmatpush1.bf16.msra.mxu0 0
  %848 = vmatprep.subr.bf16.mxu0 0
  %849 = vmatpush1.bf16.msra.mxu0 0
  %850 = vmatprep.subr.bf16.mxu0 0
  %851 = vmatpush1.bf16.msra.mxu0 0
  %852 = vmatprep.subr.bf16.mxu0 0
  %853 = vmatpush1.bf16.msra.mxu0 0
  %854 = vmatprep.subr.bf16.mxu0 0
  %855 = vmatpush1.bf16.msra.mxu0 0
  %856 = vmatprep.subr.bf16.mxu0 0
  %857 = vmatpush1.bf16.msra.mxu0 0
  %858 = vmatprep.subr.bf16.mxu0 0
  %859 = vmatpush1.bf16.msra.mxu0 0
  %860 = vmatprep.mubr.bf16.mxu0 0
  %861 = vmatmul.mubr.bf16.gmra.mrb[0].mxu0 %v827
  %v862 = vpop.f32.mrb[0].mxu0
  %v863 = vadd.f32 0.0, %v862
  %v864 = vpop.f32.mrb[0].mxu0
  %v865 = vadd.f32 0.0, %v864
  %v866 = vpop.f32.mrb[0].mxu0
  %v867 = vpop.f32.mrb[0].mxu0
  %868 = vdwg.mxu0
  %869 = vmatprep.subr.bf16.mxu0 %v627
  %870 = vmatpush1.bf16.msra.mxu0 %v626
  %871 = vmatprep.subr.bf16.mxu0 %v631
  %872 = vmatpush1.bf16.msra.mxu0 %v630
  %873 = vmatprep.subr.bf16.mxu0 %v635
  %874 = vmatpush1.bf16.msra.mxu0 %v634
  %875 = vmatprep.subr.bf16.mxu0 %v639
  %876 = vmatpush1.bf16.msra.mxu0 %v638
  %877 = vmatprep.subr.bf16.mxu0 %v643
  %878 = vmatpush1.bf16.msra.mxu0 %v642
  %879 = vmatprep.subr.bf16.mxu0 %v647
  %880 = vmatpush1.bf16.msra.mxu0 %v646
  %881 = vmatprep.subr.bf16.mxu0 %v651
  %882 = vmatpush1.bf16.msra.mxu0 %v650
  %883 = vmatprep.subr.bf16.mxu0 %v655
  %884 = vmatpush1.bf16.msra.mxu0 %v654
  %885 = vmatprep.subr.bf16.mxu0 0
  %886 = vmatpush1.bf16.msra.mxu0 0
  %887 = vmatprep.subr.bf16.mxu0 0
  %888 = vmatpush1.bf16.msra.mxu0 0
  %889 = vmatprep.subr.bf16.mxu0 0
  %890 = vmatpush1.bf16.msra.mxu0 0
  %891 = vmatprep.subr.bf16.mxu0 0
  %892 = vmatpush1.bf16.msra.mxu0 0
  %893 = vmatprep.subr.bf16.mxu0 0
  %894 = vmatpush1.bf16.msra.mxu0 0
  %895 = vmatprep.subr.bf16.mxu0 0
  %896 = vmatpush1.bf16.msra.mxu0 0
  %897 = vmatprep.subr.bf16.mxu0 0
  %898 = vmatpush1.bf16.msra.mxu0 0
  %899 = vmatprep.subr.bf16.mxu0 0
  %900 = vmatpush1.bf16.msra.mxu0 0
  %901 = vmatprep.mubr.bf16.mxu0 0
  %902 = vmatmul.mubr.bf16.gmra.mrb[0].mxu0 %v827
  %v903 = vpop.f32.mrb[0].mxu0
  %v904 = vadd.f32 0.0, %v903
  %v905 = vpop.f32.mrb[0].mxu0
  %v906 = vadd.f32 0.0, %v905
  %v907 = vpop.f32.mrb[0].mxu0
  %v908 = vpop.f32.mrb[0].mxu0
  %909 = vdwg.mxu0
  %v914 = vcombine.low %v863, %v865
  %v915 = vcombine.low %v904, %v906
  %v917 = vunpack.c.l.s4 1983009808
  %v918 = vunpack.c.0.s8 %v917
  %v919 = vlaneseq
  %v920 = vshrl.u32 %v919, 7
  %v921 = vsub.s32 %v918, %v920
  %v922 = vrot.slane %v914, %v921
  %v924 = vunpack.c.l.s4 1983009808
  %v925 = vunpack.c.0.s8 %v924
  %v926 = vlaneseq
  %v927 = vshrl.u32 %v926, 7
  %v928 = vsub.s32 %v925, %v927
  %v929 = vrot.slane %v915, %v928
  %v930 = vcombine.low %v922, %v929
  %v932 = vadd.f32 %v826, %v930
  %v933 = vxor.u32 %v932, 2147483648
  %v934 = vmul.f32 %v933, 1.442695
  %v935 = vpow.pop %v934
  %v936 = vadd.f32 %v935, 1.0
  %v937 = vrcp.pop %v936
  %v938 = vmul.f32 1.0, %v937
  %v940 = vrot.slane %v932, 2
  %v942 = vxor.u32 %v940, 2147483648
  %v943 = vmul.f32 %v942, 1.442695
  %v944 = vpow.pop %v943
  %v945 = vadd.f32 %v944, 1.0
  %v946 = vrcp.pop %v945
  %v947 = vmul.f32 1.0, %v946
  %v948 = vrot.slane %v932, 4
  %v950 = vtanh.pop %v948
  %v951 = vrot.slane %v932, 6
  %v953 = vxor.u32 %v951, 2147483648
  %v954 = vmul.f32 %v953, 1.442695
  %v955 = vpow.pop %v954
  %v956 = vadd.f32 %v955, 1.0
  %v957 = vrcp.pop %v956
  %v958 = vmul.f32 1.0, %v957
  %v959 = vmul.f32 %v947, %v821
  %v960 = vmul.f32 %v938, %v950
  %v961 = vadd.f32 %v959, %v960
  %v962 = vtanh.pop %v961
  %v963 = vmul.f32 %v958, %v962
  %s964 = scalar_lea.vmem [#allocation5], 2
  %965 = vst [vmem:[%s964] sm:$0x3] %v963
  %s966 = scalar_lea.vmem [#allocation4], 16
  %v967 = vld [vmem:[%s966] sm:$0xff]
  %v968 = vpack.c.bf16 %v963, %v963
  %969 = vmatprep.subr.bf16.mxu0 %v625
  %970 = vmatpush1.bf16.msra.mxu0 %v624
  %971 = vmatprep.subr.bf16.mxu0 %v629
  %972 = vmatpush1.bf16.msra.mxu0 %v628
  %973 = vmatprep.subr.bf16.mxu0 %v633
  %974 = vmatpush1.bf16.msra.mxu0 %v632
  %975 = vmatprep.subr.bf16.mxu0 %v637
  %976 = vmatpush1.bf16.msra.mxu0 %v636
  %977 = vmatprep.subr.bf16.mxu0 %v641
  %978 = vmatpush1.bf16.msra.mxu0 %v640
  %979 = vmatprep.subr.bf16.mxu0 %v645
  %980 = vmatpush1.bf16.msra.mxu0 %v644
  %981 = vmatprep.subr.bf16.mxu0 %v649
  %982 = vmatpush1.bf16.msra.mxu0 %v648
  %983 = vmatprep.subr.bf16.mxu0 %v653
  %984 = vmatpush1.bf16.msra.mxu0 %v652
  %985 = vmatprep.subr.bf16.mxu0 0
  %986 = vmatpush1.bf16.msra.mxu0 0
  %987 = vmatprep.subr.bf16.mxu0 0
  %988 = vmatpush1.bf16.msra.mxu0 0
  %989 = vmatprep.subr.bf16.mxu0 0
  %990 = vmatpush1.bf16.msra.mxu0 0
  %991 = vmatprep.subr.bf16.mxu0 0
  %992 = vmatpush1.bf16.msra.mxu0 0
  %993 = vmatprep.subr.bf16.mxu0 0
  %994 = vmatpush1.bf16.msra.mxu0 0
  %995 = vmatprep.subr.bf16.mxu0 0
  %996 = vmatpush1.bf16.msra.mxu0 0
  %997 = vmatprep.subr.bf16.mxu0 0
  %998 = vmatpush1.bf16.msra.mxu0 0
  %999 = vmatprep.subr.bf16.mxu0 0
  %1000 = vmatpush1.bf16.msra.mxu0 0
  %1001 = vmatprep.mubr.bf16.mxu0 0
  %1002 = vmatmul.mubr.bf16.gmra.mrb[0].mxu0 %v968
  %v1003 = vpop.f32.mrb[0].mxu0
  %v1004 = vadd.f32 0.0, %v1003
  %v1005 = vpop.f32.mrb[0].mxu0
  %v1006 = vadd.f32 0.0, %v1005
  %v1007 = vpop.f32.mrb[0].mxu0
  %v1008 = vpop.f32.mrb[0].mxu0
  %1009 = vdwg.mxu0
  %1010 = vmatprep.subr.bf16.mxu0 %v627
  %1011 = vmatpush1.bf16.msra.mxu0 %v626
  %1012 = vmatprep.subr.bf16.mxu0 %v631
  %1013 = vmatpush1.bf16.msra.mxu0 %v630
  %1014 = vmatprep.subr.bf16.mxu0 %v635
  %1015 = vmatpush1.bf16.msra.mxu0 %v634
  %1016 = vmatprep.subr.bf16.mxu0 %v639
  %1017 = vmatpush1.bf16.msra.mxu0 %v638
  %1018 = vmatprep.subr.bf16.mxu0 %v643
  %1019 = vmatpush1.bf16.msra.mxu0 %v642
  %1020 = vmatprep.subr.bf16.mxu0 %v647
  %1021 = vmatpush1.bf16.msra.mxu0 %v646
  %1022 = vmatprep.subr.bf16.mxu0 %v651
  %1023 = vmatpush1.bf16.msra.mxu0 %v650
  %1024 = vmatprep.subr.bf16.mxu0 %v655
  %1025 = vmatpush1.bf16.msra.mxu0 %v654
  %1026 = vmatprep.subr.bf16.mxu0 0
  %1027 = vmatpush1.bf16.msra.mxu0 0
  %1028 = vmatprep.subr.bf16.mxu0 0
  %1029 = vmatpush1.bf16.msra.mxu0 0
  %1030 = vmatprep.subr.bf16.mxu0 0
  %1031 = vmatpush1.bf16.msra.mxu0 0
  %1032 = vmatprep.subr.bf16.mxu0 0
  %1033 = vmatpush1.bf16.msra.mxu0 0
  %1034 = vmatprep.subr.bf16.mxu0 0
  %1035 = vmatpush1.bf16.msra.mxu0 0
  %1036 = vmatprep.subr.bf16.mxu0 0
  %1037 = vmatpush1.bf16.msra.mxu0 0
  %1038 = vmatprep.subr.bf16.mxu0 0
  %1039 = vmatpush1.bf16.msra.mxu0 0
  %1040 = vmatprep.subr.bf16.mxu0 0
  %1041 = vmatpush1.bf16.msra.mxu0 0
  %1042 = vmatprep.mubr.bf16.mxu0 0
  %1043 = vmatmul.mubr.bf16.gmra.mrb[0].mxu0 %v968
  %v1044 = vpop.f32.mrb[0].mxu0
  %v1045 = vadd.f32 0.0, %v1044
  %v1046 = vpop.f32.mrb[0].mxu0
  %v1047 = vadd.f32 0.0, %v1046
  %v1048 = vpop.f32.mrb[0].mxu0
  %v1049 = vpop.f32.mrb[0].mxu0
  %1050 = vdwg.mxu0
  %v1055 = vcombine.low %v1004, %v1006
  %v1056 = vcombine.low %v1045, %v1047
  %v1058 = vunpack.c.l.s4 1983009808
  %v1059 = vunpack.c.0.s8 %v1058
  %v1060 = vlaneseq
  %v1061 = vshrl.u32 %v1060, 7
  %v1062 = vsub.s32 %v1059, %v1061
  %v1063 = vrot.slane %v1055, %v1062
  %v1065 = vunpack.c.l.s4 1983009808
  %v1066 = vunpack.c.0.s8 %v1065
  %v1067 = vlaneseq
  %v1068 = vshrl.u32 %v1067, 7
  %v1069 = vsub.s32 %v1066, %v1068
  %v1070 = vrot.slane %v1056, %v1069
  %v1071 = vcombine.low %v1063, %v1070
  %v1073 = vadd.f32 %v967, %v1071
  %v1074 = vxor.u32 %v1073, 2147483648
  %v1075 = vmul.f32 %v1074, 1.442695
  %v1076 = vpow.pop %v1075
  %v1077 = vadd.f32 %v1076, 1.0
  %v1078 = vrcp.pop %v1077
  %v1079 = vmul.f32 1.0, %v1078
  %v1081 = vrot.slane %v1073, 2
  %v1083 = vxor.u32 %v1081, 2147483648
  %v1084 = vmul.f32 %v1083, 1.442695
  %v1085 = vpow.pop %v1084
  %v1086 = vadd.f32 %v1085, 1.0
  %v1087 = vrcp.pop %v1086
  %v1088 = vmul.f32 1.0, %v1087
  %v1089 = vrot.slane %v1073, 4
  %v1091 = vtanh.pop %v1089
  %v1092 = vrot.slane %v1073, 6
  %v1094 = vxor.u32 %v1092, 2147483648
  %v1095 = vmul.f32 %v1094, 1.442695
  %v1096 = vpow.pop %v1095
  %v1097 = vadd.f32 %v1096, 1.0
  %v1098 = vrcp.pop %v1097
  %v1099 = vmul.f32 1.0, %v1098
  %v1100 = vmul.f32 %v1088, %v961
  %v1101 = vmul.f32 %v1079, %v1091
  %v1102 = vadd.f32 %v1100, %v1101
  %v1103 = vtanh.pop %v1102
  %v1104 = vmul.f32 %v1099, %v1103
  %s1105 = scalar_lea.vmem [#allocation5], 4
  %1106 = vst [vmem:[%s1105] sm:$0x3] %v1104
  %s1107 = scalar_lea.vmem [#allocation4], 24
  %v1108 = vld [vmem:[%s1107] sm:$0xff]
  %v1109 = vpack.c.bf16 %v1104, %v1104
  %1110 = vmatprep.subr.bf16.mxu0 %v625
  %1111 = vmatpush1.bf16.msra.mxu0 %v624
  %1112 = vmatprep.subr.bf16.mxu0 %v629
  %1113 = vmatpush1.bf16.msra.mxu0 %v628
  %1114 = vmatprep.subr.bf16.mxu0 %v633
  %1115 = vmatpush1.bf16.msra.mxu0 %v632
  %1116 = vmatprep.subr.bf16.mxu0 %v637
  %1117 = vmatpush1.bf16.msra.mxu0 %v636
  %1118 = vmatprep.subr.bf16.mxu0 %v641
  %1119 = vmatpush1.bf16.msra.mxu0 %v640
  %1120 = vmatprep.subr.bf16.mxu0 %v645
  %1121 = vmatpush1.bf16.msra.mxu0 %v644
  %1122 = vmatprep.subr.bf16.mxu0 %v649
  %1123 = vmatpush1.bf16.msra.mxu0 %v648
  %1124 = vmatprep.subr.bf16.mxu0 %v653
  %1125 = vmatpush1.bf16.msra.mxu0 %v652
  %1126 = vmatprep.subr.bf16.mxu0 0
  %1127 = vmatpush1.bf16.msra.mxu0 0
  %1128 = vmatprep.subr.bf16.mxu0 0
  %1129 = vmatpush1.bf16.msra.mxu0 0
  %1130 = vmatprep.subr.bf16.mxu0 0
  %1131 = vmatpush1.bf16.msra.mxu0 0
  %1132 = vmatprep.subr.bf16.mxu0 0
  %1133 = vmatpush1.bf16.msra.mxu0 0
  %1134 = vmatprep.subr.bf16.mxu0 0
  %1135 = vmatpush1.bf16.msra.mxu0 0
  %1136 = vmatprep.subr.bf16.mxu0 0
  %1137 = vmatpush1.bf16.msra.mxu0 0
  %1138 = vmatprep.subr.bf16.mxu0 0
  %1139 = vmatpush1.bf16.msra.mxu0 0
  %1140 = vmatprep.subr.bf16.mxu0 0
  %1141 = vmatpush1.bf16.msra.mxu0 0
  %1142 = vmatprep.mubr.bf16.mxu0 0
  %1143 = vmatmul.mubr.bf16.gmra.mrb[0].mxu0 %v1109
  %v1144 = vpop.f32.mrb[0].mxu0
  %v1145 = vadd.f32 0.0, %v1144
  %v1146 = vpop.f32.mrb[0].mxu0
  %v1147 = vadd.f32 0.0, %v1146
  %v1148 = vpop.f32.mrb[0].mxu0
  %v1149 = vpop.f32.mrb[0].mxu0
  %1150 = vdwg.mxu0
  %1151 = vmatprep.subr.bf16.mxu0 %v627
  %1152 = vmatpush1.bf16.msra.mxu0 %v626
  %1153 = vmatprep.subr.bf16.mxu0 %v631
  %1154 = vmatpush1.bf16.msra.mxu0 %v630
  %1155 = vmatprep.subr.bf16.mxu0 %v635
  %1156 = vmatpush1.bf16.msra.mxu0 %v634
  %1157 = vmatprep.subr.bf16.mxu0 %v639
  %1158 = vmatpush1.bf16.msra.mxu0 %v638
  %1159 = vmatprep.subr.bf16.mxu0 %v643
  %1160 = vmatpush1.bf16.msra.mxu0 %v642
  %1161 = vmatprep.subr.bf16.mxu0 %v647
  %1162 = vmatpush1.bf16.msra.mxu0 %v646
  %1163 = vmatprep.subr.bf16.mxu0 %v651
  %1164 = vmatpush1.bf16.msra.mxu0 %v650
  %1165 = vmatprep.subr.bf16.mxu0 %v655
  %1166 = vmatpush1.bf16.msra.mxu0 %v654
  %1167 = vmatprep.subr.bf16.mxu0 0
  %1168 = vmatpush1.bf16.msra.mxu0 0
  %1169 = vmatprep.subr.bf16.mxu0 0
  %1170 = vmatpush1.bf16.msra.mxu0 0
  %1171 = vmatprep.subr.bf16.mxu0 0
  %1172 = vmatpush1.bf16.msra.mxu0 0
  %1173 = vmatprep.subr.bf16.mxu0 0
  %1174 = vmatpush1.bf16.msra.mxu0 0
  %1175 = vmatprep.subr.bf16.mxu0 0
  %1176 = vmatpush1.bf16.msra.mxu0 0
  %1177 = vmatprep.subr.bf16.mxu0 0
  %1178 = vmatpush1.bf16.msra.mxu0 0
  %1179 = vmatprep.subr.bf16.mxu0 0
  %1180 = vmatpush1.bf16.msra.mxu0 0
  %1181 = vmatprep.subr.bf16.mxu0 0
  %1182 = vmatpush1.bf16.msra.mxu0 0
  %1183 = vmatprep.mubr.bf16.mxu0 0
  %1184 = vmatmul.mubr.bf16.gmra.mrb[0].mxu0 %v1109
  %v1185 = vpop.f32.mrb[0].mxu0
  %v1186 = vadd.f32 0.0, %v1185
  %v1187 = vpop.f32.mrb[0].mxu0
  %v1188 = vadd.f32 0.0, %v1187
  %v1189 = vpop.f32.mrb[0].mxu0
  %v1190 = vpop.f32.mrb[0].mxu0
  %1191 = vdwg.mxu0
  %v1196 = vcombine.low %v1145, %v1147
  %v1197 = vcombine.low %v1186, %v1188
  %v1199 = vunpack.c.l.s4 1983009808
  %v1200 = vunpack.c.0.s8 %v1199
  %v1201 = vlaneseq
  %v1202 = vshrl.u32 %v1201, 7
  %v1203 = vsub.s32 %v1200, %v1202
  %v1204 = vrot.slane %v1196, %v1203
  %v1206 = vunpack.c.l.s4 1983009808
  %v1207 = vunpack.c.0.s8 %v1206
  %v1208 = vlaneseq
  %v1209 = vshrl.u32 %v1208, 7
  %v1210 = vsub.s32 %v1207, %v1209
  %v1211 = vrot.slane %v1197, %v1210
  %v1212 = vcombine.low %v1204, %v1211
  %v1214 = vadd.f32 %v1108, %v1212
  %v1215 = vxor.u32 %v1214, 2147483648
  %v1216 = vmul.f32 %v1215, 1.442695
  %v1217 = vpow.pop %v1216
  %v1218 = vadd.f32 %v1217, 1.0
  %v1219 = vrcp.pop %v1218
  %v1220 = vmul.f32 1.0, %v1219
  %v1222 = vrot.slane %v1214, 2
  %v1224 = vxor.u32 %v1222, 2147483648
  %v1225 = vmul.f32 %v1224, 1.442695
  %v1226 = vpow.pop %v1225
  %v1227 = vadd.f32 %v1226, 1.0
  %v1228 = vrcp.pop %v1227
  %v1229 = vmul.f32 1.0, %v1228
  %v1230 = vrot.slane %v1214, 4
  %v1232 = vtanh.pop %v1230
  %v1233 = vrot.slane %v1214, 6
  %v1235 = vxor.u32 %v1233, 2147483648
  %v1236 = vmul.f32 %v1235, 1.442695
  %v1237 = vpow.pop %v1236
  %v1238 = vadd.f32 %v1237, 1.0
  %v1239 = vrcp.pop %v1238
  %v1240 = vmul.f32 1.0, %v1239
  %v1241 = vmul.f32 %v1229, %v1102
  %v1242 = vmul.f32 %v1220, %v1232
  %v1243 = vadd.f32 %v1241, %v1242
  %v1244 = vtanh.pop %v1243
  %v1245 = vmul.f32 %v1240, %v1244
  %s1246 = scalar_lea.vmem [#allocation5], 6
  %1247 = vst [vmem:[%s1246] sm:$0x3] %v1245
  %s1248 = scalar_lea.vmem [#allocation4], 32
  %v1249 = vld [vmem:[%s1248] sm:$0xff]
  %v1250 = vpack.c.bf16 %v1245, %v1245
  %1251 = vmatprep.subr.bf16.mxu0 %v625
  %1252 = vmatpush1.bf16.msra.mxu0 %v624
  %1253 = vmatprep.subr.bf16.mxu0 %v629
  %1254 = vmatpush1.bf16.msra.mxu0 %v628
  %1255 = vmatprep.subr.bf16.mxu0 %v633
  %1256 = vmatpush1.bf16.msra.mxu0 %v632
  %1257 = vmatprep.subr.bf16.mxu0 %v637
  %1258 = vmatpush1.bf16.msra.mxu0 %v636
  %1259 = vmatprep.subr.bf16.mxu0 %v641
  %1260 = vmatpush1.bf16.msra.mxu0 %v640
  %1261 = vmatprep.subr.bf16.mxu0 %v645
  %1262 = vmatpush1.bf16.msra.mxu0 %v644
  %1263 = vmatprep.subr.bf16.mxu0 %v649
  %1264 = vmatpush1.bf16.msra.mxu0 %v648
  %1265 = vmatprep.subr.bf16.mxu0 %v653
  %1266 = vmatpush1.bf16.msra.mxu0 %v652
  %1267 = vmatprep.subr.bf16.mxu0 0
  %1268 = vmatpush1.bf16.msra.mxu0 0
  %1269 = vmatprep.subr.bf16.mxu0 0
  %1270 = vmatpush1.bf16.msra.mxu0 0
  %1271 = vmatprep.subr.bf16.mxu0 0
  %1272 = vmatpush1.bf16.msra.mxu0 0
  %1273 = vmatprep.subr.bf16.mxu0 0
  %1274 = vmatpush1.bf16.msra.mxu0 0
  %1275 = vmatprep.subr.bf16.mxu0 0
  %1276 = vmatpush1.bf16.msra.mxu0 0
  %1277 = vmatprep.subr.bf16.mxu0 0
  %1278 = vmatpush1.bf16.msra.mxu0 0
  %1279 = vmatprep.subr.bf16.mxu0 0
  %1280 = vmatpush1.bf16.msra.mxu0 0
  %1281 = vmatprep.subr.bf16.mxu0 0
  %1282 = vmatpush1.bf16.msra.mxu0 0
  %1283 = vmatprep.mubr.bf16.mxu0 0
  %1284 = vmatmul.mubr.bf16.gmra.mrb[0].mxu0 %v1250
  %v1285 = vpop.f32.mrb[0].mxu0
  %v1286 = vadd.f32 0.0, %v1285
  %v1287 = vpop.f32.mrb[0].mxu0
  %v1288 = vadd.f32 0.0, %v1287
  %v1289 = vpop.f32.mrb[0].mxu0
  %v1290 = vpop.f32.mrb[0].mxu0
  %1291 = vdwg.mxu0
  %1292 = vmatprep.subr.bf16.mxu0 %v627
  %1293 = vmatpush1.bf16.msra.mxu0 %v626
  %1294 = vmatprep.subr.bf16.mxu0 %v631
  %1295 = vmatpush1.bf16.msra.mxu0 %v630
  %1296 = vmatprep.subr.bf16.mxu0 %v635
  %1297 = vmatpush1.bf16.msra.mxu0 %v634
  %1298 = vmatprep.subr.bf16.mxu0 %v639
  %1299 = vmatpush1.bf16.msra.mxu0 %v638
  %1300 = vmatprep.subr.bf16.mxu0 %v643
  %1301 = vmatpush1.bf16.msra.mxu0 %v642
  %1302 = vmatprep.subr.bf16.mxu0 %v647
  %1303 = vmatpush1.bf16.msra.mxu0 %v646
  %1304 = vmatprep.subr.bf16.mxu0 %v651
  %1305 = vmatpush1.bf16.msra.mxu0 %v650
  %1306 = vmatprep.subr.bf16.mxu0 %v655
  %1307 = vmatpush1.bf16.msra.mxu0 %v654
  %1308 = vmatprep.subr.bf16.mxu0 0
  %1309 = vmatpush1.bf16.msra.mxu0 0
  %1310 = vmatprep.subr.bf16.mxu0 0
  %1311 = vmatpush1.bf16.msra.mxu0 0
  %1312 = vmatprep.subr.bf16.mxu0 0
  %1313 = vmatpush1.bf16.msra.mxu0 0
  %1314 = vmatprep.subr.bf16.mxu0 0
  %1315 = vmatpush1.bf16.msra.mxu0 0
  %1316 = vmatprep.subr.bf16.mxu0 0
  %1317 = vmatpush1.bf16.msra.mxu0 0
  %1318 = vmatprep.subr.bf16.mxu0 0
  %1319 = vmatpush1.bf16.msra.mxu0 0
  %1320 = vmatprep.subr.bf16.mxu0 0
  %1321 = vmatpush1.bf16.msra.mxu0 0
  %1322 = vmatprep.subr.bf16.mxu0 0
  %1323 = vmatpush1.bf16.msra.mxu0 0
  %1324 = vmatprep.mubr.bf16.mxu0 0
  %1325 = vmatmul.mubr.bf16.gmra.mrb[0].mxu0 %v1250
  %v1326 = vpop.f32.mrb[0].mxu0
  %v1327 = vadd.f32 0.0, %v1326
  %v1328 = vpop.f32.mrb[0].mxu0
  %v1329 = vadd.f32 0.0, %v1328
  %v1330 = vpop.f32.mrb[0].mxu0
  %v1331 = vpop.f32.mrb[0].mxu0
  %1332 = vdwg.mxu0
  %v1337 = vcombine.low %v1286, %v1288
  %v1338 = vcombine.low %v1327, %v1329
  %v1340 = vunpack.c.l.s4 1983009808
  %v1341 = vunpack.c.0.s8 %v1340
  %v1342 = vlaneseq
  %v1343 = vshrl.u32 %v1342, 7
  %v1344 = vsub.s32 %v1341, %v1343
  %v1345 = vrot.slane %v1337, %v1344
  %v1347 = vunpack.c.l.s4 1983009808
  %v1348 = vunpack.c.0.s8 %v1347
  %v1349 = vlaneseq
  %v1350 = vshrl.u32 %v1349, 7
  %v1351 = vsub.s32 %v1348, %v1350
  %v1352 = vrot.slane %v1338, %v1351
  %v1353 = vcombine.low %v1345, %v1352
  %v1355 = vadd.f32 %v1249, %v1353
  %v1356 = vxor.u32 %v1355, 2147483648
  %v1357 = vmul.f32 %v1356, 1.442695
  %v1358 = vpow.pop %v1357
  %v1359 = vadd.f32 %v1358, 1.0
  %v1360 = vrcp.pop %v1359
  %v1361 = vmul.f32 1.0, %v1360
  %v1363 = vrot.slane %v1355, 2
  %v1365 = vxor.u32 %v1363, 2147483648
  %v1366 = vmul.f32 %v1365, 1.442695
  %v1367 = vpow.pop %v1366
  %v1368 = vadd.f32 %v1367, 1.0
  %v1369 = vrcp.pop %v1368
  %v1370 = vmul.f32 1.0, %v1369
  %v1371 = vrot.slane %v1355, 4
  %v1373 = vtanh.pop %v1371
  %v1374 = vrot.slane %v1355, 6
  %v1376 = vxor.u32 %v1374, 2147483648
  %v1377 = vmul.f32 %v1376, 1.442695
  %v1378 = vpow.pop %v1377
  %v1379 = vadd.f32 %v1378, 1.0
  %v1380 = vrcp.pop %v1379
  %v1381 = vmul.f32 1.0, %v1380
  %v1382 = vmul.f32 %v1370, %v1243
  %v1383 = vmul.f32 %v1361, %v1373
  %v1384 = vadd.f32 %v1382, %v1383
  %v1385 = vtanh.pop %v1384
  %v1386 = vmul.f32 %v1381, %v1385
  %s1387 = scalar_lea.vmem [#allocation5], 8
  %1388 = vst [vmem:[%s1387] sm:$0x3] %v1386
  %s1389 = scalar_lea.vmem [#allocation4], 40
  %v1390 = vld [vmem:[%s1389] sm:$0xff]
  %v1391 = vpack.c.bf16 %v1386, %v1386
  %1392 = vmatprep.subr.bf16.mxu0 %v625
  %1393 = vmatpush1.bf16.msra.mxu0 %v624
  %1394 = vmatprep.subr.bf16.mxu0 %v629
  %1395 = vmatpush1.bf16.msra.mxu0 %v628
  %1396 = vmatprep.subr.bf16.mxu0 %v633
  %1397 = vmatpush1.bf16.msra.mxu0 %v632
  %1398 = vmatprep.subr.bf16.mxu0 %v637
  %1399 = vmatpush1.bf16.msra.mxu0 %v636
  %1400 = vmatprep.subr.bf16.mxu0 %v641
  %1401 = vmatpush1.bf16.msra.mxu0 %v640
  %1402 = vmatprep.subr.bf16.mxu0 %v645
  %1403 = vmatpush1.bf16.msra.mxu0 %v644
  %1404 = vmatprep.subr.bf16.mxu0 %v649
  %1405 = vmatpush1.bf16.msra.mxu0 %v648
  %1406 = vmatprep.subr.bf16.mxu0 %v653
  %1407 = vmatpush1.bf16.msra.mxu0 %v652
  %1408 = vmatprep.subr.bf16.mxu0 0
  %1409 = vmatpush1.bf16.msra.mxu0 0
  %1410 = vmatprep.subr.bf16.mxu0 0
  %1411 = vmatpush1.bf16.msra.mxu0 0
  %1412 = vmatprep.subr.bf16.mxu0 0
  %1413 = vmatpush1.bf16.msra.mxu0 0
  %1414 = vmatprep.subr.bf16.mxu0 0
  %1415 = vmatpush1.bf16.msra.mxu0 0
  %1416 = vmatprep.subr.bf16.mxu0 0
  %1417 = vmatpush1.bf16.msra.mxu0 0
  %1418 = vmatprep.subr.bf16.mxu0 0
  %1419 = vmatpush1.bf16.msra.mxu0 0
  %1420 = vmatprep.subr.bf16.mxu0 0
  %1421 = vmatpush1.bf16.msra.mxu0 0
  %1422 = vmatprep.subr.bf16.mxu0 0
  %1423 = vmatpush1.bf16.msra.mxu0 0
  %1424 = vmatprep.mubr.bf16.mxu0 0
  %1425 = vmatmul.mubr.bf16.gmra.mrb[0].mxu0 %v1391
  %v1426 = vpop.f32.mrb[0].mxu0
  %v1427 = vadd.f32 0.0, %v1426
  %v1428 = vpop.f32.mrb[0].mxu0
  %v1429 = vadd.f32 0.0, %v1428
  %v1430 = vpop.f32.mrb[0].mxu0
  %v1431 = vpop.f32.mrb[0].mxu0
  %1432 = vdwg.mxu0
  %1433 = vmatprep.subr.bf16.mxu0 %v627
  %1434 = vmatpush1.bf16.msra.mxu0 %v626
  %1435 = vmatprep.subr.bf16.mxu0 %v631
  %1436 = vmatpush1.bf16.msra.mxu0 %v630
  %1437 = vmatprep.subr.bf16.mxu0 %v635
  %1438 = vmatpush1.bf16.msra.mxu0 %v634
  %1439 = vmatprep.subr.bf16.mxu0 %v639
  %1440 = vmatpush1.bf16.msra.mxu0 %v638
  %1441 = vmatprep.subr.bf16.mxu0 %v643
  %1442 = vmatpush1.bf16.msra.mxu0 %v642
  %1443 = vmatprep.subr.bf16.mxu0 %v647
  %1444 = vmatpush1.bf16.msra.mxu0 %v646
  %1445 = vmatprep.subr.bf16.mxu0 %v651
  %1446 = vmatpush1.bf16.msra.mxu0 %v650
  %1447 = vmatprep.subr.bf16.mxu0 %v655
  %1448 = vmatpush1.bf16.msra.mxu0 %v654
  %1449 = vmatprep.subr.bf16.mxu0 0
  %1450 = vmatpush1.bf16.msra.mxu0 0
  %1451 = vmatprep.subr.bf16.mxu0 0
  %1452 = vmatpush1.bf16.msra.mxu0 0
  %1453 = vmatprep.subr.bf16.mxu0 0
  %1454 = vmatpush1.bf16.msra.mxu0 0
  %1455 = vmatprep.subr.bf16.mxu0 0
  %1456 = vmatpush1.bf16.msra.mxu0 0
  %1457 = vmatprep.subr.bf16.mxu0 0
  %1458 = vmatpush1.bf16.msra.mxu0 0
  %1459 = vmatprep.subr.bf16.mxu0 0
  %1460 = vmatpush1.bf16.msra.mxu0 0
  %1461 = vmatprep.subr.bf16.mxu0 0
  %1462 = vmatpush1.bf16.msra.mxu0 0
  %1463 = vmatprep.subr.bf16.mxu0 0
  %1464 = vmatpush1.bf16.msra.mxu0 0
  %1465 = vmatprep.mubr.bf16.mxu0 0
  %1466 = vmatmul.mubr.bf16.gmra.mrb[0].mxu0 %v1391
  %v1467 = vpop.f32.mrb[0].mxu0
  %v1468 = vadd.f32 0.0, %v1467
  %v1469 = vpop.f32.mrb[0].mxu0
  %v1470 = vadd.f32 0.0, %v1469
  %v1471 = vpop.f32.mrb[0].mxu0
  %v1472 = vpop.f32.mrb[0].mxu0
  %1473 = vdwg.mxu0
  %v1478 = vcombine.low %v1427, %v1429
  %v1479 = vcombine.low %v1468, %v1470
  %v1481 = vunpack.c.l.s4 1983009808
  %v1482 = vunpack.c.0.s8 %v1481
  %v1483 = vlaneseq
  %v1484 = vshrl.u32 %v1483, 7
  %v1485 = vsub.s32 %v1482, %v1484
  %v1486 = vrot.slane %v1478, %v1485
  %v1488 = vunpack.c.l.s4 1983009808
  %v1489 = vunpack.c.0.s8 %v1488
  %v1490 = vlaneseq
  %v1491 = vshrl.u32 %v1490, 7
  %v1492 = vsub.s32 %v1489, %v1491
  %v1493 = vrot.slane %v1479, %v1492
  %v1494 = vcombine.low %v1486, %v1493
  %v1496 = vadd.f32 %v1390, %v1494
  %v1497 = vxor.u32 %v1496, 2147483648
  %v1498 = vmul.f32 %v1497, 1.442695
  %v1499 = vpow.pop %v1498
  %v1500 = vadd.f32 %v1499, 1.0
  %v1501 = vrcp.pop %v1500
  %v1502 = vmul.f32 1.0, %v1501
  %v1504 = vrot.slane %v1496, 2
  %v1506 = vxor.u32 %v1504, 2147483648
  %v1507 = vmul.f32 %v1506, 1.442695
  %v1508 = vpow.pop %v1507
  %v1509 = vadd.f32 %v1508, 1.0
  %v1510 = vrcp.pop %v1509
  %v1511 = vmul.f32 1.0, %v1510
  %v1512 = vrot.slane %v1496, 4
  %v1514 = vtanh.pop %v1512
  %v1515 = vrot.slane %v1496, 6
  %v1517 = vxor.u32 %v1515, 2147483648
  %v1518 = vmul.f32 %v1517, 1.442695
  %v1519 = vpow.pop %v1518
  %v1520 = vadd.f32 %v1519, 1.0
  %v1521 = vrcp.pop %v1520
  %v1522 = vmul.f32 1.0, %v1521
  %v1523 = vmul.f32 %v1511, %v1384
  %v1524 = vmul.f32 %v1502, %v1514
  %v1525 = vadd.f32 %v1523, %v1524
  %v1526 = vtanh.pop %v1525
  %v1527 = vmul.f32 %v1522, %v1526
  %s1528 = scalar_lea.vmem [#allocation5], 10
  %1529 = vst [vmem:[%s1528] sm:$0x3] %v1527
  %s1530 = scalar_lea.vmem [#allocation4], 48
  %v1531 = vld [vmem:[%s1530] sm:$0xff]
  %v1532 = vpack.c.bf16 %v1527, %v1527
  %1533 = vmatprep.subr.bf16.mxu0 %v625
  %1534 = vmatpush1.bf16.msra.mxu0 %v624
  %1535 = vmatprep.subr.bf16.mxu0 %v629
  %1536 = vmatpush1.bf16.msra.mxu0 %v628
  %1537 = vmatprep.subr.bf16.mxu0 %v633
  %1538 = vmatpush1.bf16.msra.mxu0 %v632
  %1539 = vmatprep.subr.bf16.mxu0 %v637
  %1540 = vmatpush1.bf16.msra.mxu0 %v636
  %1541 = vmatprep.subr.bf16.mxu0 %v641
  %1542 = vmatpush1.bf16.msra.mxu0 %v640
  %1543 = vmatprep.subr.bf16.mxu0 %v645
  %1544 = vmatpush1.bf16.msra.mxu0 %v644
  %1545 = vmatprep.subr.bf16.mxu0 %v649
  %1546 = vmatpush1.bf16.msra.mxu0 %v648
  %1547 = vmatprep.subr.bf16.mxu0 %v653
  %1548 = vmatpush1.bf16.msra.mxu0 %v652
  %1549 = vmatprep.subr.bf16.mxu0 0
  %1550 = vmatpush1.bf16.msra.mxu0 0
  %1551 = vmatprep.subr.bf16.mxu0 0
  %1552 = vmatpush1.bf16.msra.mxu0 0
  %1553 = vmatprep.subr.bf16.mxu0 0
  %1554 = vmatpush1.bf16.msra.mxu0 0
  %1555 = vmatprep.subr.bf16.mxu0 0
  %1556 = vmatpush1.bf16.msra.mxu0 0
  %1557 = vmatprep.subr.bf16.mxu0 0
  %1558 = vmatpush1.bf16.msra.mxu0 0
  %1559 = vmatprep.subr.bf16.mxu0 0
  %1560 = vmatpush1.bf16.msra.mxu0 0
  %1561 = vmatprep.subr.bf16.mxu0 0
  %1562 = vmatpush1.bf16.msra.mxu0 0
  %1563 = vmatprep.subr.bf16.mxu0 0
  %1564 = vmatpush1.bf16.msra.mxu0 0
  %1565 = vmatprep.mubr.bf16.mxu0 0
  %1566 = vmatmul.mubr.bf16.gmra.mrb[0].mxu0 %v1532
  %v1567 = vpop.f32.mrb[0].mxu0
  %v1568 = vadd.f32 0.0, %v1567
  %v1569 = vpop.f32.mrb[0].mxu0
  %v1570 = vadd.f32 0.0, %v1569
  %v1571 = vpop.f32.mrb[0].mxu0
  %v1572 = vpop.f32.mrb[0].mxu0
  %1573 = vdwg.mxu0
  %1574 = vmatprep.subr.bf16.mxu0 %v627
  %1575 = vmatpush1.bf16.msra.mxu0 %v626
  %1576 = vmatprep.subr.bf16.mxu0 %v631
  %1577 = vmatpush1.bf16.msra.mxu0 %v630
  %1578 = vmatprep.subr.bf16.mxu0 %v635
  %1579 = vmatpush1.bf16.msra.mxu0 %v634
  %1580 = vmatprep.subr.bf16.mxu0 %v639
  %1581 = vmatpush1.bf16.msra.mxu0 %v638
  %1582 = vmatprep.subr.bf16.mxu0 %v643
  %1583 = vmatpush1.bf16.msra.mxu0 %v642
  %1584 = vmatprep.subr.bf16.mxu0 %v647
  %1585 = vmatpush1.bf16.msra.mxu0 %v646
  %1586 = vmatprep.subr.bf16.mxu0 %v651
  %1587 = vmatpush1.bf16.msra.mxu0 %v650
  %1588 = vmatprep.subr.bf16.mxu0 %v655
  %1589 = vmatpush1.bf16.msra.mxu0 %v654
  %1590 = vmatprep.subr.bf16.mxu0 0
  %1591 = vmatpush1.bf16.msra.mxu0 0
  %1592 = vmatprep.subr.bf16.mxu0 0
  %1593 = vmatpush1.bf16.msra.mxu0 0
  %1594 = vmatprep.subr.bf16.mxu0 0
  %1595 = vmatpush1.bf16.msra.mxu0 0
  %1596 = vmatprep.subr.bf16.mxu0 0
  %1597 = vmatpush1.bf16.msra.mxu0 0
  %1598 = vmatprep.subr.bf16.mxu0 0
  %1599 = vmatpush1.bf16.msra.mxu0 0
  %1600 = vmatprep.subr.bf16.mxu0 0
  %1601 = vmatpush1.bf16.msra.mxu0 0
  %1602 = vmatprep.subr.bf16.mxu0 0
  %1603 = vmatpush1.bf16.msra.mxu0 0
  %1604 = vmatprep.subr.bf16.mxu0 0
  %1605 = vmatpush1.bf16.msra.mxu0 0
  %1606 = vmatprep.mubr.bf16.mxu0 0
  %1607 = vmatmul.mubr.bf16.gmra.mrb[0].mxu0 %v1532
  %v1608 = vpop.f32.mrb[0].mxu0
  %v1609 = vadd.f32 0.0, %v1608
  %v1610 = vpop.f32.mrb[0].mxu0
  %v1611 = vadd.f32 0.0, %v1610
  %v1612 = vpop.f32.mrb[0].mxu0
  %v1613 = vpop.f32.mrb[0].mxu0
  %1614 = vdwg.mxu0
  %v1619 = vcombine.low %v1568, %v1570
  %v1620 = vcombine.low %v1609, %v1611
  %v1622 = vunpack.c.l.s4 1983009808
  %v1623 = vunpack.c.0.s8 %v1622
  %v1624 = vlaneseq
  %v1625 = vshrl.u32 %v1624, 7
  %v1626 = vsub.s32 %v1623, %v1625
  %v1627 = vrot.slane %v1619, %v1626
  %v1629 = vunpack.c.l.s4 1983009808
  %v1630 = vunpack.c.0.s8 %v1629
  %v1631 = vlaneseq
  %v1632 = vshrl.u32 %v1631, 7
  %v1633 = vsub.s32 %v1630, %v1632
  %v1634 = vrot.slane %v1620, %v1633
  %v1635 = vcombine.low %v1627, %v1634
  %v1637 = vadd.f32 %v1531, %v1635
  %v1638 = vxor.u32 %v1637, 2147483648
  %v1639 = vmul.f32 %v1638, 1.442695
  %v1640 = vpow.pop %v1639
  %v1641 = vadd.f32 %v1640, 1.0
  %v1642 = vrcp.pop %v1641
  %v1643 = vmul.f32 1.0, %v1642
  %v1645 = vrot.slane %v1637, 2
  %v1647 = vxor.u32 %v1645, 2147483648
  %v1648 = vmul.f32 %v1647, 1.442695
  %v1649 = vpow.pop %v1648
  %v1650 = vadd.f32 %v1649, 1.0
  %v1651 = vrcp.pop %v1650
  %v1652 = vmul.f32 1.0, %v1651
  %v1653 = vrot.slane %v1637, 4
  %v1655 = vtanh.pop %v1653
  %v1656 = vrot.slane %v1637, 6
  %v1658 = vxor.u32 %v1656, 2147483648
  %v1659 = vmul.f32 %v1658, 1.442695
  %v1660 = vpow.pop %v1659
  %v1661 = vadd.f32 %v1660, 1.0
  %v1662 = vrcp.pop %v1661
  %v1663 = vmul.f32 1.0, %v1662
  %v1664 = vmul.f32 %v1652, %v1525
  %v1665 = vmul.f32 %v1643, %v1655
  %v1666 = vadd.f32 %v1664, %v1665
  %v1667 = vtanh.pop %v1666
  %v1668 = vmul.f32 %v1663, %v1667
  %s1669 = scalar_lea.vmem [#allocation5], 12
  %1670 = vst [vmem:[%s1669] sm:$0x3] %v1668
  %s1671 = scalar_lea.vmem [#allocation4], 56
  %v1672 = vld [vmem:[%s1671] sm:$0xff]
  %v1673 = vpack.c.bf16 %v1668, %v1668
  %1674 = vmatprep.subr.bf16.mxu0 %v625
  %1675 = vmatpush1.bf16.msra.mxu0 %v624
  %1676 = vmatprep.subr.bf16.mxu0 %v629
  %1677 = vmatpush1.bf16.msra.mxu0 %v628
  %1678 = vmatprep.subr.bf16.mxu0 %v633
  %1679 = vmatpush1.bf16.msra.mxu0 %v632
  %1680 = vmatprep.subr.bf16.mxu0 %v637
  %1681 = vmatpush1.bf16.msra.mxu0 %v636
  %1682 = vmatprep.subr.bf16.mxu0 %v641
  %1683 = vmatpush1.bf16.msra.mxu0 %v640
  %1684 = vmatprep.subr.bf16.mxu0 %v645
  %1685 = vmatpush1.bf16.msra.mxu0 %v644
  %1686 = vmatprep.subr.bf16.mxu0 %v649
  %1687 = vmatpush1.bf16.msra.mxu0 %v648
  %1688 = vmatprep.subr.bf16.mxu0 %v653
  %1689 = vmatpush1.bf16.msra.mxu0 %v652
  %1690 = vmatprep.subr.bf16.mxu0 0
  %1691 = vmatpush1.bf16.msra.mxu0 0
  %1692 = vmatprep.subr.bf16.mxu0 0
  %1693 = vmatpush1.bf16.msra.mxu0 0
  %1694 = vmatprep.subr.bf16.mxu0 0
  %1695 = vmatpush1.bf16.msra.mxu0 0
  %1696 = vmatprep.subr.bf16.mxu0 0
  %1697 = vmatpush1.bf16.msra.mxu0 0
  %1698 = vmatprep.subr.bf16.mxu0 0
  %1699 = vmatpush1.bf16.msra.mxu0 0
  %1700 = vmatprep.subr.bf16.mxu0 0
  %1701 = vmatpush1.bf16.msra.mxu0 0
  %1702 = vmatprep.subr.bf16.mxu0 0
  %1703 = vmatpush1.bf16.msra.mxu0 0
  %1704 = vmatprep.subr.bf16.mxu0 0
  %1705 = vmatpush1.bf16.msra.mxu0 0
  %1706 = vmatprep.mubr.bf16.mxu0 0
  %1707 = vmatmul.mubr.bf16.gmra.mrb[0].mxu0 %v1673
  %v1708 = vpop.f32.mrb[0].mxu0
  %v1709 = vadd.f32 0.0, %v1708
  %v1710 = vpop.f32.mrb[0].mxu0
  %v1711 = vadd.f32 0.0, %v1710
  %v1712 = vpop.f32.mrb[0].mxu0
  %v1713 = vpop.f32.mrb[0].mxu0
  %1714 = vdwg.mxu0
  %1715 = vmatprep.subr.bf16.mxu0 %v627
  %1716 = vmatpush1.bf16.msra.mxu0 %v626
  %1717 = vmatprep.subr.bf16.mxu0 %v631
  %1718 = vmatpush1.bf16.msra.mxu0 %v630
  %1719 = vmatprep.subr.bf16.mxu0 %v635
  %1720 = vmatpush1.bf16.msra.mxu0 %v634
  %1721 = vmatprep.subr.bf16.mxu0 %v639
  %1722 = vmatpush1.bf16.msra.mxu0 %v638
  %1723 = vmatprep.subr.bf16.mxu0 %v643
  %1724 = vmatpush1.bf16.msra.mxu0 %v642
  %1725 = vmatprep.subr.bf16.mxu0 %v647
  %1726 = vmatpush1.bf16.msra.mxu0 %v646
  %1727 = vmatprep.subr.bf16.mxu0 %v651
  %1728 = vmatpush1.bf16.msra.mxu0 %v650
  %1729 = vmatprep.subr.bf16.mxu0 %v655
  %1730 = vmatpush1.bf16.msra.mxu0 %v654
  %1731 = vmatprep.subr.bf16.mxu0 0
  %1732 = vmatpush1.bf16.msra.mxu0 0
  %1733 = vmatprep.subr.bf16.mxu0 0
  %1734 = vmatpush1.bf16.msra.mxu0 0
  %1735 = vmatprep.subr.bf16.mxu0 0
  %1736 = vmatpush1.bf16.msra.mxu0 0
  %1737 = vmatprep.subr.bf16.mxu0 0
  %1738 = vmatpush1.bf16.msra.mxu0 0
  %1739 = vmatprep.subr.bf16.mxu0 0
  %1740 = vmatpush1.bf16.msra.mxu0 0
  %1741 = vmatprep.subr.bf16.mxu0 0
  %1742 = vmatpush1.bf16.msra.mxu0 0
  %1743 = vmatprep.subr.bf16.mxu0 0
  %1744 = vmatpush1.bf16.msra.mxu0 0
  %1745 = vmatprep.subr.bf16.mxu0 0
  %1746 = vmatpush1.bf16.msra.mxu0 0
  %1747 = vmatprep.mubr.bf16.mxu0 0
  %1748 = vmatmul.mubr.bf16.gmra.mrb[0].mxu0 %v1673
  %v1749 = vpop.f32.mrb[0].mxu0
  %v1750 = vadd.f32 0.0, %v1749
  %v1751 = vpop.f32.mrb[0].mxu0
  %v1752 = vadd.f32 0.0, %v1751
  %v1753 = vpop.f32.mrb[0].mxu0
  %v1754 = vpop.f32.mrb[0].mxu0
  %1755 = vdwg.mxu0
  %v1760 = vcombine.low %v1709, %v1711
  %v1761 = vcombine.low %v1750, %v1752
  %v1763 = vunpack.c.l.s4 1983009808
  %v1764 = vunpack.c.0.s8 %v1763
  %v1765 = vlaneseq
  %v1766 = vshrl.u32 %v1765, 7
  %v1767 = vsub.s32 %v1764, %v1766
  %v1768 = vrot.slane %v1760, %v1767
  %v1770 = vunpack.c.l.s4 1983009808
  %v1771 = vunpack.c.0.s8 %v1770
  %v1772 = vlaneseq
  %v1773 = vshrl.u32 %v1772, 7
  %v1774 = vsub.s32 %v1771, %v1773
  %v1775 = vrot.slane %v1761, %v1774
  %v1776 = vcombine.low %v1768, %v1775
  %v1778 = vadd.f32 %v1672, %v1776
  %v1779 = vxor.u32 %v1778, 2147483648
  %v1780 = vmul.f32 %v1779, 1.442695
  %v1781 = vpow.pop %v1780
  %v1782 = vadd.f32 %v1781, 1.0
  %v1783 = vrcp.pop %v1782
  %v1784 = vmul.f32 1.0, %v1783
  %v1786 = vrot.slane %v1778, 2
  %v1788 = vxor.u32 %v1786, 2147483648
  %v1789 = vmul.f32 %v1788, 1.442695
  %v1790 = vpow.pop %v1789
  %v1791 = vadd.f32 %v1790, 1.0
  %v1792 = vrcp.pop %v1791
  %v1793 = vmul.f32 1.0, %v1792
  %v1794 = vrot.slane %v1778, 4
  %v1796 = vtanh.pop %v1794
  %v1797 = vrot.slane %v1778, 6
  %v1799 = vxor.u32 %v1797, 2147483648
  %v1800 = vmul.f32 %v1799, 1.442695
  %v1801 = vpow.pop %v1800
  %v1802 = vadd.f32 %v1801, 1.0
  %v1803 = vrcp.pop %v1802
  %v1804 = vmul.f32 1.0, %v1803
  %v1805 = vmul.f32 %v1793, %v1666
  %v1806 = vmul.f32 %v1784, %v1796
  %v1807 = vadd.f32 %v1805, %v1806
  %v1808 = vtanh.pop %v1807
  %v1809 = vmul.f32 %v1804, %v1808
  %s1810 = scalar_lea.vmem [#allocation5], 14
  %1811 = vst [vmem:[%s1810] sm:$0x3] %v1809
  %1812 = vst [vmem:[#allocation2] sm:$0x3] %v1809
  %1813 = vst [vmem:[#allocation3] sm:$0x3] %v1807
  %v1814 = vld [vmem:[#allocation5] sm:$0x3]
  %v1815 = vld [vmem:[#allocation5 + $0x2] sm:$0x3]
  %v1816 = vld [vmem:[#allocation5 + $0x4] sm:$0x3]
  %v1817 = vld [vmem:[#allocation5 + $0x6] sm:$0x3]
  %v1818 = vld [vmem:[#allocation5 + $0x8] sm:$0x3]
  %v1819 = vld [vmem:[#allocation5 + $0xa] sm:$0x3]
  %v1820 = vld [vmem:[#allocation5 + $0xc] sm:$0x3]
  %v1821 = vld [vmem:[#allocation5 + $0xe] sm:$0x3]
  %v1830 = vcombine.low %v1814, %v1815
  %v1831 = vcombine.low %v1816, %v1817
  %v1833 = vunpack.c.l.s4 1983009808
  %v1834 = vunpack.c.0.s8 %v1833
  %v1835 = vlaneseq
  %v1836 = vshrl.u32 %v1835, 7
  %v1837 = vsub.s32 %v1834, %v1836
  %v1838 = vrot.slane %v1830, %v1837
  %v1840 = vunpack.c.l.s4 1983009808
  %v1841 = vunpack.c.0.s8 %v1840
  %v1842 = vlaneseq
  %v1843 = vshrl.u32 %v1842, 7
  %v1844 = vsub.s32 %v1841, %v1843
  %v1845 = vrot.slane %v1831, %v1844
  %v1846 = vcombine.low %v1838, %v1845
  %v1847 = vcombine.low %v1818, %v1819
  %v1848 = vcombine.low %v1820, %v1821
  %v1850 = vunpack.c.l.s4 1983009808
  %v1851 = vunpack.c.0.s8 %v1850
  %v1852 = vlaneseq
  %v1853 = vshrl.u32 %v1852, 7
  %v1854 = vsub.s32 %v1851, %v1853
  %v1855 = vrot.slane %v1847, %v1854
  %v1857 = vunpack.c.l.s4 1983009808
  %v1858 = vunpack.c.0.s8 %v1857
  %v1859 = vlaneseq
  %v1860 = vshrl.u32 %v1859, 7
  %v1861 = vsub.s32 %v1858, %v1860
  %v1862 = vrot.slane %v1848, %v1861
  %v1863 = vcombine.low %v1855, %v1862
  %v1866 = vpack.c.bf16 %v1863, %v1846
  %v1867 = vld [vmem:[%s4] sm:$0xf]
  %v1868 = vld [vmem:[%s4 + $0x4] sm:$0xf]
  %v1869 = vld [vmem:[%s4 + $0x8] sm:$0xf]
  %v1870 = vld [vmem:[%s4 + $0xc] sm:$0xf]
  %v1871 = vld [vmem:[%s4 + $0x10] sm:$0xf]
  %v1872 = vld [vmem:[%s4 + $0x14] sm:$0xf]
  %v1873 = vld [vmem:[%s4 + $0x18] sm:$0xf]
  %v1874 = vld [vmem:[%s4 + $0x1c] sm:$0xf]
  %v1875 = vld [vmem:[%s4 + $0x20] sm:$0xf]
  %v1876 = vld [vmem:[%s4 + $0x24] sm:$0xf]
  %v1877 = vld [vmem:[%s4 + $0x28] sm:$0xf]
  %v1878 = vld [vmem:[%s4 + $0x2c] sm:$0xf]
  %v1879 = vld [vmem:[%s4 + $0x30] sm:$0xf]
  %v1880 = vld [vmem:[%s4 + $0x34] sm:$0xf]
  %v1881 = vld [vmem:[%s4 + $0x38] sm:$0xf]
  %v1882 = vld [vmem:[%s4 + $0x3c] sm:$0xf]
  %v1883 = vld [vmem:[%s5] sm:$0x1]
  %v1885 = vlaneseq
  %v1886 = vshrl.u32 %v1885, 7
  %v1887 = vsub.s32 0, %v1886
  %v1888 = vrot.slane %v1883, %v1887
  %v1906 = vunpack.c.l.b16 %v1867
  %v1907 = vunpack.c.l.b16 %v1868
  %v1908 = vunpack.c.l.b16 %v1869
  %v1909 = vunpack.c.l.b16 %v1870
  %v1910 = vunpack.c.l.b16 %v1871
  %v1911 = vunpack.c.l.b16 %v1872
  %v1912 = vunpack.c.l.b16 %v1873
  %v1913 = vunpack.c.l.b16 %v1874
  %v1914 = vunpack.c.l.b16 %v1875
  %v1915 = vunpack.c.l.b16 %v1876
  %v1916 = vunpack.c.l.b16 %v1877
  %v1917 = vunpack.c.l.b16 %v1878
  %v1918 = vunpack.c.l.b16 %v1879
  %v1919 = vunpack.c.l.b16 %v1880
  %v1920 = vunpack.c.l.b16 %v1881
  %v1921 = vunpack.c.l.b16 %v1882
  %v1922 = vpack.c.b16 %v1907, %v1906
  %v1923 = vpack.c.b16 %v1909, %v1908
  %v1924 = vpack.c.b16 %v1911, %v1910
  %v1925 = vpack.c.b16 %v1913, %v1912
  %v1926 = vpack.c.b16 %v1915, %v1914
  %v1927 = vpack.c.b16 %v1917, %v1916
  %v1928 = vpack.c.b16 %v1919, %v1918
  %v1929 = vpack.c.b16 %v1921, %v1920
  %1938 = vmatprep.subr.bf16.mxu0 0
  %1939 = vmatpush1.bf16.msra.mxu0 %v1922
  %1940 = vmatprep.subr.bf16.mxu0 0
  %1941 = vmatpush1.bf16.msra.mxu0 %v1923
  %1942 = vmatprep.subr.bf16.mxu0 0
  %1943 = vmatpush1.bf16.msra.mxu0 %v1924
  %1944 = vmatprep.subr.bf16.mxu0 0
  %1945 = vmatpush1.bf16.msra.mxu0 %v1925
  %1946 = vmatprep.subr.bf16.mxu0 0
  %1947 = vmatpush1.bf16.msra.mxu0 %v1926
  %1948 = vmatprep.subr.bf16.mxu0 0
  %1949 = vmatpush1.bf16.msra.mxu0 %v1927
  %1950 = vmatprep.subr.bf16.mxu0 0
  %1951 = vmatpush1.bf16.msra.mxu0 %v1928
  %1952 = vmatprep.subr.bf16.mxu0 0
  %1953 = vmatpush1.bf16.msra.mxu0 %v1929
  %1954 = vmatprep.subr.bf16.mxu0 0
  %1955 = vmatpush1.bf16.msra.mxu0 0
  %1956 = vmatprep.subr.bf16.mxu0 0
  %1957 = vmatpush1.bf16.msra.mxu0 0
  %1958 = vmatprep.subr.bf16.mxu0 0
  %1959 = vmatpush1.bf16.msra.mxu0 0
  %1960 = vmatprep.subr.bf16.mxu0 0
  %1961 = vmatpush1.bf16.msra.mxu0 0
  %1962 = vmatprep.subr.bf16.mxu0 0
  %1963 = vmatpush1.bf16.msra.mxu0 0
  %1964 = vmatprep.subr.bf16.mxu0 0
  %1965 = vmatpush1.bf16.msra.mxu0 0
  %1966 = vmatprep.subr.bf16.mxu0 0
  %1967 = vmatpush1.bf16.msra.mxu0 0
  %1968 = vmatprep.subr.bf16.mxu0 0
  %1969 = vmatpush1.bf16.msra.mxu0 0
  %1970 = vmatprep.mubr.bf16.mxu0 0
  %1971 = vmatmul.mubr.bf16.gmra.mrb[0].mxu0 %v1866
  %v1972 = vpop.f32.mrb[0].mxu0
  %v1973 = vadd.f32 %v1888, %v1972
  %v1974 = vpop.f32.mrb[0].mxu0
  %v1975 = vpop.f32.mrb[0].mxu0
  %v1976 = vadd.f32 %v1888, %v1975
  %v1977 = vpop.f32.mrb[0].mxu0
  %1978 = vdwg.mxu0
  %v1981 = vcombine.high %v1973, %v1973
  %v1983 = vunpack.c.l.s4 1983009808
  %v1984 = vunpack.c.0.s8 %v1983
  %v1985 = vlaneseq
  %v1986 = vshrl.u32 %v1985, 7
  %v1987 = vsub.s32 %v1984, %v1986
  %v1988 = vrot.slane %v1973, %v1987
  %v1990 = vunpack.c.l.s4 1983009808
  %v1991 = vunpack.c.0.s8 %v1990
  %v1992 = vlaneseq
  %v1993 = vshrl.u32 %v1992, 7
  %v1994 = vsub.s32 %v1991, %v1993
  %v1995 = vrot.slane %v1981, %v1994
  %v1996 = vcombine.high %v1988, %v1988
  %v1997 = vcombine.high %v1995, %v1995
  %v1998 = vcombine.high %v1976, %v1976
  %v2000 = vunpack.c.l.s4 1983009808
  %v2001 = vunpack.c.0.s8 %v2000
  %v2002 = vlaneseq
  %v2003 = vshrl.u32 %v2002, 7
  %v2004 = vsub.s32 %v2001, %v2003
  %v2005 = vrot.slane %v1976, %v2004
  %v2007 = vunpack.c.l.s4 1983009808
  %v2008 = vunpack.c.0.s8 %v2007
  %v2009 = vlaneseq
  %v2010 = vshrl.u32 %v2009, 7
  %v2011 = vsub.s32 %v2008, %v2010
  %v2012 = vrot.slane %v1998, %v2011
  %v2013 = vcombine.high %v2005, %v2005
  %v2014 = vcombine.high %v2012, %v2012
  %2023 = vst [vmem:[%s6] sm:$0x3] %v1988
  %2024 = vst [vmem:[%s6 + $0x2] sm:$0x3] %v1996
  %2025 = vst [vmem:[%s6 + $0x4] sm:$0x3] %v1995
  %2026 = vst [vmem:[%s6 + $0x6] sm:$0x3] %v1997
  %2027 = vst [vmem:[%s6 + $0x8] sm:$0x3] %v2005
  %2028 = vst [vmem:[%s6 + $0xa] sm:$0x3] %v2013
  %2029 = vst [vmem:[%s6 + $0xc] sm:$0x3] %v2012
  %2030 = vst [vmem:[%s6 + $0xe] sm:$0x3] %v2014
  // Predicated region
  $region30: #{i3d_lstm_forward.3} parent=0 // pred_check
    _
  $region31: #{i3d_lstm_forward.3} parent=0 // pred_check_branch
    %2032 = sbr.rel (0) target = $region33
  $region32: #{i3d_lstm_forward.3} parent=0 // pred_region
    _
  $region33: #{i3d_lstm_forward.3} parent=0 // pred_fallthru
    _
  // Predicated region
  $region34: #{i3d_lstm_forward.3} parent=0 // pred_check
    _
  $region35: #{i3d_lstm_forward.3} parent=0 // pred_check_branch
    %2034 = sbr.rel (0) target = $region37
  $region36: #{i3d_lstm_forward.3} parent=0 // pred_region
    _
  $region37: #{i3d_lstm_forward.3} parent=0 // pred_fallthru
    _

</llo_original>
